<compile_context>
chip_gen: v7x
topology: tpu7x:2x2x1
jax: 0.10.0
libtpu: 0.0.40
codegen_flags: <defaults>
</compile_context>

<pallas_src>
import functools
import math

import jax
import jax.numpy as jnp
from jax import lax
from jax.experimental import pallas as pl
from jax.experimental.pallas import tpu as pltpu

EPS = 1e-5          # GroupNorm eps (PyTorch default)
NUM_GROUPS = 32     # normalization(channels) == GroupNorm32(32, channels)


def _tpu_vmem_capacity_bytes():
    try:
        return int(pltpu.get_tpu_info().vmem_capacity_bytes)
    except Exception:
        return None


def _bf16_eup_ok():
    """bf16 EUP/VPU exists on v6e and newer; keep exp in f32 on v5e and older."""
    try:
        kind = jax.devices()[0].device_kind.lower()
    except Exception:
        return False
    return not any(tag in kind for tag in ("v2", "v3", "v4", "v5"))


def _pick_kv_chunk(T, cap):
    """Largest KV chunk <= cap that divides T (T itself if T <= cap)."""
    if T <= cap:
        return T
    for c in (512, 384, 256, 128):
        if c <= cap and T % c == 0:
            return c
    # TODO(synk): pad T (lanes) up to a multiple of 128 instead of falling back
    # to a full-width [T, T] score tile for awkward spatial sizes.
    return T


def _cross_attn_kernel(x_ref, sar_ref, gsum_ref, gbc_ref, vec_ref,
                       wq_ref, wkv_ref, wo_ref, out_ref, *rest,
                       num_heads, kv_chunk, max_unroll_kv,
                       return_h_attn, exp_bf16):
    if return_h_attn:
        hattn_ref = rest[0]        # output block [1, C, T] f32 (pre-proj attn)
        qkv_vmem = rest[1]         # scratch [3C, T] bf16
        hbf_vmem = None
    else:
        hattn_ref = None
        qkv_vmem = rest[0]         # scratch [3C, T] bf16
        hbf_vmem = rest[1]         # scratch [C, T] bf16 (proj_out input)

    x = x_ref[0]                   # [C, T] f32 (query / residual input)
    C, T = x.shape
    head_ch = C // num_heads
    n_kv = T // kv_chunk
    att_scale = 1.0 / math.sqrt(head_ch)

    # Packed per-channel vectors: [gamma, beta, bq, bo, bk, bv, 0, 0].
    vec = vec_ref[...]                                  # [C, 8] f32
    gamma, beta = vec[:, 0:1], vec[:, 1:2]
    bq, bo = vec[:, 2:3], vec[:, 3:4]
    bk, bv = vec[:, 4:5], vec[:, 5:6]

    # ------------------- GroupNorm(32, C), f32, two-pass --------------------
    # Reduce over T first ([C,1]), then tiny [G,C]x[C,1] / [C,G]x[G,1] matmuls
    # (gsum has 1/count folded in; gbc broadcasts group values back to channels).
    sx = jnp.sum(x, axis=1, keepdims=True)                                 # [C,1]
    gmean = jnp.dot(gsum_ref[...], sx, preferred_element_type=jnp.float32)  # [G,1]
    mean = jnp.dot(gbc_ref[...], gmean, preferred_element_type=jnp.float32)  # [C,1]
    xc = x - mean                                                           # [C,T]
    ssd = jnp.sum(xc * xc, axis=1, keepdims=True)                           # [C,1]
    gvar = jnp.dot(gsum_ref[...], ssd, preferred_element_type=jnp.float32)  # [G,1]
    var = jnp.dot(gbc_ref[...], gvar, preferred_element_type=jnp.float32)   # [C,1]
    xn = xc * (lax.rsqrt(var + EPS) * gamma) + beta                         # [C,T]
    xn_bf = xn.astype(jnp.bfloat16)

    # ------- 1x1-conv projections (bf16 MXU operands, f32 accumulation) -----
    # Bias add in f32, then a single whole-tensor bf16 cast into the qkv
    # scratch, laid out as the implicit cat([q, k, v]) of the PyTorch module.
    q = jnp.dot(wq_ref[...], xn_bf, preferred_element_type=jnp.float32) + bq
    kv = jnp.dot(wkv_ref[...], sar_ref[0], preferred_element_type=jnp.float32)
    qkv_vmem[0:C, :] = q.astype(jnp.bfloat16)
    qkv_vmem[C:2 * C, :] = (kv[0:C] + bk).astype(jnp.bfloat16)
    qkv_vmem[2 * C:3 * C, :] = (kv[C:2 * C] + bv).astype(jnp.bfloat16)

    if exp_bf16:
        # hoisted once; row-sum of p via MXU matvec with f32 accumulation
        ones_kv = jnp.ones((1, kv_chunk), jnp.bfloat16)

    def softmax_pieces(s, m_row):
        """exp / row-sum of a [TK, Tq] f32 score block -> (p, psum[1,Tq] f32)."""
        if exp_bf16:
            p = jnp.exp((s - m_row).astype(jnp.bfloat16))      # bf16 EUP
            psum = jnp.dot(ones_kv, p, preferred_element_type=jnp.float32)
        else:
            p = jnp.exp(s - m_row)                             # f32 (v5e path)
            psum = jnp.sum(p, axis=0, keepdims=True)
        return p, psum

    def pv_dot(vj, p):
        rhs = p if exp_bf16 else p.astype(jnp.bfloat16)
        return jnp.dot(vj, rhs, preferred_element_type=jnp.float32)

    # ----- QKVAttentionLegacy head split on the implicit [3C, T] concat -----
    # Head h reads global rows [h*3*ch, (h+1)*3*ch) of cat([q,k,v]); the qkv
    # scratch holds exactly that concat, so the legacy "mixed rows" quirk is
    # handled by direct static row arithmetic.
    for h in range(num_heads):
        base = h * 3 * head_ch
        q_row, k_row, v_row = base, base + head_ch, base + 2 * head_ch
        qh = qkv_vmem[q_row:q_row + head_ch, :]                 # [ch, T] bf16

        if n_kv == 1:
            # Common UNet case: plain softmax, no online-softmax bookkeeping.
            kh = qkv_vmem[k_row:k_row + head_ch, :]
            vh = qkv_vmem[v_row:v_row + head_ch, :]
            s = lax.dot_general(kh, qh, (((0,), (0,)), ((), ())),
                                preferred_element_type=jnp.float32) * att_scale
            m = jnp.max(s, axis=0, keepdims=True)               # [1, T]
            p, l = softmax_pieces(s, m)
            # NOTE: pl.reciprocal(approx=True) -> weights sum to 1 only to
            # ~2^-12 relative accuracy (fine for this block's use).
            head_out = pv_dot(vh, p) * pl.reciprocal(l, approx=True)
        else:
            # Flash-style online softmax over KV chunks; scores are oriented
            # [T_kv, T_q] so m/l/alpha are [1, T_q] lane vectors (free bcast).
            def kv_step(cols, m, l, acc):
                kj = qkv_vmem[k_row:k_row + head_ch, cols]      # [ch, TK] bf16
                vj = qkv_vmem[v_row:v_row + head_ch, cols]      # [ch, TK] bf16
                s = lax.dot_general(kj, qh, (((0,), (0,)), ((), ())),
                                    preferred_element_type=jnp.float32) * att_scale
                m_new = jnp.maximum(m, jnp.max(s, axis=0, keepdims=True))
                alpha = jnp.exp(m - m_new)
                p, psum = softmax_pieces(s, m_new)
                l = alpha * l + psum
                acc = acc * alpha + pv_dot(vj, p)
                return m_new, l, acc

            m0 = jnp.full((1, T), -1e30, jnp.float32)
            l0 = jnp.zeros((1, T), jnp.float32)
            a0 = jnp.zeros((head_ch, T), jnp.float32)
            if n_kv <= max_unroll_kv:
                m, l, acc = m0, l0, a0
                for j in range(n_kv):
                    m, l, acc = kv_step(
                        slice(j * kv_chunk, (j + 1) * kv_chunk), m, l, acc)
            else:
                def body(j, carry):
                    m, l, acc = carry
                    lo = pl.multiple_of(j * kv_chunk, kv_chunk)
                    return kv_step(pl.ds(lo, kv_chunk), m, l, acc)
                m, l, acc = lax.fori_loop(0, n_kv, body, (m0, l0, a0))
            head_out = acc * pl.reciprocal(l, approx=True)       # [ch, T] f32

        off = h * head_ch
        if return_h_attn:
            hattn_ref[0, off:off + head_ch, :] = head_out
        else:
            hbf_vmem[off:off + head_ch, :] = head_out.astype(jnp.bfloat16)

    # ---------------- proj_out (zero_module init) + residual ----------------
    if return_h_attn:
        h_in = hattn_ref[0].astype(jnp.bfloat16)
    else:
        h_in = hbf_vmem[...]
    h2 = jnp.dot(wo_ref[...], h_in, preferred_element_type=jnp.float32) + bo
    out_ref[0] = x_ref[0] + h2


def cross_attention_block(x4, sar4, params, num_heads, *,
                          return_h_attn=False, kv_chunk=None,
                          max_unroll_kv=4, exp_bf16=None):
    """x4, sar4: [B, C, H, W]. Returns out [B,C,H,W] (and pre-proj attn [B,C,T])."""
    B, C, Hs, Ws = x4.shape
    T = Hs * Ws
    assert C % NUM_GROUPS == 0 and C % num_heads == 0
    gamma, beta, wq, bq, wk, bk, wv, bv, wo, bo = params

    x = x4.reshape(B, C, T).astype(jnp.float32)
    # sar is only ever a matmul operand -> ship it bf16 (halves its DMA).
    sar = sar4.reshape(B, C, T).astype(jnp.bfloat16)

    # Generation-aware knobs (v7x: 64 MiB VMEM -> smaller limit & chunks).
    vmem_cap = _tpu_vmem_capacity_bytes()
    if vmem_cap is not None:
        vmem_limit = int(min(vmem_cap - 16 * 1024 * 1024, 100 * 1024 * 1024))
        chunk_cap = 256 if vmem_cap <= 96 * 1024 * 1024 else 512
    else:
        vmem_limit = None          # leave Mosaic default if detection fails
        chunk_cap = 512
    if exp_bf16 is None:
        exp_bf16 = _bf16_eup_ok()
    if kv_chunk is None or T % kv_chunk != 0:
        kv_chunk = _pick_kv_chunk(T, chunk_cap)

    # GroupNorm group reduce ([G, C], 1/count folded in) + broadcast ([C, G]).
    chg = C // NUM_GROUPS
    cid = jnp.arange(C) // chg
    onehot = (jnp.arange(NUM_GROUPS)[:, None] == cid[None, :])
    gsum = onehot.astype(jnp.float32) / float(chg * T)            # [G, C]
    gbc = onehot.T.astype(jnp.float32)                            # [C, G]

    # Small per-channel vectors packed into one lane-dense [C, 8] constant.
    f32 = lambda a: a.reshape(C, 1).astype(jnp.float32)
    vec = jnp.concatenate([f32(gamma), f32(beta), f32(bq), f32(bo),
                           f32(bk), f32(bv), jnp.zeros((C, 2), jnp.float32)],
                          axis=1)                                  # [C, 8]

    # bf16 weights for the MXU; fused k/v projection weight.
    wq_bf = wq.astype(jnp.bfloat16)
    wkv_bf = jnp.concatenate([wk, wv], axis=0).astype(jnp.bfloat16)  # [2C, C]
    wo_bf = wo.astype(jnp.bfloat16)

    kernel = functools.partial(
        _cross_attn_kernel, num_heads=num_heads, kv_chunk=kv_chunk,
        max_unroll_kv=max_unroll_kv, return_h_attn=return_h_attn,
        exp_bf16=exp_bf16)

    bct_spec = pl.BlockSpec((1, C, T), lambda b: (b, 0, 0))
    const = lambda shape: pl.BlockSpec(shape, lambda b: (0,) * len(shape))
    in_specs = [bct_spec, bct_spec,                  # x, sar
                const((NUM_GROUPS, C)),              # group reduce
                const((C, NUM_GROUPS)),              # group broadcast
                const((C, 8)),                       # packed gamma/beta/biases
                const((C, C)),                       # wq
                const((2 * C, C)),                   # wkv
                const((C, C))]                       # wo

    scratch_shapes = [pltpu.VMEM((3 * C, T), jnp.bfloat16)]
    if return_h_attn:
        out_specs = (bct_spec, bct_spec)
        out_shape = (jax.ShapeDtypeStruct((B, C, T), jnp.float32),
                     jax.ShapeDtypeStruct((B, C, T), jnp.float32))
    else:
        out_specs = bct_spec
        out_shape = jax.ShapeDtypeStruct((B, C, T), jnp.float32)
        scratch_shapes.append(pltpu.VMEM((C, T), jnp.bfloat16))

    result = pl.pallas_call(
        kernel,
        grid=(B,),
        in_specs=in_specs,
        out_specs=out_specs,
        out_shape=out_shape,
        scratch_shapes=scratch_shapes,
        compiler_params=pltpu.CompilerParams(
            dimension_semantics=("parallel",),
            vmem_limit_bytes=vmem_limit),
    )(x, sar, gsum, gbc, vec, wq_bf, wkv_bf, wo_bf)

    if return_h_attn:
        out, h_attn = result
        return out.reshape(B, C, Hs, Ws), h_attn
    return result.reshape(B, C, Hs, Ws)


def _reference_forward(x4, sar4, params, num_heads):
    """Pure-JAX mirror of the PyTorch forward (f32, HIGHEST precision)."""
    gamma, beta, wq, bq, wk, bk, wv, bv, wo, bo = params
    B, C, Hs, Ws = x4.shape
    T = Hs * Ws
    hp = jax.lax.Precision.HIGHEST
    x = x4.reshape(B, C, T)
    sar = sar4.reshape(B, C, T)

    chg = C // NUM_GROUPS
    xg = x.reshape(B, NUM_GROUPS, chg * T)
    mean = xg.mean(-1, keepdims=True)
    var = xg.var(-1, keepdims=True)
    xn = ((xg - mean) / jnp.sqrt(var + EPS)).reshape(B, C, T)
    xn = xn * gamma.reshape(1, C, 1) + beta.reshape(1, C, 1)

    q = jnp.einsum('oc,bct->bot', wq, xn, precision=hp) + bq.reshape(1, C, 1)
    k = jnp.einsum('oc,bct->bot', wk, sar, precision=hp) + bk.reshape(1, C, 1)
    v = jnp.einsum('oc,bct->bot', wv, sar, precision=hp) + bv.reshape(1, C, 1)
    qkv = jnp.concatenate([q, k, v], axis=1)             # [B, 3C, T]

    H = num_heads
    ch = C // H
    qkv_h = qkv.reshape(B * H, 3 * ch, T)
    qh = qkv_h[:, :ch].transpose(0, 2, 1)                # [B*H, T, ch]
    kh = qkv_h[:, ch:2 * ch].transpose(0, 2, 1)
    vh = qkv_h[:, 2 * ch:].transpose(0, 2, 1)
    scores = jnp.einsum('btc,bsc->bts', qh, kh, precision=hp) / math.sqrt(ch)
    attn = jax.nn.softmax(scores, axis=-1)
    a = jnp.einsum('bts,bsc->btc', attn, vh, precision=hp)
    hout = a.transpose(0, 2, 1).reshape(B, C, T)

    h2 = jnp.einsum('oc,bct->bot', wo, hout, precision=hp) + bo.reshape(1, C, 1)
    out = (x + h2).reshape(B, C, Hs, Ws)
    return out, hout


if __name__ == "__main__":
    # channels must be divisible by 32 (GroupNorm32) and by num_heads;
    # 16x16 spatial -> T = 256 keeps the output lane-dense (multiple of 128).
    B, C, Hs, Ws = 2, 64, 16, 16
    num_heads = 4

    key = jax.random.PRNGKey(0)
    ks = jax.random.split(key, 12)
    x4 = jax.random.normal(ks[0], (B, C, Hs, Ws), jnp.float32)
    sar4 = jax.random.normal(ks[1], (B, C, Hs, Ws), jnp.float32)

    gamma = 1.0 + 0.1 * jax.random.normal(ks[2], (C, 1), jnp.float32)  # norm.weight
    beta = 0.1 * jax.random.normal(ks[3], (C, 1), jnp.float32)         # norm.bias
    wq = 0.1 * jax.random.normal(ks[4], (C, C), jnp.float32)           # q_proj (1x1 conv)
    bq = 0.05 * jax.random.normal(ks[5], (C, 1), jnp.float32)
    wk = 0.1 * jax.random.normal(ks[6], (C, C), jnp.float32)           # k_proj
    bk = 0.05 * jax.random.normal(ks[7], (C, 1), jnp.float32)
    wv = 0.1 * jax.random.normal(ks[8], (C, C), jnp.float32)           # v_proj
    bv = 0.05 * jax.random.normal(ks[9], (C, 1), jnp.float32)

    # (1) faithful module init: proj_out = zero_module(...) -> zeros; single
    #     KV-chunk (specialized softmax) path; also check the pre-projection
    #     attention output h_attn.
    wo0 = jnp.zeros((C, C), jnp.float32)
    bo0 = jnp.zeros((C, 1), jnp.float32)
    params0 = (gamma, beta, wq, bq, wk, bk, wv, bv, wo0, bo0)

    out, h_attn = cross_attention_block(x4, sar4, params0, num_heads,
                                        return_h_attn=True)
    out = jax.block_until_ready(out)
    h_attn = jax.block_until_ready(h_attn)
    ref_out, ref_h = _reference_forward(x4, sar4, params0, num_heads)
    assert out.shape == (B, C, Hs, Ws)
    # bf16 MXU operands (+ bf16 exp on v6e/v7x) + approx reciprocal -> 1e-2 tol
    assert jnp.allclose(out, ref_out, atol=1e-2, rtol=1e-2), "final output mismatch"
    assert jnp.allclose(h_attn, ref_h, atol=1e-2, rtol=1e-2), "attention output mismatch"

    # (2) non-zero proj_out (trained weights), h_attn output dropped, 2 KV
    #     chunks -> statically-unrolled online-softmax path.
    wo1 = 0.1 * jax.random.normal(ks[10], (C, C), jnp.float32)
    bo1 = 0.05 * jax.random.normal(ks[11], (C, 1), jnp.float32)
    params1 = (gamma, beta, wq, bq, wk, bk, wv, bv, wo1, bo1)
    out1 = cross_attention_block(x4, sar4, params1, num_heads,
                                 return_h_attn=False, kv_chunk=128)
    out1 = jax.block_until_ready(out1)
    ref_out1, _ = _reference_forward(x4, sar4, params1, num_heads)
    assert jnp.allclose(out1, ref_out1, atol=1e-2, rtol=1e-2), "proj_out path mismatch"

    # (3) same shapes, forcing the lax.fori_loop flash path (bounded live
    #     ranges for large production T).
    out2 = cross_attention_block(x4, sar4, params1, num_heads,
                                 return_h_attn=False, kv_chunk=128,
                                 max_unroll_kv=1)
    out2 = jax.block_until_ready(out2)
    assert jnp.allclose(out2, ref_out1, atol=1e-2, rtol=1e-2), "fori flash path mismatch"

    print("KERNEL_OK")
</pallas_src>

<mosaic_0001>
module attributes {stable_mosaic.version = 11 : i64} {
  func.func @_cross_attn_kernel(%arg0: i32, %arg1: memref<1x64x256xf32, #tpu.memory_space<vmem>>, %arg2: memref<1x64x256xbf16, #tpu.memory_space<vmem>>, %arg3: memref<32x64xf32, #tpu.memory_space<vmem>>, %arg4: memref<64x32xf32, #tpu.memory_space<vmem>>, %arg5: memref<64x8xf32, #tpu.memory_space<vmem>>, %arg6: memref<64x64xbf16, #tpu.memory_space<vmem>>, %arg7: memref<128x64xbf16, #tpu.memory_space<vmem>>, %arg8: memref<64x64xbf16, #tpu.memory_space<vmem>>, %arg9: memref<1x64x256xf32, #tpu.memory_space<vmem>>, %arg10: memref<1x64x256xf32, #tpu.memory_space<vmem>>, %arg11: memref<192x256xbf16, #tpu.memory_space<vmem>>) attributes {dimension_semantics = [#tpu.dimension_semantics<parallel>], iteration_bounds = array<i64: 2>, scalar_prefetch = 0 : i64, scratch_operands = 1 : i64, tpu.core_type = #tpu.core_type<tc>, window_params = [{transform_indices = @transform_0, window_bounds = array<i64: 1, 64, 256>}, {transform_indices = @transform_1, window_bounds = array<i64: 1, 64, 256>}, {pipeline_mode = #tpu.pipeline_mode<synchronous>, transform_indices = @transform_2, window_bounds = array<i64: 32, 64>}, {pipeline_mode = #tpu.pipeline_mode<synchronous>, transform_indices = @transform_3, window_bounds = array<i64: 64, 32>}, {pipeline_mode = #tpu.pipeline_mode<synchronous>, transform_indices = @transform_4, window_bounds = array<i64: 64, 8>}, {pipeline_mode = #tpu.pipeline_mode<synchronous>, transform_indices = @transform_5, window_bounds = array<i64: 64, 64>}, {pipeline_mode = #tpu.pipeline_mode<synchronous>, transform_indices = @transform_6, window_bounds = array<i64: 128, 64>}, {pipeline_mode = #tpu.pipeline_mode<synchronous>, transform_indices = @transform_7, window_bounds = array<i64: 64, 64>}, {transform_indices = @transform_8, window_bounds = array<i64: 1, 64, 256>}, {transform_indices = @transform_9, window_bounds = array<i64: 1, 64, 256>}]} {
    %c0 = arith.constant 0 : index
    %c0_0 = arith.constant 0 : index
    %c0_1 = arith.constant 0 : index
    %0 = vector.load %arg1[%c0, %c0_0, %c0_1] : memref<1x64x256xf32, #tpu.memory_space<vmem>>, vector<1x64x256xf32>
    %1 = vector.shape_cast %0 : vector<1x64x256xf32> to vector<64x256xf32>
    %c0_2 = arith.constant 0 : index
    %c0_3 = arith.constant 0 : index
    %2 = vector.load %arg5[%c0_2, %c0_3] : memref<64x8xf32, #tpu.memory_space<vmem>>, vector<64x8xf32>
    %3 = vector.extract_strided_slice %2 {offsets = [0, 0], sizes = [64, 1], strides = [1, 1]} : vector<64x8xf32> to vector<64x1xf32>
    %4 = vector.extract_strided_slice %2 {offsets = [0, 1], sizes = [64, 1], strides = [1, 1]} : vector<64x8xf32> to vector<64x1xf32>
    %5 = vector.extract_strided_slice %2 {offsets = [0, 2], sizes = [64, 1], strides = [1, 1]} : vector<64x8xf32> to vector<64x1xf32>
    %6 = vector.extract_strided_slice %2 {offsets = [0, 3], sizes = [64, 1], strides = [1, 1]} : vector<64x8xf32> to vector<64x1xf32>
    %7 = vector.extract_strided_slice %2 {offsets = [0, 4], sizes = [64, 1], strides = [1, 1]} : vector<64x8xf32> to vector<64x1xf32>
    %8 = vector.extract_strided_slice %2 {offsets = [0, 5], sizes = [64, 1], strides = [1, 1]} : vector<64x8xf32> to vector<64x1xf32>
    %cst = arith.constant dense<0.000000e+00> : vector<64xf32>
    %9 = vector.multi_reduction <add>, %1, %cst [1] : vector<64x256xf32> to vector<64xf32>
    %10 = vector.shape_cast %9 : vector<64xf32> to vector<64x1xf32>
    %c0_4 = arith.constant 0 : index
    %c0_5 = arith.constant 0 : index
    %11 = vector.load %arg3[%c0_4, %c0_5] : memref<32x64xf32, #tpu.memory_space<vmem>>, vector<32x64xf32>
    %cst_6 = arith.constant dense<0.000000e+00> : vector<32x1xf32>
    %12 = tpu.matmul %11, %10, %cst_6 {dimension_numbers = #tpu.dot_dimension_numbers<[1], [0], [0], [1], [0, 0, 1, 1], [], []>} : vector<32x64xf32>, vector<64x1xf32>, vector<32x1xf32> -> vector<32x1xf32>
    %c0_7 = arith.constant 0 : index
    %c0_8 = arith.constant 0 : index
    %13 = vector.load %arg4[%c0_7, %c0_8] : memref<64x32xf32, #tpu.memory_space<vmem>>, vector<64x32xf32>
    %cst_9 = arith.constant dense<0.000000e+00> : vector<64x1xf32>
    %14 = tpu.matmul %13, %12, %cst_9 {dimension_numbers = #tpu.dot_dimension_numbers<[1], [0], [0], [1], [0, 0, 1, 1], [], []>} : vector<64x32xf32>, vector<32x1xf32>, vector<64x1xf32> -> vector<64x1xf32>
    %15 = vector.broadcast %14 : vector<64x1xf32> to vector<64x256xf32>
    %16 = arith.subf %1, %15 : vector<64x256xf32>
    %17 = arith.mulf %16, %16 : vector<64x256xf32>
    %cst_10 = arith.constant dense<0.000000e+00> : vector<64xf32>
    %18 = vector.multi_reduction <add>, %17, %cst_10 [1] : vector<64x256xf32> to vector<64xf32>
    %19 = vector.shape_cast %18 : vector<64xf32> to vector<64x1xf32>
    %c0_11 = arith.constant 0 : index
    %c0_12 = arith.constant 0 : index
    %20 = vector.load %arg3[%c0_11, %c0_12] : memref<32x64xf32, #tpu.memory_space<vmem>>, vector<32x64xf32>
    %cst_13 = arith.constant dense<0.000000e+00> : vector<32x1xf32>
    %21 = tpu.matmul %20, %19, %cst_13 {dimension_numbers = #tpu.dot_dimension_numbers<[1], [0], [0], [1], [0, 0, 1, 1], [], []>} : vector<32x64xf32>, vector<64x1xf32>, vector<32x1xf32> -> vector<32x1xf32>
    %c0_14 = arith.constant 0 : index
    %c0_15 = arith.constant 0 : index
    %22 = vector.load %arg4[%c0_14, %c0_15] : memref<64x32xf32, #tpu.memory_space<vmem>>, vector<64x32xf32>
    %cst_16 = arith.constant dense<0.000000e+00> : vector<64x1xf32>
    %23 = tpu.matmul %22, %21, %cst_16 {dimension_numbers = #tpu.dot_dimension_numbers<[1], [0], [0], [1], [0, 0, 1, 1], [], []>} : vector<64x32xf32>, vector<32x1xf32>, vector<64x1xf32> -> vector<64x1xf32>
    %cst_17 = arith.constant 9.99999974E-6 : f32
    %24 = vector.broadcast %cst_17 : f32 to vector<64x1xf32>
    %25 = arith.addf %23, %24 : vector<64x1xf32>
    %26 = math.rsqrt %25 : vector<64x1xf32>
    %27 = arith.mulf %26, %3 : vector<64x1xf32>
    %28 = vector.broadcast %27 : vector<64x1xf32> to vector<64x256xf32>
    %29 = arith.mulf %16, %28 : vector<64x256xf32>
    %30 = vector.broadcast %4 : vector<64x1xf32> to vector<64x256xf32>
    %31 = arith.addf %29, %30 : vector<64x256xf32>
    %32 = arith.truncf %31 : vector<64x256xf32> to vector<64x256xbf16>
    %c0_18 = arith.constant 0 : index
    %c0_19 = arith.constant 0 : index
    %33 = vector.load %arg6[%c0_18, %c0_19] : memref<64x64xbf16, #tpu.memory_space<vmem>>, vector<64x64xbf16>
    %cst_20 = arith.constant dense<0.000000e+00> : vector<64x256xf32>
    %34 = tpu.matmul %33, %32, %cst_20 {dimension_numbers = #tpu.dot_dimension_numbers<[1], [0], [0], [1], [0, 0, 1, 1], [], []>} : vector<64x64xbf16>, vector<64x256xbf16>, vector<64x256xf32> -> vector<64x256xf32>
    %35 = vector.broadcast %5 : vector<64x1xf32> to vector<64x256xf32>
    %36 = arith.addf %34, %35 : vector<64x256xf32>
    %c0_21 = arith.constant 0 : index
    %c0_22 = arith.constant 0 : index
    %37 = vector.load %arg7[%c0_21, %c0_22] : memref<128x64xbf16, #tpu.memory_space<vmem>>, vector<128x64xbf16>
    %c0_23 = arith.constant 0 : index
    %c0_24 = arith.constant 0 : index
    %c0_25 = arith.constant 0 : index
    %38 = vector.load %arg2[%c0_23, %c0_24, %c0_25] : memref<1x64x256xbf16, #tpu.memory_space<vmem>>, vector<1x64x256xbf16>
    %39 = vector.shape_cast %38 : vector<1x64x256xbf16> to vector<64x256xbf16>
    %cst_26 = arith.constant dense<0.000000e+00> : vector<128x256xf32>
    %40 = tpu.matmul %37, %39, %cst_26 {dimension_numbers = #tpu.dot_dimension_numbers<[1], [0], [0], [1], [0, 0, 1, 1], [], []>} : vector<128x64xbf16>, vector<64x256xbf16>, vector<128x256xf32> -> vector<128x256xf32>
    %41 = arith.truncf %36 : vector<64x256xf32> to vector<64x256xbf16>
    %c0_27 = arith.constant 0 : index
    %c0_28 = arith.constant 0 : index
    %42 = vector.load %arg11[%c0_27, %c0_28] : memref<192x256xbf16, #tpu.memory_space<vmem>>, vector<64x256xbf16>
    tpu.vector_store %arg11[%c0_27, %c0_28], %41 {strides = array<i32>} : memref<192x256xbf16, #tpu.memory_space<vmem>>, vector<64x256xbf16>,
    %43 = vector.extract_strided_slice %40 {offsets = [0, 0], sizes = [64, 256], strides = [1, 1]} : vector<128x256xf32> to vector<64x256xf32>
    %44 = vector.broadcast %7 : vector<64x1xf32> to vector<64x256xf32>
    %45 = arith.addf %43, %44 : vector<64x256xf32>
    %46 = arith.truncf %45 : vector<64x256xf32> to vector<64x256xbf16>
    %c64 = arith.constant 64 : index
    %c0_29 = arith.constant 0 : index
    %47 = vector.load %arg11[%c64, %c0_29] : memref<192x256xbf16, #tpu.memory_space<vmem>>, vector<64x256xbf16>
    tpu.vector_store %arg11[%c64, %c0_29], %46 {strides = array<i32>} : memref<192x256xbf16, #tpu.memory_space<vmem>>, vector<64x256xbf16>,
    %48 = vector.extract_strided_slice %40 {offsets = [64, 0], sizes = [64, 256], strides = [1, 1]} : vector<128x256xf32> to vector<64x256xf32>
    %49 = vector.broadcast %8 : vector<64x1xf32> to vector<64x256xf32>
    %50 = arith.addf %48, %49 : vector<64x256xf32>
    %51 = arith.truncf %50 : vector<64x256xf32> to vector<64x256xbf16>
    %c128 = arith.constant 128 : index
    %c0_30 = arith.constant 0 : index
    %52 = vector.load %arg11[%c128, %c0_30] : memref<192x256xbf16, #tpu.memory_space<vmem>>, vector<64x256xbf16>
    tpu.vector_store %arg11[%c128, %c0_30], %51 {strides = array<i32>} : memref<192x256xbf16, #tpu.memory_space<vmem>>, vector<64x256xbf16>,
    %cst_31 = arith.constant 1.000000e+00 : bf16
    %53 = vector.broadcast %cst_31 : bf16 to vector<1x256xbf16>
    %c0_32 = arith.constant 0 : index
    %c0_33 = arith.constant 0 : index
    %54 = vector.load %arg11[%c0_32, %c0_33] : memref<192x256xbf16, #tpu.memory_space<vmem>>, vector<16x256xbf16>
    %c16 = arith.constant 16 : index
    %c0_34 = arith.constant 0 : index
    %55 = vector.load %arg11[%c16, %c0_34] : memref<192x256xbf16, #tpu.memory_space<vmem>>, vector<16x256xbf16>
    %c32 = arith.constant 32 : index
    %c0_35 = arith.constant 0 : index
    %56 = vector.load %arg11[%c32, %c0_35] : memref<192x256xbf16, #tpu.memory_space<vmem>>, vector<16x256xbf16>
    %cst_36 = arith.constant dense<0.000000e+00> : vector<256x256xf32>
    %57 = tpu.matmul %55, %54, %cst_36 {dimension_numbers = #tpu.dot_dimension_numbers<[0], [0], [1], [1], [0, 1, 1, 1], [], []>} : vector<16x256xbf16>, vector<16x256xbf16>, vector<256x256xf32> -> vector<256x256xf32>
    %cst_37 = arith.constant 2.500000e-01 : f32
    %58 = vector.broadcast %cst_37 : f32 to vector<256x256xf32>
    %59 = arith.mulf %57, %58 : vector<256x256xf32>
    %cst_38 = arith.constant dense<0xFF800000> : vector<256xf32>
    %60 = vector.multi_reduction <maximumf>, %59, %cst_38 [0] : vector<256x256xf32> to vector<256xf32>
    %61 = vector.shape_cast %60 : vector<256xf32> to vector<1x256xf32>
    %62 = vector.broadcast %61 : vector<1x256xf32> to vector<256x256xf32>
    %63 = arith.subf %59, %62 : vector<256x256xf32>
    %64 = arith.truncf %63 : vector<256x256xf32> to vector<256x256xbf16>
    %65 = math.exp %64 : vector<256x256xbf16>
    %cst_39 = arith.constant dense<0.000000e+00> : vector<1x256xf32>
    %66 = tpu.matmul %53, %65, %cst_39 {dimension_numbers = #tpu.dot_dimension_numbers<[1], [0], [0], [1], [0, 0, 1, 1], [], []>} : vector<1x256xbf16>, vector<256x256xbf16>, vector<1x256xf32> -> vector<1x256xf32>
    %cst_40 = arith.constant dense<0.000000e+00> : vector<16x256xf32>
    %67 = tpu.matmul %56, %65, %cst_40 {dimension_numbers = #tpu.dot_dimension_numbers<[1], [0], [0], [1], [0, 0, 1, 1], [], []>} : vector<16x256xbf16>, vector<256x256xbf16>, vector<16x256xf32> -> vector<16x256xf32>
    %68 = tpu.reciprocal %66 {approx = true} : vector<1x256xf32> -> vector<1x256xf32>
    %69 = vector.broadcast %68 : vector<1x256xf32> to vector<16x256xf32>
    %70 = arith.mulf %67, %69 : vector<16x256xf32>
    %c0_41 = arith.constant 0 : index
    %c0_42 = arith.constant 0 : index
    %c0_43 = arith.constant 0 : index
    %71 = vector.load %arg10[%c0_41, %c0_42, %c0_43] : memref<1x64x256xf32, #tpu.memory_space<vmem>>, vector<1x16x256xf32>
    %72 = vector.shape_cast %71 : vector<1x16x256xf32> to vector<16x256xf32>
    %73 = vector.shape_cast %70 : vector<16x256xf32> to vector<1x16x256xf32>
    tpu.vector_store %arg10[%c0_41, %c0_42, %c0_43], %73 {strides = array<i32>} : memref<1x64x256xf32, #tpu.memory_space<vmem>>, vector<1x16x256xf32>,
    %c48 = arith.constant 48 : index
    %c0_44 = arith.constant 0 : index
    %74 = vector.load %arg11[%c48, %c0_44] : memref<192x256xbf16, #tpu.memory_space<vmem>>, vector<16x256xbf16>
    %c64_45 = arith.constant 64 : index
    %c0_46 = arith.constant 0 : index
    %75 = vector.load %arg11[%c64_45, %c0_46] : memref<192x256xbf16, #tpu.memory_space<vmem>>, vector<16x256xbf16>
    %c80 = arith.constant 80 : index
    %c0_47 = arith.constant 0 : index
    %76 = vector.load %arg11[%c80, %c0_47] : memref<192x256xbf16, #tpu.memory_space<vmem>>, vector<16x256xbf16>
    %cst_48 = arith.constant dense<0.000000e+00> : vector<256x256xf32>
    %77 = tpu.matmul %75, %74, %cst_48 {dimension_numbers = #tpu.dot_dimension_numbers<[0], [0], [1], [1], [0, 1, 1, 1], [], []>} : vector<16x256xbf16>, vector<16x256xbf16>, vector<256x256xf32> -> vector<256x256xf32>
    %cst_49 = arith.constant 2.500000e-01 : f32
    %78 = vector.broadcast %cst_49 : f32 to vector<256x256xf32>
    %79 = arith.mulf %77, %78 : vector<256x256xf32>
    %cst_50 = arith.constant dense<0xFF800000> : vector<256xf32>
    %80 = vector.multi_reduction <maximumf>, %79, %cst_50 [0] : vector<256x256xf32> to vector<256xf32>
    %81 = vector.shape_cast %80 : vector<256xf32> to vector<1x256xf32>
    %82 = vector.broadcast %81 : vector<1x256xf32> to vector<256x256xf32>
    %83 = arith.subf %79, %82 : vector<256x256xf32>
    %84 = arith.truncf %83 : vector<256x256xf32> to vector<256x256xbf16>
    %85 = math.exp %84 : vector<256x256xbf16>
    %cst_51 = arith.constant dense<0.000000e+00> : vector<1x256xf32>
    %86 = tpu.matmul %53, %85, %cst_51 {dimension_numbers = #tpu.dot_dimension_numbers<[1], [0], [0], [1], [0, 0, 1, 1], [], []>} : vector<1x256xbf16>, vector<256x256xbf16>, vector<1x256xf32> -> vector<1x256xf32>
    %cst_52 = arith.constant dense<0.000000e+00> : vector<16x256xf32>
    %87 = tpu.matmul %76, %85, %cst_52 {dimension_numbers = #tpu.dot_dimension_numbers<[1], [0], [0], [1], [0, 0, 1, 1], [], []>} : vector<16x256xbf16>, vector<256x256xbf16>, vector<16x256xf32> -> vector<16x256xf32>
    %88 = tpu.reciprocal %86 {approx = true} : vector<1x256xf32> -> vector<1x256xf32>
    %89 = vector.broadcast %88 : vector<1x256xf32> to vector<16x256xf32>
    %90 = arith.mulf %87, %89 : vector<16x256xf32>
    %c0_53 = arith.constant 0 : index
    %c16_54 = arith.constant 16 : index
    %c0_55 = arith.constant 0 : index
    %91 = vector.load %arg10[%c0_53, %c16_54, %c0_55] : memref<1x64x256xf32, #tpu.memory_space<vmem>>, vector<1x16x256xf32>
    %92 = vector.shape_cast %91 : vector<1x16x256xf32> to vector<16x256xf32>
    %93 = vector.shape_cast %90 : vector<16x256xf32> to vector<1x16x256xf32>
    tpu.vector_store %arg10[%c0_53, %c16_54, %c0_55], %93 {strides = array<i32>} : memref<1x64x256xf32, #tpu.memory_space<vmem>>, vector<1x16x256xf32>,
    %c96 = arith.constant 96 : index
    %c0_56 = arith.constant 0 : index
    %94 = vector.load %arg11[%c96, %c0_56] : memref<192x256xbf16, #tpu.memory_space<vmem>>, vector<16x256xbf16>
    %c112 = arith.constant 112 : index
    %c0_57 = arith.constant 0 : index
    %95 = vector.load %arg11[%c112, %c0_57] : memref<192x256xbf16, #tpu.memory_space<vmem>>, vector<16x256xbf16>
    %c128_58 = arith.constant 128 : index
    %c0_59 = arith.constant 0 : index
    %96 = vector.load %arg11[%c128_58, %c0_59] : memref<192x256xbf16, #tpu.memory_space<vmem>>, vector<16x256xbf16>
    %cst_60 = arith.constant dense<0.000000e+00> : vector<256x256xf32>
    %97 = tpu.matmul %95, %94, %cst_60 {dimension_numbers = #tpu.dot_dimension_numbers<[0], [0], [1], [1], [0, 1, 1, 1], [], []>} : vector<16x256xbf16>, vector<16x256xbf16>, vector<256x256xf32> -> vector<256x256xf32>
    %cst_61 = arith.constant 2.500000e-01 : f32
    %98 = vector.broadcast %cst_61 : f32 to vector<256x256xf32>
    %99 = arith.mulf %97, %98 : vector<256x256xf32>
    %cst_62 = arith.constant dense<0xFF800000> : vector<256xf32>
    %100 = vector.multi_reduction <maximumf>, %99, %cst_62 [0] : vector<256x256xf32> to vector<256xf32>
    %101 = vector.shape_cast %100 : vector<256xf32> to vector<1x256xf32>
    %102 = vector.broadcast %101 : vector<1x256xf32> to vector<256x256xf32>
    %103 = arith.subf %99, %102 : vector<256x256xf32>
    %104 = arith.truncf %103 : vector<256x256xf32> to vector<256x256xbf16>
    %105 = math.exp %104 : vector<256x256xbf16>
    %cst_63 = arith.constant dense<0.000000e+00> : vector<1x256xf32>
    %106 = tpu.matmul %53, %105, %cst_63 {dimension_numbers = #tpu.dot_dimension_numbers<[1], [0], [0], [1], [0, 0, 1, 1], [], []>} : vector<1x256xbf16>, vector<256x256xbf16>, vector<1x256xf32> -> vector<1x256xf32>
    %cst_64 = arith.constant dense<0.000000e+00> : vector<16x256xf32>
    %107 = tpu.matmul %96, %105, %cst_64 {dimension_numbers = #tpu.dot_dimension_numbers<[1], [0], [0], [1], [0, 0, 1, 1], [], []>} : vector<16x256xbf16>, vector<256x256xbf16>, vector<16x256xf32> -> vector<16x256xf32>
    %108 = tpu.reciprocal %106 {approx = true} : vector<1x256xf32> -> vector<1x256xf32>
    %109 = vector.broadcast %108 : vector<1x256xf32> to vector<16x256xf32>
    %110 = arith.mulf %107, %109 : vector<16x256xf32>
    %c0_65 = arith.constant 0 : index
    %c32_66 = arith.constant 32 : index
    %c0_67 = arith.constant 0 : index
    %111 = vector.load %arg10[%c0_65, %c32_66, %c0_67] : memref<1x64x256xf32, #tpu.memory_space<vmem>>, vector<1x16x256xf32>
    %112 = vector.shape_cast %111 : vector<1x16x256xf32> to vector<16x256xf32>
    %113 = vector.shape_cast %110 : vector<16x256xf32> to vector<1x16x256xf32>
    tpu.vector_store %arg10[%c0_65, %c32_66, %c0_67], %113 {strides = array<i32>} : memref<1x64x256xf32, #tpu.memory_space<vmem>>, vector<1x16x256xf32>,
    %c144 = arith.constant 144 : index
    %c0_68 = arith.constant 0 : index
    %114 = vector.load %arg11[%c144, %c0_68] : memref<192x256xbf16, #tpu.memory_space<vmem>>, vector<16x256xbf16>
    %c160 = arith.constant 160 : index
    %c0_69 = arith.constant 0 : index
    %115 = vector.load %arg11[%c160, %c0_69] : memref<192x256xbf16, #tpu.memory_space<vmem>>, vector<16x256xbf16>
    %c176 = arith.constant 176 : index
    %c0_70 = arith.constant 0 : index
    %116 = vector.load %arg11[%c176, %c0_70] : memref<192x256xbf16, #tpu.memory_space<vmem>>, vector<16x256xbf16>
    %cst_71 = arith.constant dense<0.000000e+00> : vector<256x256xf32>
    %117 = tpu.matmul %115, %114, %cst_71 {dimension_numbers = #tpu.dot_dimension_numbers<[0], [0], [1], [1], [0, 1, 1, 1], [], []>} : vector<16x256xbf16>, vector<16x256xbf16>, vector<256x256xf32> -> vector<256x256xf32>
    %cst_72 = arith.constant 2.500000e-01 : f32
    %118 = vector.broadcast %cst_72 : f32 to vector<256x256xf32>
    %119 = arith.mulf %117, %118 : vector<256x256xf32>
    %cst_73 = arith.constant dense<0xFF800000> : vector<256xf32>
    %120 = vector.multi_reduction <maximumf>, %119, %cst_73 [0] : vector<256x256xf32> to vector<256xf32>
    %121 = vector.shape_cast %120 : vector<256xf32> to vector<1x256xf32>
    %122 = vector.broadcast %121 : vector<1x256xf32> to vector<256x256xf32>
    %123 = arith.subf %119, %122 : vector<256x256xf32>
    %124 = arith.truncf %123 : vector<256x256xf32> to vector<256x256xbf16>
    %125 = math.exp %124 : vector<256x256xbf16>
    %cst_74 = arith.constant dense<0.000000e+00> : vector<1x256xf32>
    %126 = tpu.matmul %53, %125, %cst_74 {dimension_numbers = #tpu.dot_dimension_numbers<[1], [0], [0], [1], [0, 0, 1, 1], [], []>} : vector<1x256xbf16>, vector<256x256xbf16>, vector<1x256xf32> -> vector<1x256xf32>
    %cst_75 = arith.constant dense<0.000000e+00> : vector<16x256xf32>
    %127 = tpu.matmul %116, %125, %cst_75 {dimension_numbers = #tpu.dot_dimension_numbers<[1], [0], [0], [1], [0, 0, 1, 1], [], []>} : vector<16x256xbf16>, vector<256x256xbf16>, vector<16x256xf32> -> vector<16x256xf32>
    %128 = tpu.reciprocal %126 {approx = true} : vector<1x256xf32> -> vector<1x256xf32>
    %129 = vector.broadcast %128 : vector<1x256xf32> to vector<16x256xf32>
    %130 = arith.mulf %127, %129 : vector<16x256xf32>
    %c0_76 = arith.constant 0 : index
    %c48_77 = arith.constant 48 : index
    %c0_78 = arith.constant 0 : index
    %131 = vector.load %arg10[%c0_76, %c48_77, %c0_78] : memref<1x64x256xf32, #tpu.memory_space<vmem>>, vector<1x16x256xf32>
    %132 = vector.shape_cast %131 : vector<1x16x256xf32> to vector<16x256xf32>
    %133 = vector.shape_cast %130 : vector<16x256xf32> to vector<1x16x256xf32>
    tpu.vector_store %arg10[%c0_76, %c48_77, %c0_78], %133 {strides = array<i32>} : memref<1x64x256xf32, #tpu.memory_space<vmem>>, vector<1x16x256xf32>,
    %c0_79 = arith.constant 0 : index
    %c0_80 = arith.constant 0 : index
    %c0_81 = arith.constant 0 : index
    %134 = vector.load %arg10[%c0_79, %c0_80, %c0_81] : memref<1x64x256xf32, #tpu.memory_space<vmem>>, vector<1x64x256xf32>
    %135 = vector.shape_cast %134 : vector<1x64x256xf32> to vector<64x256xf32>
    %136 = arith.truncf %135 : vector<64x256xf32> to vector<64x256xbf16>
    %c0_82 = arith.constant 0 : index
    %c0_83 = arith.constant 0 : index
    %137 = vector.load %arg8[%c0_82, %c0_83] : memref<64x64xbf16, #tpu.memory_space<vmem>>, vector<64x64xbf16>
    %cst_84 = arith.constant dense<0.000000e+00> : vector<64x256xf32>
    %138 = tpu.matmul %137, %136, %cst_84 {dimension_numbers = #tpu.dot_dimension_numbers<[1], [0], [0], [1], [0, 0, 1, 1], [], []>} : vector<64x64xbf16>, vector<64x256xbf16>, vector<64x256xf32> -> vector<64x256xf32>
    %139 = vector.broadcast %6 : vector<64x1xf32> to vector<64x256xf32>
    %140 = arith.addf %138, %139 : vector<64x256xf32>
    %c0_85 = arith.constant 0 : index
    %c0_86 = arith.constant 0 : index
    %c0_87 = arith.constant 0 : index
    %141 = vector.load %arg1[%c0_85, %c0_86, %c0_87] : memref<1x64x256xf32, #tpu.memory_space<vmem>>, vector<1x64x256xf32>
    %142 = vector.shape_cast %141 : vector<1x64x256xf32> to vector<64x256xf32>
    %143 = arith.addf %142, %140 : vector<64x256xf32>
    %c0_88 = arith.constant 0 : index
    %c0_89 = arith.constant 0 : index
    %c0_90 = arith.constant 0 : index
    %144 = vector.load %arg9[%c0_88, %c0_89, %c0_90] : memref<1x64x256xf32, #tpu.memory_space<vmem>>, vector<1x64x256xf32>
    %145 = vector.shape_cast %144 : vector<1x64x256xf32> to vector<64x256xf32>
    %146 = vector.shape_cast %143 : vector<64x256xf32> to vector<1x64x256xf32>
    tpu.vector_store %arg9[%c0_88, %c0_89, %c0_90], %146 {strides = array<i32>} : memref<1x64x256xf32, #tpu.memory_space<vmem>>, vector<1x64x256xf32>,
    return
  }
  func.func @transform_0(%arg0: i32) -> (i32, i32, i32) {
    %c0_i32 = arith.constant 0 : i32
    %c0_i32_0 = arith.constant 0 : i32
    %c0_i32_1 = arith.constant 0 : i32
    return %arg0, %c0_i32, %c0_i32_0 : i32, i32, i32
  }
  func.func @transform_1(%arg0: i32) -> (i32, i32, i32) {
    %c0_i32 = arith.constant 0 : i32
    %c0_i32_0 = arith.constant 0 : i32
    %c0_i32_1 = arith.constant 0 : i32
    return %arg0, %c0_i32, %c0_i32_0 : i32, i32, i32
  }
  func.func @transform_2(%arg0: i32) -> (i32, i32) {
    %c0_i32 = arith.constant 0 : i32
    %c0_i32_0 = arith.constant 0 : i32
    %c0_i32_1 = arith.constant 0 : i32
    return %c0_i32, %c0_i32_0 : i32, i32
  }
  func.func @transform_3(%arg0: i32) -> (i32, i32) {
    %c0_i32 = arith.constant 0 : i32
    %c0_i32_0 = arith.constant 0 : i32
    %c0_i32_1 = arith.constant 0 : i32
    return %c0_i32, %c0_i32_0 : i32, i32
  }
  func.func @transform_4(%arg0: i32) -> (i32, i32) {
    %c0_i32 = arith.constant 0 : i32
    %c0_i32_0 = arith.constant 0 : i32
    %c0_i32_1 = arith.constant 0 : i32
    return %c0_i32, %c0_i32_0 : i32, i32
  }
  func.func @transform_5(%arg0: i32) -> (i32, i32) {
    %c0_i32 = arith.constant 0 : i32
    %c0_i32_0 = arith.constant 0 : i32
    %c0_i32_1 = arith.constant 0 : i32
    return %c0_i32, %c0_i32_0 : i32, i32
  }
  func.func @transform_6(%arg0: i32) -> (i32, i32) {
    %c0_i32 = arith.constant 0 : i32
    %c0_i32_0 = arith.constant 0 : i32
    %c0_i32_1 = arith.constant 0 : i32
    return %c0_i32, %c0_i32_0 : i32, i32
  }
  func.func @transform_7(%arg0: i32) -> (i32, i32) {
    %c0_i32 = arith.constant 0 : i32
    %c0_i32_0 = arith.constant 0 : i32
    %c0_i32_1 = arith.constant 0 : i32
    return %c0_i32, %c0_i32_0 : i32, i32
  }
  func.func @transform_8(%arg0: i32) -> (i32, i32, i32) {
    %c0_i32 = arith.constant 0 : i32
    %c0_i32_0 = arith.constant 0 : i32
    %c0_i32_1 = arith.constant 0 : i32
    return %arg0, %c0_i32, %c0_i32_0 : i32, i32, i32
  }
  func.func @transform_9(%arg0: i32) -> (i32, i32, i32) {
    %c0_i32 = arith.constant 0 : i32
    %c0_i32_0 = arith.constant 0 : i32
    %c0_i32_1 = arith.constant 0 : i32
    return %arg0, %c0_i32, %c0_i32_0 : i32, i32, i32
  }
}

</mosaic_0001>

<llo_original>
// kernel: tpu_custom_call.1
$region0: #{tpu_custom_call.1}
  #allocation0 [shape = 'u32[]', space=smem, size = 0x4, offset = 0x4, fixed_abs, tag = 'smem constant byte address 0x4 - core index']
  #allocation1 [shape = 'u32[144,128]{1,0:T(1,128)}', space=vmem, size = 0x12000, scoped, tag = 'internal scratch']
  #allocation2 [shape = 'bf16[192,256]{1,0:T(16,128)(2,1)}', space=vmem, size = 0x18000, scoped, tag = 'scratch operand']
  %s0 = inlined_call_operand.vmem [shape: f32[2,64,256], index: 0, kind: input, shape index: {}]
  %s1 = inlined_call_operand.hbm [shape: bf16[2,64,256], index: 1, kind: input, shape index: {}]
  %s2 = inlined_call_operand.hbm [shape: f32[32,64], index: 2, kind: input, shape index: {}]
  %s3 = inlined_call_operand.vmem [shape: f32[64,32], index: 3, kind: input, shape index: {}]
  %s4 = inlined_call_operand.vmem [shape: f32[64,8], index: 4, kind: input, shape index: {}]
  %s5 = inlined_call_operand.hbm [shape: bf16[64,64], index: 5, kind: input, shape index: {}]
  %s6 = inlined_call_operand.vmem [shape: bf16[128,64], index: 6, kind: input, shape index: {}]
  %s7 = inlined_call_operand.vmem [shape: bf16[64,64], index: 7, kind: input, shape index: {}]
  %s8 = inlined_call_operand.hbm [shape: f32[2,64,256], index: 8, kind: output, shape index: {0}]
  %s9 = inlined_call_operand.hbm [shape: f32[2,64,256], index: 9, kind: output, shape index: {1}]
  %10 = xla_tuple %s8, %s9
  %s11 = sld [smem:[#allocation0]]
  $region85: #{tpu_custom_call.1} parent=0
    _
  %s13 = ssub.s32 1, %s11
  %s14 = scalar_select 0, %s13, %s11
  $region1: #{tpu_custom_call.1} parent=0
    #allocation3 [shape = 'u8[65536]{0}', space=vmem, size = 0x10000, scoped, tag = 'input window, operand 1']
    #allocation4 [shape = 's32[2]{0}', space=sflag, size = 0x8, scoped, tag = 'scoped memory for tpu_custom_call.1']
    #allocation5 [shape = 's32[2]{0}', space=sflag, size = 0x8, scoped, tag = 'scoped memory for tpu_custom_call.1']
    #allocation6 [shape = 'u8[16384]{0}', space=vmem, size = 0x4000, scoped, tag = 'input window, operand 2, single buffered']
    #allocation7 [shape = 's32[1]{0}', space=sflag, size = 0x4, scoped, tag = 'scoped memory for tpu_custom_call.1']
    #allocation8 [shape = 'u8[16384]{0}', space=vmem, size = 0x4000, scoped, tag = 'input window, operand 5, single buffered']
    #allocation9 [shape = 'u8[131072]{0}', space=vmem, size = 0x20000, scoped, tag = 'output window, operand 0']
    #allocation10 [shape = 'u8[131072]{0}', space=vmem, size = 0x20000, scoped, tag = 'output window, operand 1']
    #allocation11 [shape = 's32[2]{0}', space=sflag, size = 0x8, scoped, tag = 'scoped memory for tpu_custom_call.1']
    %15 = vsyncpa [#allocation4], 0
    %s16 = scalar_lea.sflag [#allocation4], 1
    %17 = vsyncpa %s16, 0
    %18 = vsyncpa [#allocation7], 0
    %19 = vsyncpa [#allocation5], 0
    %s20 = scalar_lea.sflag [#allocation5], 1
    %21 = vsyncpa %s20, 0
    %22 = vsyncpa [#allocation11], 0
    %s23 = scalar_lea.sflag [#allocation11], 1
    %24 = vsyncpa %s23, 0
    loop: start=0, step=1, limit=4
    $region2: #{tpu_custom_call.1} parent=1 // loop_pre_header
      _
    $region3: #{tpu_custom_call.1} parent=1 // loop_header
      %s26 = sphi 0, %s30
      %p27 = scmp.ge.s32.totalorder %s26, 4
      %s36 = sphi 0, %s38
      %s39 = sphi 0, %s36
      %s40 = sphi 0, %s39
      %s56 = sphi 0, %s40
      %s62 = sphi 0, %s64
      %s65 = sphi 0, %s62
      %s66 = sphi 0, %s65
      %s82 = sphi 0, %s66
      %s86 = sphi 0, %s86
      %s88 = sphi 0, %s86
      %s89 = sphi 0, %s88
      %s103 = sphi 0, %s89
      %s107 = sphi 0, %s107
      %s109 = sphi 0, %s107
      %s110 = sphi 0, %s109
      %s124 = sphi 0, %s110
      %s128 = sphi 0, %s128
      %s130 = sphi 0, %s128
      %s131 = sphi 0, %s130
      %s145 = sphi 0, %s131
      %s149 = sphi 0, %s149
      %s151 = sphi 0, %s149
      %s152 = sphi 0, %s151
      %s166 = sphi 0, %s152
      %s170 = sphi 0, %s170
      %s172 = sphi 0, %s170
      %s173 = sphi 0, %s172
      %s187 = sphi 0, %s173
      %s191 = sphi 0, %s191
      %s193 = sphi 0, %s191
      %s194 = sphi 0, %s193
      %s208 = sphi 0, %s194
      %s214 = sphi 0, %s216
      %s217 = sphi 0, %s214
      %s218 = sphi 0, %s217
      %s234 = sphi 0, %s218
      %s240 = sphi 0, %s242
      %s243 = sphi 0, %s240
      %s244 = sphi 0, %s243
      %s260 = sphi 0, %s244
    $region4: #{tpu_custom_call.1} parent=1 // loop_header_branch
      %29 = sbr.rel (%p27) target = $region8
    $region5: #{tpu_custom_call.1} parent=1 // loop_body
      %s31 = ssub.s32 %s26, 1
      %s32 = ssub.s32 %s26, 2
      %s33 = sadd.s32 %s26, 1
      %s34 = ssub.s32 %s26, %s33
      %p35 = scmp.eq.s32.totalorder %s34, 0
      %s37 = sadd.s32 %s36, 1
      %s38 = scalar_select %p35, %s36, %s37
      %p41 = pneg %p35
      %p42 = scmp.eq.s32.totalorder %s26, 1
      %p43 = por %p41, %p42
      %p44 = scmp.ne.s32.totalorder %s36, %s39
      %p45 = scmp.eq.s32.totalorder %s26, 0
      %p46 = por %p44, %p45
      %p47 = scmp.ne.s32.totalorder %s36, %s39
      %p48 = scmp.eq.s32.totalorder %s31, 1
      %p49 = por %p47, %p48
      %p50 = scmp.ne.s32.totalorder %s39, %s40
      %p51 = scmp.eq.s32.totalorder %s31, 0
      %p52 = por %p50, %p51
      %p53 = scmp.ne.s32.totalorder %s39, %s40
      %p54 = scmp.eq.s32.totalorder %s32, 1
      %p55 = por %p53, %p54
      %p57 = scmp.ne.s32.totalorder %s40, %s56
      %p58 = scmp.eq.s32.totalorder %s32, 0
      %p59 = por %p57, %p58
      %s60 = ssub.s32 %s26, %s33
      %p61 = scmp.eq.s32.totalorder %s60, 0
      %s63 = sadd.s32 %s62, 1
      %s64 = scalar_select %p61, %s62, %s63
      %p67 = pneg %p61
      %p68 = scmp.eq.s32.totalorder %s26, 1
      %p69 = por %p67, %p68
      %p70 = scmp.ne.s32.totalorder %s62, %s65
      %p71 = scmp.eq.s32.totalorder %s26, 0
      %p72 = por %p70, %p71
      %p73 = scmp.ne.s32.totalorder %s62, %s65
      %p74 = scmp.eq.s32.totalorder %s31, 1
      %p75 = por %p73, %p74
      %p76 = scmp.ne.s32.totalorder %s65, %s66
      %p77 = scmp.eq.s32.totalorder %s31, 0
      %p78 = por %p76, %p77
      %p79 = scmp.ne.s32.totalorder %s65, %s66
      %p80 = scmp.eq.s32.totalorder %s32, 1
      %p81 = por %p79, %p80
      %p83 = scmp.ne.s32.totalorder %s66, %s82
      %p84 = scmp.eq.s32.totalorder %s32, 0
      %p85 = por %p83, %p84
      %s87 = sadd.s32 %s86, 1
      %p90 = scmp.eq.s32.totalorder %s26, 1
      %p91 = scmp.ne.s32.totalorder %s86, %s88
      %p92 = scmp.eq.s32.totalorder %s26, 0
      %p93 = por %p91, %p92
      %p94 = scmp.ne.s32.totalorder %s86, %s88
      %p95 = scmp.eq.s32.totalorder %s31, 1
      %p96 = por %p94, %p95
      %p97 = scmp.ne.s32.totalorder %s88, %s89
      %p98 = scmp.eq.s32.totalorder %s31, 0
      %p99 = por %p97, %p98
      %p100 = scmp.ne.s32.totalorder %s88, %s89
      %p101 = scmp.eq.s32.totalorder %s32, 1
      %p102 = por %p100, %p101
      %p104 = scmp.ne.s32.totalorder %s89, %s103
      %p105 = scmp.eq.s32.totalorder %s32, 0
      %p106 = por %p104, %p105
      %s108 = sadd.s32 %s107, 1
      %p111 = scmp.eq.s32.totalorder %s26, 1
      %p112 = scmp.ne.s32.totalorder %s107, %s109
      %p113 = scmp.eq.s32.totalorder %s26, 0
      %p114 = por %p112, %p113
      %p115 = scmp.ne.s32.totalorder %s107, %s109
      %p116 = scmp.eq.s32.totalorder %s31, 1
      %p117 = por %p115, %p116
      %p118 = scmp.ne.s32.totalorder %s109, %s110
      %p119 = scmp.eq.s32.totalorder %s31, 0
      %p120 = por %p118, %p119
      %p121 = scmp.ne.s32.totalorder %s109, %s110
      %p122 = scmp.eq.s32.totalorder %s32, 1
      %p123 = por %p121, %p122
      %p125 = scmp.ne.s32.totalorder %s110, %s124
      %p126 = scmp.eq.s32.totalorder %s32, 0
      %p127 = por %p125, %p126
      %s129 = sadd.s32 %s128, 1
      %p132 = scmp.eq.s32.totalorder %s26, 1
      %p133 = scmp.ne.s32.totalorder %s128, %s130
      %p134 = scmp.eq.s32.totalorder %s26, 0
      %p135 = por %p133, %p134
      %p136 = scmp.ne.s32.totalorder %s128, %s130
      %p137 = scmp.eq.s32.totalorder %s31, 1
      %p138 = por %p136, %p137
      %p139 = scmp.ne.s32.totalorder %s130, %s131
      %p140 = scmp.eq.s32.totalorder %s31, 0
      %p141 = por %p139, %p140
      %p142 = scmp.ne.s32.totalorder %s130, %s131
      %p143 = scmp.eq.s32.totalorder %s32, 1
      %p144 = por %p142, %p143
      %p146 = scmp.ne.s32.totalorder %s131, %s145
      %p147 = scmp.eq.s32.totalorder %s32, 0
      %p148 = por %p146, %p147
      %s150 = sadd.s32 %s149, 1
      %p153 = scmp.eq.s32.totalorder %s26, 1
      %p154 = scmp.ne.s32.totalorder %s149, %s151
      %p155 = scmp.eq.s32.totalorder %s26, 0
      %p156 = por %p154, %p155
      %p157 = scmp.ne.s32.totalorder %s149, %s151
      %p158 = scmp.eq.s32.totalorder %s31, 1
      %p159 = por %p157, %p158
      %p160 = scmp.ne.s32.totalorder %s151, %s152
      %p161 = scmp.eq.s32.totalorder %s31, 0
      %p162 = por %p160, %p161
      %p163 = scmp.ne.s32.totalorder %s151, %s152
      %p164 = scmp.eq.s32.totalorder %s32, 1
      %p165 = por %p163, %p164
      %p167 = scmp.ne.s32.totalorder %s152, %s166
      %p168 = scmp.eq.s32.totalorder %s32, 0
      %p169 = por %p167, %p168
      %s171 = sadd.s32 %s170, 1
      %p174 = scmp.eq.s32.totalorder %s26, 1
      %p175 = scmp.ne.s32.totalorder %s170, %s172
      %p176 = scmp.eq.s32.totalorder %s26, 0
      %p177 = por %p175, %p176
      %p178 = scmp.ne.s32.totalorder %s170, %s172
      %p179 = scmp.eq.s32.totalorder %s31, 1
      %p180 = por %p178, %p179
      %p181 = scmp.ne.s32.totalorder %s172, %s173
      %p182 = scmp.eq.s32.totalorder %s31, 0
      %p183 = por %p181, %p182
      %p184 = scmp.ne.s32.totalorder %s172, %s173
      %p185 = scmp.eq.s32.totalorder %s32, 1
      %p186 = por %p184, %p185
      %p188 = scmp.ne.s32.totalorder %s173, %s187
      %p189 = scmp.eq.s32.totalorder %s32, 0
      %p190 = por %p188, %p189
      %s192 = sadd.s32 %s191, 1
      %p195 = scmp.eq.s32.totalorder %s26, 1
      %p196 = scmp.ne.s32.totalorder %s191, %s193
      %p197 = scmp.eq.s32.totalorder %s26, 0
      %p198 = por %p196, %p197
      %p199 = scmp.ne.s32.totalorder %s191, %s193
      %p200 = scmp.eq.s32.totalorder %s31, 1
      %p201 = por %p199, %p200
      %p202 = scmp.ne.s32.totalorder %s193, %s194
      %p203 = scmp.eq.s32.totalorder %s31, 0
      %p204 = por %p202, %p203
      %p205 = scmp.ne.s32.totalorder %s193, %s194
      %p206 = scmp.eq.s32.totalorder %s32, 1
      %p207 = por %p205, %p206
      %p209 = scmp.ne.s32.totalorder %s194, %s208
      %p210 = scmp.eq.s32.totalorder %s32, 0
      %p211 = por %p209, %p210
      %s212 = ssub.s32 %s26, %s33
      %p213 = scmp.eq.s32.totalorder %s212, 0
      %s215 = sadd.s32 %s214, 1
      %s216 = scalar_select %p213, %s214, %s215
      %p219 = pneg %p213
      %p220 = scmp.eq.s32.totalorder %s26, 1
      %p221 = por %p219, %p220
      %p222 = scmp.ne.s32.totalorder %s214, %s217
      %p223 = scmp.eq.s32.totalorder %s26, 0
      %p224 = por %p222, %p223
      %p225 = scmp.ne.s32.totalorder %s214, %s217
      %p226 = scmp.eq.s32.totalorder %s31, 1
      %p227 = por %p225, %p226
      %p228 = scmp.ne.s32.totalorder %s217, %s218
      %p229 = scmp.eq.s32.totalorder %s31, 0
      %p230 = por %p228, %p229
      %p231 = scmp.ne.s32.totalorder %s217, %s218
      %p232 = scmp.eq.s32.totalorder %s32, 1
      %p233 = por %p231, %p232
      %p235 = scmp.ne.s32.totalorder %s218, %s234
      %p236 = scmp.eq.s32.totalorder %s32, 0
      %p237 = por %p235, %p236
      %s238 = ssub.s32 %s26, %s33
      %p239 = scmp.eq.s32.totalorder %s238, 0
      %s241 = sadd.s32 %s240, 1
      %s242 = scalar_select %p239, %s240, %s241
      %p245 = pneg %p239
      %p246 = scmp.eq.s32.totalorder %s26, 1
      %p247 = por %p245, %p246
      %p248 = scmp.ne.s32.totalorder %s240, %s243
      %p249 = scmp.eq.s32.totalorder %s26, 0
      %p250 = por %p248, %p249
      %p251 = scmp.ne.s32.totalorder %s240, %s243
      %p252 = scmp.eq.s32.totalorder %s31, 1
      %p253 = por %p251, %p252
      %p254 = scmp.ne.s32.totalorder %s243, %s244
      %p255 = scmp.eq.s32.totalorder %s31, 0
      %p256 = por %p254, %p255
      %p257 = scmp.ne.s32.totalorder %s243, %s244
      %p258 = scmp.eq.s32.totalorder %s32, 1
      %p259 = por %p257, %p258
      %p261 = scmp.ne.s32.totalorder %s244, %s260
      %p262 = scmp.eq.s32.totalorder %s32, 0
      %p263 = por %p261, %p262
      %p264 = scmp.le.s32.totalorder 1, %s26
      %p265 = scmp.lt.s32.totalorder %s26, 3
      %p266 = pnand %p264, %p265
      %p267 = pneg %p266
      // Predicated region
      $region9: #{tpu_custom_call.1} parent=5 // pred_check
        _
      $region10: #{tpu_custom_call.1} parent=5 // pred_check_branch
        %269 = sbr.rel (%p266) target = $region12
      $region11: #{tpu_custom_call.1} parent=5 // pred_region
        %s270 = ssub.s32 %s26, 1
        // Predicated region
        $region13: #{tpu_custom_call.1} parent=11 // pred_check
          %p271 = pneg %p99
        $region14: #{tpu_custom_call.1} parent=11 // pred_check_branch
          %273 = sbr.rel (%p271) target = $region16
        $region15: #{tpu_custom_call.1} parent=11 // pred_region
          %s275 = ssub.s32 512, 512
          %276 = vsyncadd [#allocation7], %s275
          %s277 = sshll.u32 [#allocation6], 4
          %s278 = int_to_ptr.vmem [resolvable:$true] %s277
          %283 = dma.hbm_to_vmem [thread:$0]  %s2, 512, %s278, [#allocation7], 128, 128, 8
        $region16: #{tpu_custom_call.1} parent=11 // pred_fallthru
          _
        // Predicated region
        $region17: #{tpu_custom_call.1} parent=11 // pred_check
          %p284 = pneg %p120
        $region18: #{tpu_custom_call.1} parent=11 // pred_check_branch
          %286 = sbr.rel (%p284) target = $region20
        $region19: #{tpu_custom_call.1} parent=11 // pred_region
          _
        $region20: #{tpu_custom_call.1} parent=11 // pred_fallthru
          _
        // Predicated region
        $region21: #{tpu_custom_call.1} parent=11 // pred_check
          %p287 = pneg %p141
        $region22: #{tpu_custom_call.1} parent=11 // pred_check_branch
          %289 = sbr.rel (%p287) target = $region24
        $region23: #{tpu_custom_call.1} parent=11 // pred_region
          _
        $region24: #{tpu_custom_call.1} parent=11 // pred_fallthru
          _
        // Predicated region
        $region25: #{tpu_custom_call.1} parent=11 // pred_check
          %p290 = pneg %p162
        $region26: #{tpu_custom_call.1} parent=11 // pred_check_branch
          %292 = sbr.rel (%p290) target = $region28
        $region27: #{tpu_custom_call.1} parent=11 // pred_region
          %s294 = ssub.s32 512, 512
          %295 = vsyncadd [#allocation7], %s294
          %s296 = sshll.u32 [#allocation8], 4
          %s297 = int_to_ptr.vmem [resolvable:$true] %s296
          %302 = dma.hbm_to_vmem [thread:$0]  %s5, 512, %s297, [#allocation7], 64, 64, 4
        $region28: #{tpu_custom_call.1} parent=11 // pred_fallthru
          _
        // Predicated region
        $region29: #{tpu_custom_call.1} parent=11 // pred_check
          %p303 = pneg %p183
        $region30: #{tpu_custom_call.1} parent=11 // pred_check_branch
          %305 = sbr.rel (%p303) target = $region32
        $region31: #{tpu_custom_call.1} parent=11 // pred_region
          _
        $region32: #{tpu_custom_call.1} parent=11 // pred_fallthru
          _
        // Predicated region
        $region33: #{tpu_custom_call.1} parent=11 // pred_check
          %p306 = pneg %p204
        $region34: #{tpu_custom_call.1} parent=11 // pred_check_branch
          %308 = sbr.rel (%p306) target = $region36
        $region35: #{tpu_custom_call.1} parent=11 // pred_region
          _
        $region36: #{tpu_custom_call.1} parent=11 // pred_fallthru
          _
      $region12: #{tpu_custom_call.1} parent=5 // pred_fallthru
        _
      %p309 = scmp.lt.s32.totalorder %s26, 2
      // Predicated region
      $region37: #{tpu_custom_call.1} parent=5 // pred_check
        %p310 = pneg %p309
      $region38: #{tpu_custom_call.1} parent=5 // pred_check_branch
        %312 = sbr.rel (%p310) target = $region40
      $region39: #{tpu_custom_call.1} parent=5 // pred_region
        // Predicated region
        $region41: #{tpu_custom_call.1} parent=39 // pred_check
          %p313 = pneg %p46
        $region42: #{tpu_custom_call.1} parent=39 // pred_check_branch
          %315 = sbr.rel (%p313) target = $region44
        $region43: #{tpu_custom_call.1} parent=39 // pred_region
          %p316 = scmp.lt.s32.totalorder %s26, 1
          %s317 = scalar_select %p316, %s26, 1
          %s318 = smul.addr %s317, 16
          %s319 = smul.addr %s318, 8
          %s320 = scalar_lea.vmem %s0, %s319
        $region44: #{tpu_custom_call.1} parent=39 // pred_fallthru
          _
        // Predicated region
        $region45: #{tpu_custom_call.1} parent=39 // pred_check
          %p321 = pneg %p72
        $region46: #{tpu_custom_call.1} parent=39 // pred_check_branch
          %323 = sbr.rel (%p321) target = $region48
        $region47: #{tpu_custom_call.1} parent=39 // pred_region
          %s324 = sand.u32 %s62, 1
          %s325 = scalar_lea.sflag [#allocation4], %s324
          %s326 = sand.u32 %s62, 1
          %s327 = smul.addr %s326, 64
          %s328 = scalar_lea.vmem [#allocation3], %s327
          %s330 = ssub.s32 1024, 1024
          %331 = vsyncadd %s325, %s330
          %s332 = smul.addr %s26, 16
          %s333 = smul.addr %s332, 64
          %s334 = scalar_lea.hbm %s1, %s333
          %s335 = sshll.u32 %s328, 4
          %s336 = int_to_ptr.vmem [resolvable:$true] %s335
          %341 = dma.hbm_to_vmem [thread:$0]  %s334, 1024, %s336, %s325, 128, 128, 8
        $region48: #{tpu_custom_call.1} parent=39 // pred_fallthru
          _
      $region40: #{tpu_custom_call.1} parent=5 // pred_fallthru
        _
      %p342 = scmp.le.s32.totalorder 1, %s26
      %p343 = scmp.lt.s32.totalorder %s26, 3
      %p344 = pnand %p342, %p343
      %p345 = pneg %p344
      // Predicated region
      $region49: #{tpu_custom_call.1} parent=5 // pred_check
        _
      $region50: #{tpu_custom_call.1} parent=5 // pred_check_branch
        %347 = sbr.rel (%p344) target = $region52
      $region51: #{tpu_custom_call.1} parent=5 // pred_region
        %s348 = ssub.s32 %s26, 1
        %s349 = sand.u32 %s65, 1
        %s350 = scalar_lea.sflag [#allocation4], %s349
        %s351 = sand.u32 %s65, 1
        %s352 = smul.addr %s351, 64
        %s353 = scalar_lea.vmem [#allocation3], %s352
        // Predicated region
        $region53: #{tpu_custom_call.1} parent=51 // pred_check
          %p354 = pneg %p78
        $region54: #{tpu_custom_call.1} parent=51 // pred_check_branch
          %356 = sbr.rel (%p354) target = $region56
        $region55: #{tpu_custom_call.1} parent=51 // pred_region
          %357 = dma.done %s350, 1024
        $region56: #{tpu_custom_call.1} parent=51 // pred_fallthru
          _
        // Predicated region
        $region57: #{tpu_custom_call.1} parent=51 // pred_check
          %p358 = pneg %p99
        $region58: #{tpu_custom_call.1} parent=51 // pred_check_branch
          %360 = sbr.rel (%p358) target = $region60
        $region59: #{tpu_custom_call.1} parent=51 // pred_region
          %361 = dma.done [#allocation7], 512
        $region60: #{tpu_custom_call.1} parent=51 // pred_fallthru
          _
        // Predicated region
        $region61: #{tpu_custom_call.1} parent=51 // pred_check
          %p362 = pneg %p162
        $region62: #{tpu_custom_call.1} parent=51 // pred_check_branch
          %364 = sbr.rel (%p362) target = $region64
        $region63: #{tpu_custom_call.1} parent=51 // pred_region
          %365 = dma.done [#allocation7], 512
        $region64: #{tpu_custom_call.1} parent=51 // pred_fallthru
          _
        %p366 = scmp.lt.s32.totalorder %s31, 1
        %s367 = scalar_select %p366, %s31, 1
        %s368 = smul.addr %s367, 16
        %s369 = smul.addr %s368, 8
        %s370 = scalar_lea.vmem %s0, %s369
        %p371 = pneg %p52
        %p372 = pneg %p49
        %s373 = sand.u32 %s65, 1
        %s374 = scalar_lea.sflag [#allocation4], %s373
        %s375 = sand.u32 %s65, 1
        %s376 = smul.addr %s375, 64
        %s377 = scalar_lea.vmem [#allocation3], %s376
        %p378 = pneg %p78
        %p379 = pneg %p75
        %p380 = pneg %p99
        %p381 = pneg %p96
        %p382 = pneg %p120
        %p383 = pneg %p117
        %p384 = pneg %p141
        %p385 = pneg %p138
        %p386 = pneg %p162
        %p387 = pneg %p159
        %p388 = pneg %p183
        %p389 = pneg %p180
        %p390 = pneg %p204
        %p391 = pneg %p201
        %p392 = pneg %p230
        %p393 = pneg %p227
        %s394 = sand.u32 %s217, 1
        %s395 = scalar_lea.sflag [#allocation5], %s394
        %s396 = sand.u32 %s217, 1
        %s397 = smul.addr %s396, 128
        %s398 = scalar_lea.vmem [#allocation9], %s397
        %p399 = pneg %p256
        %p400 = pneg %p253
        %s401 = sand.u32 %s243, 1
        %s402 = scalar_lea.sflag [#allocation11], %s401
        %s403 = sand.u32 %s243, 1
        %s404 = smul.addr %s403, 128
        %s405 = scalar_lea.vmem [#allocation10], %s404
        %p406 = scmp.lt.s32.totalorder %s31, 1
        %s407 = scalar_select %p406, %s31, 1
        %s408 = smul.addr %s407, 16
        %s409 = smul.addr %s408, 8
        %s410 = scalar_lea.vmem %s0, %s409
        %v413 = vld [vmem:[%s410] sm:$0xff]
        %v414 = vld [vmem:[%s410 + $0x8] sm:$0xff]
        %v415 = vld [vmem:[%s410 + $0x10] sm:$0xff]
        %v416 = vld [vmem:[%s410 + $0x18] sm:$0xff]
        %v417 = vld [vmem:[%s410 + $0x20] sm:$0xff]
        %v418 = vld [vmem:[%s410 + $0x28] sm:$0xff]
        %v419 = vld [vmem:[%s410 + $0x30] sm:$0xff]
        %v420 = vld [vmem:[%s410 + $0x38] sm:$0xff]
        %v421 = vld [vmem:[%s410 + $0x40] sm:$0xff]
        %v422 = vld [vmem:[%s410 + $0x48] sm:$0xff]
        %v423 = vld [vmem:[%s410 + $0x50] sm:$0xff]
        %v424 = vld [vmem:[%s410 + $0x58] sm:$0xff]
        %v425 = vld [vmem:[%s410 + $0x60] sm:$0xff]
        %v426 = vld [vmem:[%s410 + $0x68] sm:$0xff]
        %v427 = vld [vmem:[%s410 + $0x70] sm:$0xff]
        %v428 = vld [vmem:[%s410 + $0x78] sm:$0xff]
        %v429 = vld [vmem:[%s4] sm:$0xff]
        %v430 = vld [vmem:[%s4 + $0x8] sm:$0xff]
        %v431 = vld [vmem:[%s4 + $0x10] sm:$0xff]
        %v432 = vld [vmem:[%s4 + $0x18] sm:$0xff]
        %v433 = vld [vmem:[%s4 + $0x20] sm:$0xff]
        %v434 = vld [vmem:[%s4 + $0x28] sm:$0xff]
        %v435 = vld [vmem:[%s4 + $0x30] sm:$0xff]
        %v436 = vld [vmem:[%s4 + $0x38] sm:$0xff]
        %v437 = vadd.f32 %v413, %v414
        %438 = vadd.xlane.f32.xlu0 %v437
        %v439 = vpop.xlane.xlu0 %438
        %v440 = vadd.f32 %v415, %v416
        %441 = vadd.xlane.f32.xlu0 %v440
        %v442 = vpop.xlane.xlu0 %441
        %v443 = vadd.f32 %v417, %v418
        %444 = vadd.xlane.f32.xlu0 %v443
        %v445 = vpop.xlane.xlu0 %444
        %v446 = vadd.f32 %v419, %v420
        %447 = vadd.xlane.f32.xlu0 %v446
        %v448 = vpop.xlane.xlu0 %447
        %v449 = vadd.f32 %v421, %v422
        %450 = vadd.xlane.f32.xlu0 %v449
        %v451 = vpop.xlane.xlu0 %450
        %v452 = vadd.f32 %v423, %v424
        %453 = vadd.xlane.f32.xlu0 %v452
        %v454 = vpop.xlane.xlu0 %453
        %v455 = vadd.f32 %v425, %v426
        %456 = vadd.xlane.f32.xlu0 %v455
        %v457 = vpop.xlane.xlu0 %456
        %v458 = vadd.f32 %v427, %v428
        %459 = vadd.xlane.f32.xlu0 %v458
        %v460 = vpop.xlane.xlu0 %459
        %v461 = vld [vmem:[#allocation6] sm:$0xff]
        %v462 = vld [vmem:[#allocation6 + $0x8] sm:$0xff]
        %v463 = vld [vmem:[#allocation6 + $0x10] sm:$0xff]
        %v464 = vld [vmem:[#allocation6 + $0x18] sm:$0xff]
        %vm465 = vcmask 523264
        %v467 = vsel %vm465, %v461, 0
        %v470 = vsel %vm465, %v462, 0
        %v473 = vsel %vm465, %v463, 0
        %v476 = vsel %vm465, %v464, 0
        %478 = vmatprep.subr.mxu0 0.0
        %479 = vmatpush1.msra.mxu0 %v439
        %480 = vmatprep.subr.mxu0 0.0
        %481 = vmatpush1.msra.mxu0 %v442
        %482 = vmatprep.subr.mxu0 0.0
        %483 = vmatpush1.msra.mxu0 %v445
        %484 = vmatprep.subr.mxu0 0.0
        %485 = vmatpush1.msra.mxu0 %v448
        %486 = vmatprep.subr.mxu0 0.0
        %487 = vmatpush1.msra.mxu0 %v451
        %488 = vmatprep.subr.mxu0 0.0
        %489 = vmatpush1.msra.mxu0 %v454
        %490 = vmatprep.subr.mxu0 0.0
        %491 = vmatpush1.msra.mxu0 %v457
        %492 = vmatprep.subr.mxu0 0.0
        %493 = vmatpush1.msra.mxu0 %v460
        %494 = vmatprep.subr.mxu0 0.0
        %495 = vmatpush1.msra.mxu0 0.0
        %496 = vmatprep.subr.mxu0 0.0
        %497 = vmatpush1.msra.mxu0 0.0
        %498 = vmatprep.subr.mxu0 0.0
        %499 = vmatpush1.msra.mxu0 0.0
        %500 = vmatprep.subr.mxu0 0.0
        %501 = vmatpush1.msra.mxu0 0.0
        %502 = vmatprep.subr.mxu0 0.0
        %503 = vmatpush1.msra.mxu0 0.0
        %504 = vmatprep.subr.mxu0 0.0
        %505 = vmatpush1.msra.mxu0 0.0
        %506 = vmatprep.subr.mxu0 0.0
        %507 = vmatpush1.msra.mxu0 0.0
        %508 = vmatprep.subr.mxu0 0.0
        %509 = vmatpush1.msra.mxu0 0.0
        %510 = vmatprep.subr.mxu0 0.0
        %511 = vmatpush1.msra.mxu0 0.0
        %512 = vmatprep.subr.mxu0 0.0
        %513 = vmatpush1.msra.mxu0 0.0
        %514 = vmatprep.subr.mxu0 0.0
        %515 = vmatpush1.msra.mxu0 0.0
        %516 = vmatprep.subr.mxu0 0.0
        %517 = vmatpush1.msra.mxu0 0.0
        %518 = vmatprep.subr.mxu0 0.0
        %519 = vmatpush1.msra.mxu0 0.0
        %520 = vmatprep.subr.mxu0 0.0
        %521 = vmatpush1.msra.mxu0 0.0
        %522 = vmatprep.subr.mxu0 0.0
        %523 = vmatpush1.msra.mxu0 0.0
        %524 = vmatprep.subr.mxu0 0.0
        %525 = vmatpush1.msra.mxu0 0.0
        %526 = vmatprep.subr.mxu0 0.0
        %527 = vmatpush1.msra.mxu0 0.0
        %528 = vmatprep.subr.mxu0 0.0
        %529 = vmatpush1.msra.mxu0 0.0
        %530 = vmatprep.subr.mxu0 0.0
        %531 = vmatpush1.msra.mxu0 0.0
        %532 = vmatprep.subr.mxu0 0.0
        %533 = vmatpush1.msra.mxu0 0.0
        %534 = vmatprep.subr.mxu0 0.0
        %535 = vmatpush1.msra.mxu0 0.0
        %536 = vmatprep.subr.mxu0 0.0
        %537 = vmatpush1.msra.mxu0 0.0
        %538 = vmatprep.subr.mxu0 0.0
        %539 = vmatpush1.msra.mxu0 0.0
        %540 = vmatprep.subr.mxu0 0.0
        %541 = vmatpush1.msra.mxu0 0.0
        %542 = vmatprep.mubr.f32.mxu0 0.0
        %543 = vmatmul.mubr.f32.gmra.mrb[0].mxu0 %v467
        %v544 = vpop.f32.mrb[0].mxu0
        %v545 = vadd.f32 0.0, %v544
        %v546 = vpop.f32.mrb[0].mxu0
        %547 = vmatprep.mubr.f32.mxu0 0.0
        %548 = vmatmul.mubr.f32.gmra.mrb[0].mxu0 %v470
        %v549 = vpop.f32.mrb[0].mxu0
        %v550 = vadd.f32 0.0, %v549
        %v551 = vpop.f32.mrb[0].mxu0
        %552 = vmatprep.mubr.f32.mxu0 0.0
        %553 = vmatmul.mubr.f32.gmra.mrb[0].mxu0 %v473
        %v554 = vpop.f32.mrb[0].mxu0
        %v555 = vadd.f32 0.0, %v554
        %v556 = vpop.f32.mrb[0].mxu0
        %557 = vmatprep.mubr.f32.mxu0 0.0
        %558 = vmatmul.mubr.f32.gmra.mrb[0].mxu0 %v476
        %v559 = vpop.f32.mrb[0].mxu0
        %v560 = vadd.f32 0.0, %v559
        %v561 = vpop.f32.mrb[0].mxu0
        %562 = vdwg.mxu0
        %v563 = vld [vmem:[%s3] sm:$0xff]
        %v564 = vld [vmem:[%s3 + $0x8] sm:$0xff]
        %v565 = vld [vmem:[%s3 + $0x10] sm:$0xff]
        %v566 = vld [vmem:[%s3 + $0x18] sm:$0xff]
        %v567 = vld [vmem:[%s3 + $0x20] sm:$0xff]
        %v568 = vld [vmem:[%s3 + $0x28] sm:$0xff]
        %v569 = vld [vmem:[%s3 + $0x30] sm:$0xff]
        %v570 = vld [vmem:[%s3 + $0x38] sm:$0xff]
        %vm571 = vcmask 261120
        %v573 = vsel %vm571, %v563, 0
        %v576 = vsel %vm571, %v564, 0
        %v579 = vsel %vm571, %v565, 0
        %v582 = vsel %vm571, %v566, 0
        %v585 = vsel %vm571, %v567, 0
        %v588 = vsel %vm571, %v568, 0
        %v591 = vsel %vm571, %v569, 0
        %v594 = vsel %vm571, %v570, 0
        %596 = vmatprep.subr.mxu0 0.0
        %597 = vmatpush1.msra.mxu0 %v545
        %598 = vmatprep.subr.mxu0 0.0
        %599 = vmatpush1.msra.mxu0 %v550
        %600 = vmatprep.subr.mxu0 0.0
        %601 = vmatpush1.msra.mxu0 %v555
        %602 = vmatprep.subr.mxu0 0.0
        %603 = vmatpush1.msra.mxu0 %v560
        %604 = vmatprep.subr.mxu0 0.0
        %605 = vmatpush1.msra.mxu0 0.0
        %606 = vmatprep.subr.mxu0 0.0
        %607 = vmatpush1.msra.mxu0 0.0
        %608 = vmatprep.subr.mxu0 0.0
        %609 = vmatpush1.msra.mxu0 0.0
        %610 = vmatprep.subr.mxu0 0.0
        %611 = vmatpush1.msra.mxu0 0.0
        %612 = vmatprep.subr.mxu0 0.0
        %613 = vmatpush1.msra.mxu0 0.0
        %614 = vmatprep.subr.mxu0 0.0
        %615 = vmatpush1.msra.mxu0 0.0
        %616 = vmatprep.subr.mxu0 0.0
        %617 = vmatpush1.msra.mxu0 0.0
        %618 = vmatprep.subr.mxu0 0.0
        %619 = vmatpush1.msra.mxu0 0.0
        %620 = vmatprep.subr.mxu0 0.0
        %621 = vmatpush1.msra.mxu0 0.0
        %622 = vmatprep.subr.mxu0 0.0
        %623 = vmatpush1.msra.mxu0 0.0
        %624 = vmatprep.subr.mxu0 0.0
        %625 = vmatpush1.msra.mxu0 0.0
        %626 = vmatprep.subr.mxu0 0.0
        %627 = vmatpush1.msra.mxu0 0.0
        %628 = vmatprep.subr.mxu0 0.0
        %629 = vmatpush1.msra.mxu0 0.0
        %630 = vmatprep.subr.mxu0 0.0
        %631 = vmatpush1.msra.mxu0 0.0
        %632 = vmatprep.subr.mxu0 0.0
        %633 = vmatpush1.msra.mxu0 0.0
        %634 = vmatprep.subr.mxu0 0.0
        %635 = vmatpush1.msra.mxu0 0.0
        %636 = vmatprep.subr.mxu0 0.0
        %637 = vmatpush1.msra.mxu0 0.0
        %638 = vmatprep.subr.mxu0 0.0
        %639 = vmatpush1.msra.mxu0 0.0
        %640 = vmatprep.subr.mxu0 0.0
        %641 = vmatpush1.msra.mxu0 0.0
        %642 = vmatprep.subr.mxu0 0.0
        %643 = vmatpush1.msra.mxu0 0.0
        %644 = vmatprep.subr.mxu0 0.0
        %645 = vmatpush1.msra.mxu0 0.0
        %646 = vmatprep.subr.mxu0 0.0
        %647 = vmatpush1.msra.mxu0 0.0
        %648 = vmatprep.subr.mxu0 0.0
        %649 = vmatpush1.msra.mxu0 0.0
        %650 = vmatprep.subr.mxu0 0.0
        %651 = vmatpush1.msra.mxu0 0.0
        %652 = vmatprep.subr.mxu0 0.0
        %653 = vmatpush1.msra.mxu0 0.0
        %654 = vmatprep.subr.mxu0 0.0
        %655 = vmatpush1.msra.mxu0 0.0
        %656 = vmatprep.subr.mxu0 0.0
        %657 = vmatpush1.msra.mxu0 0.0
        %658 = vmatprep.subr.mxu0 0.0
        %659 = vmatpush1.msra.mxu0 0.0
        %660 = vmatprep.mubr.f32.mxu0 0.0
        %661 = vmatmul.mubr.f32.gmra.mrb[0].mxu0 %v573
        %v662 = vpop.f32.mrb[0].mxu0
        %v663 = vadd.f32 0.0, %v662
        %v664 = vpop.f32.mrb[0].mxu0
        %665 = vmatprep.mubr.f32.mxu0 0.0
        %666 = vmatmul.mubr.f32.gmra.mrb[0].mxu0 %v576
        %v667 = vpop.f32.mrb[0].mxu0
        %v668 = vadd.f32 0.0, %v667
        %v669 = vpop.f32.mrb[0].mxu0
        %670 = vmatprep.mubr.f32.mxu0 0.0
        %671 = vmatmul.mubr.f32.gmra.mrb[0].mxu0 %v579
        %v672 = vpop.f32.mrb[0].mxu0
        %v673 = vadd.f32 0.0, %v672
        %v674 = vpop.f32.mrb[0].mxu0
        %675 = vmatprep.mubr.f32.mxu0 0.0
        %676 = vmatmul.mubr.f32.gmra.mrb[0].mxu0 %v582
        %v677 = vpop.f32.mrb[0].mxu0
        %v678 = vadd.f32 0.0, %v677
        %v679 = vpop.f32.mrb[0].mxu0
        %680 = vmatprep.mubr.f32.mxu0 0.0
        %681 = vmatmul.mubr.f32.gmra.mrb[0].mxu0 %v585
        %v682 = vpop.f32.mrb[0].mxu0
        %v683 = vadd.f32 0.0, %v682
        %v684 = vpop.f32.mrb[0].mxu0
        %685 = vmatprep.mubr.f32.mxu0 0.0
        %686 = vmatmul.mubr.f32.gmra.mrb[0].mxu0 %v588
        %v687 = vpop.f32.mrb[0].mxu0
        %v688 = vadd.f32 0.0, %v687
        %v689 = vpop.f32.mrb[0].mxu0
        %690 = vmatprep.mubr.f32.mxu0 0.0
        %691 = vmatmul.mubr.f32.gmra.mrb[0].mxu0 %v591
        %v692 = vpop.f32.mrb[0].mxu0
        %v693 = vadd.f32 0.0, %v692
        %v694 = vpop.f32.mrb[0].mxu0
        %695 = vmatprep.mubr.f32.mxu0 0.0
        %696 = vmatmul.mubr.f32.gmra.mrb[0].mxu0 %v594
        %v697 = vpop.f32.mrb[0].mxu0
        %v698 = vadd.f32 0.0, %v697
        %v699 = vpop.f32.mrb[0].mxu0
        %700 = vdwg.mxu0
        %702 = vset.pattern.permute.xlu0 0
        %703 = vperm.xlu0 %702, %v663
        %v704 = vpop.permute.xlu0 %703
        %707 = vset.pattern.permute.xlu0 0
        %708 = vperm.xlu0 %707, %v668
        %v709 = vpop.permute.xlu0 %708
        %712 = vset.pattern.permute.xlu0 0
        %713 = vperm.xlu0 %712, %v673
        %v714 = vpop.permute.xlu0 %713
        %717 = vset.pattern.permute.xlu0 0
        %718 = vperm.xlu0 %717, %v678
        %v719 = vpop.permute.xlu0 %718
        %722 = vset.pattern.permute.xlu0 0
        %723 = vperm.xlu0 %722, %v683
        %v724 = vpop.permute.xlu0 %723
        %727 = vset.pattern.permute.xlu0 0
        %728 = vperm.xlu0 %727, %v688
        %v729 = vpop.permute.xlu0 %728
        %732 = vset.pattern.permute.xlu0 0
        %733 = vperm.xlu0 %732, %v693
        %v734 = vpop.permute.xlu0 %733
        %737 = vset.pattern.permute.xlu0 0
        %738 = vperm.xlu0 %737, %v698
        %v739 = vpop.permute.xlu0 %738
        %v741 = vsub.f32 %v413, %v704
        %v742 = vsub.f32 %v414, %v704
        %v743 = vsub.f32 %v415, %v709
        %v744 = vsub.f32 %v416, %v709
        %v745 = vsub.f32 %v417, %v714
        %v746 = vsub.f32 %v418, %v714
        %v747 = vsub.f32 %v419, %v719
        %v748 = vsub.f32 %v420, %v719
        %v749 = vsub.f32 %v421, %v724
        %v750 = vsub.f32 %v422, %v724
        %v751 = vsub.f32 %v423, %v729
        %v752 = vsub.f32 %v424, %v729
        %v753 = vsub.f32 %v425, %v734
        %v754 = vsub.f32 %v426, %v734
        %v755 = vsub.f32 %v427, %v739
        %v756 = vsub.f32 %v428, %v739
        %v757 = vmul.f32 %v741, %v741
        %v758 = vmul.f32 %v742, %v742
        %v759 = vmul.f32 %v743, %v743
        %v760 = vmul.f32 %v744, %v744
        %v761 = vmul.f32 %v745, %v745
        %v762 = vmul.f32 %v746, %v746
        %v763 = vmul.f32 %v747, %v747
        %v764 = vmul.f32 %v748, %v748
        %v765 = vmul.f32 %v749, %v749
        %v766 = vmul.f32 %v750, %v750
        %v767 = vmul.f32 %v751, %v751
        %v768 = vmul.f32 %v752, %v752
        %v769 = vmul.f32 %v753, %v753
        %v770 = vmul.f32 %v754, %v754
        %v771 = vmul.f32 %v755, %v755
        %v772 = vmul.f32 %v756, %v756
        %v773 = vadd.f32 %v757, %v758
        %774 = vadd.xlane.f32.xlu0 %v773
        %v775 = vpop.xlane.xlu0 %774
        %v776 = vadd.f32 %v759, %v760
        %777 = vadd.xlane.f32.xlu0 %v776
        %v778 = vpop.xlane.xlu0 %777
        %v779 = vadd.f32 %v761, %v762
        %780 = vadd.xlane.f32.xlu0 %v779
        %v781 = vpop.xlane.xlu0 %780
        %v782 = vadd.f32 %v763, %v764
        %783 = vadd.xlane.f32.xlu0 %v782
        %v784 = vpop.xlane.xlu0 %783
        %v785 = vadd.f32 %v765, %v766
        %786 = vadd.xlane.f32.xlu0 %v785
        %v787 = vpop.xlane.xlu0 %786
        %v788 = vadd.f32 %v767, %v768
        %789 = vadd.xlane.f32.xlu0 %v788
        %v790 = vpop.xlane.xlu0 %789
        %v791 = vadd.f32 %v769, %v770
        %792 = vadd.xlane.f32.xlu0 %v791
        %v793 = vpop.xlane.xlu0 %792
        %v794 = vadd.f32 %v771, %v772
        %795 = vadd.xlane.f32.xlu0 %v794
        %v796 = vpop.xlane.xlu0 %795
        %797 = vmatprep.subr.mxu0 0.0
        %798 = vmatpush1.msra.mxu0 %v775
        %799 = vmatprep.subr.mxu0 0.0
        %800 = vmatpush1.msra.mxu0 %v778
        %801 = vmatprep.subr.mxu0 0.0
        %802 = vmatpush1.msra.mxu0 %v781
        %803 = vmatprep.subr.mxu0 0.0
        %804 = vmatpush1.msra.mxu0 %v784
        %805 = vmatprep.subr.mxu0 0.0
        %806 = vmatpush1.msra.mxu0 %v787
        %807 = vmatprep.subr.mxu0 0.0
        %808 = vmatpush1.msra.mxu0 %v790
        %809 = vmatprep.subr.mxu0 0.0
        %810 = vmatpush1.msra.mxu0 %v793
        %811 = vmatprep.subr.mxu0 0.0
        %812 = vmatpush1.msra.mxu0 %v796
        %813 = vmatprep.subr.mxu0 0.0
        %814 = vmatpush1.msra.mxu0 0.0
        %815 = vmatprep.subr.mxu0 0.0
        %816 = vmatpush1.msra.mxu0 0.0
        %817 = vmatprep.subr.mxu0 0.0
        %818 = vmatpush1.msra.mxu0 0.0
        %819 = vmatprep.subr.mxu0 0.0
        %820 = vmatpush1.msra.mxu0 0.0
        %821 = vmatprep.subr.mxu0 0.0
        %822 = vmatpush1.msra.mxu0 0.0
        %823 = vmatprep.subr.mxu0 0.0
        %824 = vmatpush1.msra.mxu0 0.0
        %825 = vmatprep.subr.mxu0 0.0
        %826 = vmatpush1.msra.mxu0 0.0
        %827 = vmatprep.subr.mxu0 0.0
        %828 = vmatpush1.msra.mxu0 0.0
        %829 = vmatprep.subr.mxu0 0.0
        %830 = vmatpush1.msra.mxu0 0.0
        %831 = vmatprep.subr.mxu0 0.0
        %832 = vmatpush1.msra.mxu0 0.0
        %833 = vmatprep.subr.mxu0 0.0
        %834 = vmatpush1.msra.mxu0 0.0
        %835 = vmatprep.subr.mxu0 0.0
        %836 = vmatpush1.msra.mxu0 0.0
        %837 = vmatprep.subr.mxu0 0.0
        %838 = vmatpush1.msra.mxu0 0.0
        %839 = vmatprep.subr.mxu0 0.0
        %840 = vmatpush1.msra.mxu0 0.0
        %841 = vmatprep.subr.mxu0 0.0
        %842 = vmatpush1.msra.mxu0 0.0
        %843 = vmatprep.subr.mxu0 0.0
        %844 = vmatpush1.msra.mxu0 0.0
        %845 = vmatprep.subr.mxu0 0.0
        %846 = vmatpush1.msra.mxu0 0.0
        %847 = vmatprep.subr.mxu0 0.0
        %848 = vmatpush1.msra.mxu0 0.0
        %849 = vmatprep.subr.mxu0 0.0
        %850 = vmatpush1.msra.mxu0 0.0
        %851 = vmatprep.subr.mxu0 0.0
        %852 = vmatpush1.msra.mxu0 0.0
        %853 = vmatprep.subr.mxu0 0.0
        %854 = vmatpush1.msra.mxu0 0.0
        %855 = vmatprep.subr.mxu0 0.0
        %856 = vmatpush1.msra.mxu0 0.0
        %857 = vmatprep.subr.mxu0 0.0
        %858 = vmatpush1.msra.mxu0 0.0
        %859 = vmatprep.subr.mxu0 0.0
        %860 = vmatpush1.msra.mxu0 0.0
        %861 = vmatprep.mubr.f32.mxu0 0.0
        %862 = vmatmul.mubr.f32.gmra.mrb[0].mxu0 %v467
        %v863 = vpop.f32.mrb[0].mxu0
        %v864 = vadd.f32 0.0, %v863
        %v865 = vpop.f32.mrb[0].mxu0
        %866 = vmatprep.mubr.f32.mxu0 0.0
        %867 = vmatmul.mubr.f32.gmra.mrb[0].mxu0 %v470
        %v868 = vpop.f32.mrb[0].mxu0
        %v869 = vadd.f32 0.0, %v868
        %v870 = vpop.f32.mrb[0].mxu0
        %871 = vmatprep.mubr.f32.mxu0 0.0
        %872 = vmatmul.mubr.f32.gmra.mrb[0].mxu0 %v473
        %v873 = vpop.f32.mrb[0].mxu0
        %v874 = vadd.f32 0.0, %v873
        %v875 = vpop.f32.mrb[0].mxu0
        %876 = vmatprep.mubr.f32.mxu0 0.0
        %877 = vmatmul.mubr.f32.gmra.mrb[0].mxu0 %v476
        %v878 = vpop.f32.mrb[0].mxu0
        %v879 = vadd.f32 0.0, %v878
        %v880 = vpop.f32.mrb[0].mxu0
        %881 = vdwg.mxu0
        %882 = vmatprep.subr.mxu0 0.0
        %883 = vmatpush1.msra.mxu0 %v864
        %884 = vmatprep.subr.mxu0 0.0
        %885 = vmatpush1.msra.mxu0 %v869
        %886 = vmatprep.subr.mxu0 0.0
        %887 = vmatpush1.msra.mxu0 %v874
        %888 = vmatprep.subr.mxu0 0.0
        %889 = vmatpush1.msra.mxu0 %v879
        %890 = vmatprep.subr.mxu0 0.0
        %891 = vmatpush1.msra.mxu0 0.0
        %892 = vmatprep.subr.mxu0 0.0
        %893 = vmatpush1.msra.mxu0 0.0
        %894 = vmatprep.subr.mxu0 0.0
        %895 = vmatpush1.msra.mxu0 0.0
        %896 = vmatprep.subr.mxu0 0.0
        %897 = vmatpush1.msra.mxu0 0.0
        %898 = vmatprep.subr.mxu0 0.0
        %899 = vmatpush1.msra.mxu0 0.0
        %900 = vmatprep.subr.mxu0 0.0
        %901 = vmatpush1.msra.mxu0 0.0
        %902 = vmatprep.subr.mxu0 0.0
        %903 = vmatpush1.msra.mxu0 0.0
        %904 = vmatprep.subr.mxu0 0.0
        %905 = vmatpush1.msra.mxu0 0.0
        %906 = vmatprep.subr.mxu0 0.0
        %907 = vmatpush1.msra.mxu0 0.0
        %908 = vmatprep.subr.mxu0 0.0
        %909 = vmatpush1.msra.mxu0 0.0
        %910 = vmatprep.subr.mxu0 0.0
        %911 = vmatpush1.msra.mxu0 0.0
        %912 = vmatprep.subr.mxu0 0.0
        %913 = vmatpush1.msra.mxu0 0.0
        %914 = vmatprep.subr.mxu0 0.0
        %915 = vmatpush1.msra.mxu0 0.0
        %916 = vmatprep.subr.mxu0 0.0
        %917 = vmatpush1.msra.mxu0 0.0
        %918 = vmatprep.subr.mxu0 0.0
        %919 = vmatpush1.msra.mxu0 0.0
        %920 = vmatprep.subr.mxu0 0.0
        %921 = vmatpush1.msra.mxu0 0.0
        %922 = vmatprep.subr.mxu0 0.0
        %923 = vmatpush1.msra.mxu0 0.0
        %924 = vmatprep.subr.mxu0 0.0
        %925 = vmatpush1.msra.mxu0 0.0
        %926 = vmatprep.subr.mxu0 0.0
        %927 = vmatpush1.msra.mxu0 0.0
        %928 = vmatprep.subr.mxu0 0.0
        %929 = vmatpush1.msra.mxu0 0.0
        %930 = vmatprep.subr.mxu0 0.0
        %931 = vmatpush1.msra.mxu0 0.0
        %932 = vmatprep.subr.mxu0 0.0
        %933 = vmatpush1.msra.mxu0 0.0
        %934 = vmatprep.subr.mxu0 0.0
        %935 = vmatpush1.msra.mxu0 0.0
        %936 = vmatprep.subr.mxu0 0.0
        %937 = vmatpush1.msra.mxu0 0.0
        %938 = vmatprep.subr.mxu0 0.0
        %939 = vmatpush1.msra.mxu0 0.0
        %940 = vmatprep.subr.mxu0 0.0
        %941 = vmatpush1.msra.mxu0 0.0
        %942 = vmatprep.subr.mxu0 0.0
        %943 = vmatpush1.msra.mxu0 0.0
        %944 = vmatprep.subr.mxu0 0.0
        %945 = vmatpush1.msra.mxu0 0.0
        %946 = vmatprep.mubr.f32.mxu0 0.0
        %947 = vmatmul.mubr.f32.gmra.mrb[0].mxu0 %v573
        %v948 = vpop.f32.mrb[0].mxu0
        %v949 = vadd.f32 1e-05, %v948
        %v950 = vpop.f32.mrb[0].mxu0
        %951 = vmatprep.mubr.f32.mxu0 0.0
        %952 = vmatmul.mubr.f32.gmra.mrb[0].mxu0 %v576
        %v953 = vpop.f32.mrb[0].mxu0
        %v954 = vadd.f32 1e-05, %v953
        %v955 = vpop.f32.mrb[0].mxu0
        %956 = vmatprep.mubr.f32.mxu0 0.0
        %957 = vmatmul.mubr.f32.gmra.mrb[0].mxu0 %v579
        %v958 = vpop.f32.mrb[0].mxu0
        %v959 = vadd.f32 1e-05, %v958
        %v960 = vpop.f32.mrb[0].mxu0
        %961 = vmatprep.mubr.f32.mxu0 0.0
        %962 = vmatmul.mubr.f32.gmra.mrb[0].mxu0 %v582
        %v963 = vpop.f32.mrb[0].mxu0
        %v964 = vadd.f32 1e-05, %v963
        %v965 = vpop.f32.mrb[0].mxu0
        %966 = vmatprep.mubr.f32.mxu0 0.0
        %967 = vmatmul.mubr.f32.gmra.mrb[0].mxu0 %v585
        %v968 = vpop.f32.mrb[0].mxu0
        %v969 = vadd.f32 1e-05, %v968
        %v970 = vpop.f32.mrb[0].mxu0
        %971 = vmatprep.mubr.f32.mxu0 0.0
        %972 = vmatmul.mubr.f32.gmra.mrb[0].mxu0 %v588
        %v973 = vpop.f32.mrb[0].mxu0
        %v974 = vadd.f32 1e-05, %v973
        %v975 = vpop.f32.mrb[0].mxu0
        %976 = vmatprep.mubr.f32.mxu0 0.0
        %977 = vmatmul.mubr.f32.gmra.mrb[0].mxu0 %v591
        %v978 = vpop.f32.mrb[0].mxu0
        %v979 = vadd.f32 1e-05, %v978
        %v980 = vpop.f32.mrb[0].mxu0
        %981 = vmatprep.mubr.f32.mxu0 0.0
        %982 = vmatmul.mubr.f32.gmra.mrb[0].mxu0 %v594
        %v983 = vpop.f32.mrb[0].mxu0
        %v984 = vadd.f32 1e-05, %v983
        %v985 = vpop.f32.mrb[0].mxu0
        %986 = vdwg.mxu0
        %v987 = vrsqrt.pop %v949
        %v988 = vrsqrt.pop %v954
        %v989 = vrsqrt.pop %v959
        %v990 = vrsqrt.pop %v964
        %v991 = vrsqrt.pop %v969
        %v992 = vrsqrt.pop %v974
        %v993 = vrsqrt.pop %v979
        %v994 = vrsqrt.pop %v984
        %v995 = vmul.f32 %v987, %v429
        %v996 = vmul.f32 %v988, %v430
        %v997 = vmul.f32 %v989, %v431
        %v998 = vmul.f32 %v990, %v432
        %v999 = vmul.f32 %v991, %v433
        %v1000 = vmul.f32 %v992, %v434
        %v1001 = vmul.f32 %v993, %v435
        %v1002 = vmul.f32 %v994, %v436
        %1004 = vset.pattern.permute.xlu0 0
        %1005 = vperm.xlu0 %1004, %v995
        %v1006 = vpop.permute.xlu0 %1005
        %1009 = vset.pattern.permute.xlu0 0
        %1010 = vperm.xlu0 %1009, %v996
        %v1011 = vpop.permute.xlu0 %1010
        %1014 = vset.pattern.permute.xlu0 0
        %1015 = vperm.xlu0 %1014, %v997
        %v1016 = vpop.permute.xlu0 %1015
        %1019 = vset.pattern.permute.xlu0 0
        %1020 = vperm.xlu0 %1019, %v998
        %v1021 = vpop.permute.xlu0 %1020
        %1024 = vset.pattern.permute.xlu0 0
        %1025 = vperm.xlu0 %1024, %v999
        %v1026 = vpop.permute.xlu0 %1025
        %1029 = vset.pattern.permute.xlu0 0
        %1030 = vperm.xlu0 %1029, %v1000
        %v1031 = vpop.permute.xlu0 %1030
        %1034 = vset.pattern.permute.xlu0 0
        %1035 = vperm.xlu0 %1034, %v1001
        %v1036 = vpop.permute.xlu0 %1035
        %1039 = vset.pattern.permute.xlu0 0
        %1040 = vperm.xlu0 %1039, %v1002
        %v1041 = vpop.permute.xlu0 %1040
        %v1043 = vmul.f32 %v741, %v1006
        %v1044 = vmul.f32 %v742, %v1006
        %v1045 = vmul.f32 %v743, %v1011
        %v1046 = vmul.f32 %v744, %v1011
        %v1047 = vmul.f32 %v745, %v1016
        %v1048 = vmul.f32 %v746, %v1016
        %v1049 = vmul.f32 %v747, %v1021
        %v1050 = vmul.f32 %v748, %v1021
        %v1051 = vmul.f32 %v749, %v1026
        %v1052 = vmul.f32 %v750, %v1026
        %v1053 = vmul.f32 %v751, %v1031
        %v1054 = vmul.f32 %v752, %v1031
        %v1055 = vmul.f32 %v753, %v1036
        %v1056 = vmul.f32 %v754, %v1036
        %v1057 = vmul.f32 %v755, %v1041
        %v1058 = vmul.f32 %v756, %v1041
        %1060 = vset.pattern.permute.xlu0 1
        %1061 = vperm.xlu0 %1060, %v429
        %v1062 = vpop.permute.xlu0 %1061
        %1065 = vset.pattern.permute.xlu0 1
        %1066 = vperm.xlu0 %1065, %v430
        %v1067 = vpop.permute.xlu0 %1066
        %1070 = vset.pattern.permute.xlu0 1
        %1071 = vperm.xlu0 %1070, %v431
        %v1072 = vpop.permute.xlu0 %1071
        %1075 = vset.pattern.permute.xlu0 1
        %1076 = vperm.xlu0 %1075, %v432
        %v1077 = vpop.permute.xlu0 %1076
        %1080 = vset.pattern.permute.xlu0 1
        %1081 = vperm.xlu0 %1080, %v433
        %v1082 = vpop.permute.xlu0 %1081
        %1085 = vset.pattern.permute.xlu0 1
        %1086 = vperm.xlu0 %1085, %v434
        %v1087 = vpop.permute.xlu0 %1086
        %1090 = vset.pattern.permute.xlu0 1
        %1091 = vperm.xlu0 %1090, %v435
        %v1092 = vpop.permute.xlu0 %1091
        %1095 = vset.pattern.permute.xlu0 1
        %1096 = vperm.xlu0 %1095, %v436
        %v1097 = vpop.permute.xlu0 %1096
        %v1099 = vadd.f32 %v1043, %v1062
        %v1100 = vadd.f32 %v1044, %v1062
        %v1101 = vadd.f32 %v1045, %v1067
        %v1102 = vadd.f32 %v1046, %v1067
        %v1103 = vadd.f32 %v1047, %v1072
        %v1104 = vadd.f32 %v1048, %v1072
        %v1105 = vadd.f32 %v1049, %v1077
        %v1106 = vadd.f32 %v1050, %v1077
        %v1107 = vadd.f32 %v1051, %v1082
        %v1108 = vadd.f32 %v1052, %v1082
        %v1109 = vadd.f32 %v1053, %v1087
        %v1110 = vadd.f32 %v1054, %v1087
        %v1111 = vadd.f32 %v1055, %v1092
        %v1112 = vadd.f32 %v1056, %v1092
        %v1113 = vadd.f32 %v1057, %v1097
        %v1114 = vadd.f32 %v1058, %v1097
        %v1115 = vpack.c.bf16 %v1101, %v1099
        %v1116 = vpack.c.bf16 %v1102, %v1100
        %v1117 = vpack.c.bf16 %v1105, %v1103
        %v1118 = vpack.c.bf16 %v1106, %v1104
        %v1119 = vpack.c.bf16 %v1109, %v1107
        %v1120 = vpack.c.bf16 %v1110, %v1108
        %v1121 = vpack.c.bf16 %v1113, %v1111
        %v1122 = vpack.c.bf16 %v1114, %v1112
        %v1123 = vld [vmem:[#allocation8] sm:$0xf]
        %v1124 = vld [vmem:[#allocation8 + $0x4] sm:$0xf]
        %v1125 = vld [vmem:[#allocation8 + $0x8] sm:$0xf]
        %v1126 = vld [vmem:[#allocation8 + $0xc] sm:$0xf]
        %v1127 = vld [vmem:[#allocation8 + $0x10] sm:$0xf]
        %v1128 = vld [vmem:[#allocation8 + $0x14] sm:$0xf]
        %v1129 = vld [vmem:[#allocation8 + $0x18] sm:$0xf]
        %v1130 = vld [vmem:[#allocation8 + $0x1c] sm:$0xf]
        %1131 = vset.pattern.permute.xlu0 2
        %1132 = vperm.xlu0 %1131, %v429
        %v1133 = vpop.permute.xlu0 %1132
        %1135 = vset.pattern.permute.xlu0 2
        %1136 = vperm.xlu0 %1135, %v430
        %v1137 = vpop.permute.xlu0 %1136
        %1139 = vset.pattern.permute.xlu0 2
        %1140 = vperm.xlu0 %1139, %v431
        %v1141 = vpop.permute.xlu0 %1140
        %1143 = vset.pattern.permute.xlu0 2
        %1144 = vperm.xlu0 %1143, %v432
        %v1145 = vpop.permute.xlu0 %1144
        %1147 = vset.pattern.permute.xlu0 2
        %1148 = vperm.xlu0 %1147, %v433
        %v1149 = vpop.permute.xlu0 %1148
        %1151 = vset.pattern.permute.xlu0 2
        %1152 = vperm.xlu0 %1151, %v434
        %v1153 = vpop.permute.xlu0 %1152
        %1155 = vset.pattern.permute.xlu0 2
        %1156 = vperm.xlu0 %1155, %v435
        %v1157 = vpop.permute.xlu0 %1156
        %1159 = vset.pattern.permute.xlu0 2
        %1160 = vperm.xlu0 %1159, %v436
        %v1161 = vpop.permute.xlu0 %1160
        %v1171 = vunpack.c.l.b16 %v1123
        %v1172 = vunpack.c.l.b16 %v1124
        %v1173 = vunpack.c.l.b16 %v1125
        %v1174 = vunpack.c.l.b16 %v1126
        %v1175 = vunpack.c.l.b16 %v1127
        %v1176 = vunpack.c.l.b16 %v1128
        %v1177 = vunpack.c.l.b16 %v1129
        %v1178 = vunpack.c.l.b16 %v1130
        %v1179 = vpack.c.b16 %v1172, %v1171
        %v1180 = vpack.c.b16 %v1174, %v1173
        %v1181 = vpack.c.b16 %v1176, %v1175
        %v1182 = vpack.c.b16 %v1178, %v1177
        %v1184 = vsel %vm465, %v1179, 0
        %v1187 = vsel %vm465, %v1180, 0
        %v1190 = vsel %vm465, %v1181, 0
        %v1193 = vsel %vm465, %v1182, 0
        %1195 = vmatprep.subr.bf16.mxu0 %v1116
        %1196 = vmatpush1.bf16.msra.mxu0 %v1115
        %1197 = vmatprep.subr.bf16.mxu0 %v1118
        %1198 = vmatpush1.bf16.msra.mxu0 %v1117
        %1199 = vmatprep.subr.bf16.mxu0 %v1120
        %1200 = vmatpush1.bf16.msra.mxu0 %v1119
        %1201 = vmatprep.subr.bf16.mxu0 %v1122
        %1202 = vmatpush1.bf16.msra.mxu0 %v1121
        %1203 = vmatprep.subr.bf16.mxu0 0
        %1204 = vmatpush1.bf16.msra.mxu0 0
        %1205 = vmatprep.subr.bf16.mxu0 0
        %1206 = vmatpush1.bf16.msra.mxu0 0
        %1207 = vmatprep.subr.bf16.mxu0 0
        %1208 = vmatpush1.bf16.msra.mxu0 0
        %1209 = vmatprep.subr.bf16.mxu0 0
        %1210 = vmatpush1.bf16.msra.mxu0 0
        %1211 = vmatprep.subr.bf16.mxu0 0
        %1212 = vmatpush1.bf16.msra.mxu0 0
        %1213 = vmatprep.subr.bf16.mxu0 0
        %1214 = vmatpush1.bf16.msra.mxu0 0
        %1215 = vmatprep.subr.bf16.mxu0 0
        %1216 = vmatpush1.bf16.msra.mxu0 0
        %1217 = vmatprep.subr.bf16.mxu0 0
        %1218 = vmatpush1.bf16.msra.mxu0 0
        %1219 = vmatprep.subr.bf16.mxu0 0
        %1220 = vmatpush1.bf16.msra.mxu0 0
        %1221 = vmatprep.subr.bf16.mxu0 0
        %1222 = vmatpush1.bf16.msra.mxu0 0
        %1223 = vmatprep.subr.bf16.mxu0 0
        %1224 = vmatpush1.bf16.msra.mxu0 0
        %1225 = vmatprep.subr.bf16.mxu0 0
        %1226 = vmatpush1.bf16.msra.mxu0 0
        %1227 = vmatprep.mubr.bf16.mxu0 0
        %1228 = vmatmul.mubr.bf16.gmra.mrb[0].mxu0 %v1184
        %v1229 = vpop.f32.mrb[0].mxu0
        %v1230 = vadd.f32 %v1133, %v1229
        %v1231 = vpop.f32.mrb[0].mxu0
        %v1232 = vadd.f32 %v1133, %v1231
        %v1233 = vpop.f32.mrb[0].mxu0
        %v1234 = vadd.f32 %v1137, %v1233
        %v1235 = vpop.f32.mrb[0].mxu0
        %v1236 = vadd.f32 %v1137, %v1235
        %1237 = vmatprep.mubr.bf16.mxu0 0
        %1238 = vmatmul.mubr.bf16.gmra.mrb[0].mxu0 %v1187
        %v1239 = vpop.f32.mrb[0].mxu0
        %v1240 = vadd.f32 %v1141, %v1239
        %v1241 = vpop.f32.mrb[0].mxu0
        %v1242 = vadd.f32 %v1141, %v1241
        %v1243 = vpop.f32.mrb[0].mxu0
        %v1244 = vadd.f32 %v1145, %v1243
        %v1245 = vpop.f32.mrb[0].mxu0
        %v1246 = vadd.f32 %v1145, %v1245
        %1247 = vmatprep.mubr.bf16.mxu0 0
        %1248 = vmatmul.mubr.bf16.gmra.mrb[0].mxu0 %v1190
        %v1249 = vpop.f32.mrb[0].mxu0
        %v1250 = vadd.f32 %v1149, %v1249
        %v1251 = vpop.f32.mrb[0].mxu0
        %v1252 = vadd.f32 %v1149, %v1251
        %v1253 = vpop.f32.mrb[0].mxu0
        %v1254 = vadd.f32 %v1153, %v1253
        %v1255 = vpop.f32.mrb[0].mxu0
        %v1256 = vadd.f32 %v1153, %v1255
        %1257 = vmatprep.mubr.bf16.mxu0 0
        %1258 = vmatmul.mubr.bf16.gmra.mrb[0].mxu0 %v1193
        %v1259 = vpop.f32.mrb[0].mxu0
        %v1260 = vadd.f32 %v1157, %v1259
        %v1261 = vpop.f32.mrb[0].mxu0
        %v1262 = vadd.f32 %v1157, %v1261
        %v1263 = vpop.f32.mrb[0].mxu0
        %v1264 = vadd.f32 %v1161, %v1263
        %v1265 = vpop.f32.mrb[0].mxu0
        %v1266 = vadd.f32 %v1161, %v1265
        %1267 = vdwg.mxu0
        %v1268 = vld [vmem:[%s6] sm:$0xf]
        %v1269 = vld [vmem:[%s6 + $0x4] sm:$0xf]
        %v1270 = vld [vmem:[%s6 + $0x8] sm:$0xf]
        %v1271 = vld [vmem:[%s6 + $0xc] sm:$0xf]
        %v1272 = vld [vmem:[%s6 + $0x10] sm:$0xf]
        %v1273 = vld [vmem:[%s6 + $0x14] sm:$0xf]
        %v1274 = vld [vmem:[%s6 + $0x18] sm:$0xf]
        %v1275 = vld [vmem:[%s6 + $0x1c] sm:$0xf]
        %v1276 = vld [vmem:[%s6 + $0x20] sm:$0xf]
        %v1277 = vld [vmem:[%s6 + $0x24] sm:$0xf]
        %v1278 = vld [vmem:[%s6 + $0x28] sm:$0xf]
        %v1279 = vld [vmem:[%s6 + $0x2c] sm:$0xf]
        %v1280 = vld [vmem:[%s6 + $0x30] sm:$0xf]
        %v1281 = vld [vmem:[%s6 + $0x34] sm:$0xf]
        %v1282 = vld [vmem:[%s6 + $0x38] sm:$0xf]
        %v1283 = vld [vmem:[%s6 + $0x3c] sm:$0xf]
        %v1284 = vld [vmem:[%s353] sm:$0xff]
        %v1285 = vld [vmem:[%s353 + $0x8] sm:$0xff]
        %v1286 = vld [vmem:[%s353 + $0x10] sm:$0xff]
        %v1287 = vld [vmem:[%s353 + $0x18] sm:$0xff]
        %v1288 = vld [vmem:[%s353 + $0x20] sm:$0xff]
        %v1289 = vld [vmem:[%s353 + $0x28] sm:$0xff]
        %v1290 = vld [vmem:[%s353 + $0x30] sm:$0xff]
        %v1291 = vld [vmem:[%s353 + $0x38] sm:$0xff]
        %v1308 = vunpack.c.l.b16 %v1268
        %v1309 = vunpack.c.l.b16 %v1269
        %v1310 = vunpack.c.l.b16 %v1270
        %v1311 = vunpack.c.l.b16 %v1271
        %v1312 = vunpack.c.l.b16 %v1272
        %v1313 = vunpack.c.l.b16 %v1273
        %v1314 = vunpack.c.l.b16 %v1274
        %v1315 = vunpack.c.l.b16 %v1275
        %v1316 = vunpack.c.l.b16 %v1276
        %v1317 = vunpack.c.l.b16 %v1277
        %v1318 = vunpack.c.l.b16 %v1278
        %v1319 = vunpack.c.l.b16 %v1279
        %v1320 = vunpack.c.l.b16 %v1280
        %v1321 = vunpack.c.l.b16 %v1281
        %v1322 = vunpack.c.l.b16 %v1282
        %v1323 = vunpack.c.l.b16 %v1283
        %v1324 = vpack.c.b16 %v1309, %v1308
        %v1325 = vpack.c.b16 %v1311, %v1310
        %v1326 = vpack.c.b16 %v1313, %v1312
        %v1327 = vpack.c.b16 %v1315, %v1314
        %v1328 = vpack.c.b16 %v1317, %v1316
        %v1329 = vpack.c.b16 %v1319, %v1318
        %v1330 = vpack.c.b16 %v1321, %v1320
        %v1331 = vpack.c.b16 %v1323, %v1322
        %v1340 = vunpack.c.l.b16 %v1284
        %v1341 = vunpack.c.h.b16 %v1284
        %v1342 = vunpack.c.l.b16 %v1285
        %v1343 = vunpack.c.h.b16 %v1285
        %v1344 = vunpack.c.l.b16 %v1286
        %v1345 = vunpack.c.h.b16 %v1286
        %v1346 = vunpack.c.l.b16 %v1287
        %v1347 = vunpack.c.h.b16 %v1287
        %v1348 = vunpack.c.l.b16 %v1288
        %v1349 = vunpack.c.h.b16 %v1288
        %v1350 = vunpack.c.l.b16 %v1289
        %v1351 = vunpack.c.h.b16 %v1289
        %v1352 = vunpack.c.l.b16 %v1290
        %v1353 = vunpack.c.h.b16 %v1290
        %v1354 = vunpack.c.l.b16 %v1291
        %v1355 = vunpack.c.h.b16 %v1291
        %v1356 = vpack.c.b16 %v1342, %v1340
        %v1357 = vpack.c.b16 %v1343, %v1341
        %v1358 = vpack.c.b16 %v1346, %v1344
        %v1359 = vpack.c.b16 %v1347, %v1345
        %v1360 = vpack.c.b16 %v1350, %v1348
        %v1361 = vpack.c.b16 %v1351, %v1349
        %v1362 = vpack.c.b16 %v1354, %v1352
        %v1363 = vpack.c.b16 %v1355, %v1353
        %v1373 = vsel %vm465, %v1324, 0
        %v1376 = vsel %vm465, %v1325, 0
        %v1379 = vsel %vm465, %v1326, 0
        %v1382 = vsel %vm465, %v1327, 0
        %v1385 = vsel %vm465, %v1328, 0
        %v1388 = vsel %vm465, %v1329, 0
        %v1391 = vsel %vm465, %v1330, 0
        %v1394 = vsel %vm465, %v1331, 0
        %1396 = vmatprep.subr.bf16.mxu0 %v1357
        %1397 = vmatpush1.bf16.msra.mxu0 %v1356
        %1398 = vmatprep.subr.bf16.mxu0 %v1359
        %1399 = vmatpush1.bf16.msra.mxu0 %v1358
        %1400 = vmatprep.subr.bf16.mxu0 %v1361
        %1401 = vmatpush1.bf16.msra.mxu0 %v1360
        %1402 = vmatprep.subr.bf16.mxu0 %v1363
        %1403 = vmatpush1.bf16.msra.mxu0 %v1362
        %1404 = vmatprep.subr.bf16.mxu0 0
        %1405 = vmatpush1.bf16.msra.mxu0 0
        %1406 = vmatprep.subr.bf16.mxu0 0
        %1407 = vmatpush1.bf16.msra.mxu0 0
        %1408 = vmatprep.subr.bf16.mxu0 0
        %1409 = vmatpush1.bf16.msra.mxu0 0
        %1410 = vmatprep.subr.bf16.mxu0 0
        %1411 = vmatpush1.bf16.msra.mxu0 0
        %1412 = vmatprep.subr.bf16.mxu0 0
        %1413 = vmatpush1.bf16.msra.mxu0 0
        %1414 = vmatprep.subr.bf16.mxu0 0
        %1415 = vmatpush1.bf16.msra.mxu0 0
        %1416 = vmatprep.subr.bf16.mxu0 0
        %1417 = vmatpush1.bf16.msra.mxu0 0
        %1418 = vmatprep.subr.bf16.mxu0 0
        %1419 = vmatpush1.bf16.msra.mxu0 0
        %1420 = vmatprep.subr.bf16.mxu0 0
        %1421 = vmatpush1.bf16.msra.mxu0 0
        %1422 = vmatprep.subr.bf16.mxu0 0
        %1423 = vmatpush1.bf16.msra.mxu0 0
        %1424 = vmatprep.subr.bf16.mxu0 0
        %1425 = vmatpush1.bf16.msra.mxu0 0
        %1426 = vmatprep.subr.bf16.mxu0 0
        %1427 = vmatpush1.bf16.msra.mxu0 0
        %1428 = vmatprep.mubr.bf16.mxu0 0
        %1429 = vmatmul.mubr.bf16.gmra.mrb[0].mxu0 %v1373
        %v1430 = vpop.f32.mrb[0].mxu0
        %v1431 = vadd.f32 0.0, %v1430
        %v1432 = vpop.f32.mrb[0].mxu0
        %v1433 = vadd.f32 0.0, %v1432
        %v1434 = vpop.f32.mrb[0].mxu0
        %v1435 = vadd.f32 0.0, %v1434
        %v1436 = vpop.f32.mrb[0].mxu0
        %v1437 = vadd.f32 0.0, %v1436
        %1438 = vmatprep.mubr.bf16.mxu0 0
        %1439 = vmatmul.mubr.bf16.gmra.mrb[0].mxu0 %v1376
        %v1440 = vpop.f32.mrb[0].mxu0
        %v1441 = vadd.f32 0.0, %v1440
        %v1442 = vpop.f32.mrb[0].mxu0
        %v1443 = vadd.f32 0.0, %v1442
        %v1444 = vpop.f32.mrb[0].mxu0
        %v1445 = vadd.f32 0.0, %v1444
        %v1446 = vpop.f32.mrb[0].mxu0
        %v1447 = vadd.f32 0.0, %v1446
        %1448 = vmatprep.mubr.bf16.mxu0 0
        %1449 = vmatmul.mubr.bf16.gmra.mrb[0].mxu0 %v1379
        %v1450 = vpop.f32.mrb[0].mxu0
        %v1451 = vadd.f32 0.0, %v1450
        %v1452 = vpop.f32.mrb[0].mxu0
        %v1453 = vadd.f32 0.0, %v1452
        %v1454 = vpop.f32.mrb[0].mxu0
        %v1455 = vadd.f32 0.0, %v1454
        %v1456 = vpop.f32.mrb[0].mxu0
        %v1457 = vadd.f32 0.0, %v1456
        %1458 = vmatprep.mubr.bf16.mxu0 0
        %1459 = vmatmul.mubr.bf16.gmra.mrb[0].mxu0 %v1382
        %v1460 = vpop.f32.mrb[0].mxu0
        %v1461 = vadd.f32 0.0, %v1460
        %v1462 = vpop.f32.mrb[0].mxu0
        %v1463 = vadd.f32 0.0, %v1462
        %v1464 = vpop.f32.mrb[0].mxu0
        %v1465 = vadd.f32 0.0, %v1464
        %v1466 = vpop.f32.mrb[0].mxu0
        %v1467 = vadd.f32 0.0, %v1466
        %1468 = vmatprep.mubr.bf16.mxu0 0
        %1469 = vmatmul.mubr.bf16.gmra.mrb[0].mxu0 %v1385
        %v1470 = vpop.f32.mrb[0].mxu0
        %v1471 = vadd.f32 0.0, %v1470
        %v1472 = vpop.f32.mrb[0].mxu0
        %v1473 = vadd.f32 0.0, %v1472
        %v1474 = vpop.f32.mrb[0].mxu0
        %v1475 = vadd.f32 0.0, %v1474
        %v1476 = vpop.f32.mrb[0].mxu0
        %v1477 = vadd.f32 0.0, %v1476
        %1478 = vmatprep.mubr.bf16.mxu0 0
        %1479 = vmatmul.mubr.bf16.gmra.mrb[0].mxu0 %v1388
        %v1480 = vpop.f32.mrb[0].mxu0
        %v1481 = vadd.f32 0.0, %v1480
        %v1482 = vpop.f32.mrb[0].mxu0
        %v1483 = vadd.f32 0.0, %v1482
        %v1484 = vpop.f32.mrb[0].mxu0
        %v1485 = vadd.f32 0.0, %v1484
        %v1486 = vpop.f32.mrb[0].mxu0
        %v1487 = vadd.f32 0.0, %v1486
        %1488 = vmatprep.mubr.bf16.mxu0 0
        %1489 = vmatmul.mubr.bf16.gmra.mrb[0].mxu0 %v1391
        %v1490 = vpop.f32.mrb[0].mxu0
        %v1491 = vadd.f32 0.0, %v1490
        %v1492 = vpop.f32.mrb[0].mxu0
        %v1493 = vadd.f32 0.0, %v1492
        %v1494 = vpop.f32.mrb[0].mxu0
        %v1495 = vadd.f32 0.0, %v1494
        %v1496 = vpop.f32.mrb[0].mxu0
        %v1497 = vadd.f32 0.0, %v1496
        %1498 = vmatprep.mubr.bf16.mxu0 0
        %1499 = vmatmul.mubr.bf16.gmra.mrb[0].mxu0 %v1394
        %v1500 = vpop.f32.mrb[0].mxu0
        %v1501 = vadd.f32 0.0, %v1500
        %v1502 = vpop.f32.mrb[0].mxu0
        %v1503 = vadd.f32 0.0, %v1502
        %v1504 = vpop.f32.mrb[0].mxu0
        %v1505 = vadd.f32 0.0, %v1504
        %v1506 = vpop.f32.mrb[0].mxu0
        %v1507 = vadd.f32 0.0, %v1506
        %1508 = vdwg.mxu0
        %v1509 = vpack.c.bf16 %v1234, %v1230
        %v1510 = vpack.c.bf16 %v1236, %v1232
        %v1511 = vpack.c.bf16 %v1244, %v1240
        %v1512 = vpack.c.bf16 %v1246, %v1242
        %v1513 = vpack.c.bf16 %v1254, %v1250
        %v1514 = vpack.c.bf16 %v1256, %v1252
        %v1515 = vpack.c.bf16 %v1264, %v1260
        %v1516 = vpack.c.bf16 %v1266, %v1262
        %1517 = vst [vmem:[#allocation2] sm:$0xff] %v1509
        %1518 = vst [vmem:[#allocation2 + $0x8] sm:$0xff] %v1510
        %1519 = vst [vmem:[#allocation2 + $0x10] sm:$0xff] %v1511
        %1520 = vst [vmem:[#allocation2 + $0x18] sm:$0xff] %v1512
        %1521 = vst [vmem:[#allocation2 + $0x20] sm:$0xff] %v1513
        %1522 = vst [vmem:[#allocation2 + $0x28] sm:$0xff] %v1514
        %1523 = vst [vmem:[#allocation2 + $0x30] sm:$0xff] %v1515
        %1524 = vst [vmem:[#allocation2 + $0x38] sm:$0xff] %v1516
        %1525 = vset.pattern.permute.xlu0 4
        %1526 = vperm.xlu0 %1525, %v429
        %v1527 = vpop.permute.xlu0 %1526
        %1529 = vset.pattern.permute.xlu0 4
        %1530 = vperm.xlu0 %1529, %v430
        %v1531 = vpop.permute.xlu0 %1530
        %1533 = vset.pattern.permute.xlu0 4
        %1534 = vperm.xlu0 %1533, %v431
        %v1535 = vpop.permute.xlu0 %1534
        %1537 = vset.pattern.permute.xlu0 4
        %1538 = vperm.xlu0 %1537, %v432
        %v1539 = vpop.permute.xlu0 %1538
        %1541 = vset.pattern.permute.xlu0 4
        %1542 = vperm.xlu0 %1541, %v433
        %v1543 = vpop.permute.xlu0 %1542
        %1545 = vset.pattern.permute.xlu0 4
        %1546 = vperm.xlu0 %1545, %v434
        %v1547 = vpop.permute.xlu0 %1546
        %1549 = vset.pattern.permute.xlu0 4
        %1550 = vperm.xlu0 %1549, %v435
        %v1551 = vpop.permute.xlu0 %1550
        %1553 = vset.pattern.permute.xlu0 4
        %1554 = vperm.xlu0 %1553, %v436
        %v1555 = vpop.permute.xlu0 %1554
        %v1557 = vadd.f32 %v1431, %v1527
        %v1558 = vadd.f32 %v1433, %v1527
        %v1559 = vadd.f32 %v1435, %v1531
        %v1560 = vadd.f32 %v1437, %v1531
        %v1561 = vadd.f32 %v1441, %v1535
        %v1562 = vadd.f32 %v1443, %v1535
        %v1563 = vadd.f32 %v1445, %v1539
        %v1564 = vadd.f32 %v1447, %v1539
        %v1565 = vadd.f32 %v1451, %v1543
        %v1566 = vadd.f32 %v1453, %v1543
        %v1567 = vadd.f32 %v1455, %v1547
        %v1568 = vadd.f32 %v1457, %v1547
        %v1569 = vadd.f32 %v1461, %v1551
        %v1570 = vadd.f32 %v1463, %v1551
        %v1571 = vadd.f32 %v1465, %v1555
        %v1572 = vadd.f32 %v1467, %v1555
        %v1573 = vpack.c.bf16 %v1559, %v1557
        %v1574 = vpack.c.bf16 %v1560, %v1558
        %v1575 = vpack.c.bf16 %v1563, %v1561
        %v1576 = vpack.c.bf16 %v1564, %v1562
        %v1577 = vpack.c.bf16 %v1567, %v1565
        %v1578 = vpack.c.bf16 %v1568, %v1566
        %v1579 = vpack.c.bf16 %v1571, %v1569
        %v1580 = vpack.c.bf16 %v1572, %v1570
        %1581 = vst [vmem:[#allocation2 + $0x40] sm:$0xff] %v1573
        %1582 = vst [vmem:[#allocation2 + $0x48] sm:$0xff] %v1574
        %1583 = vst [vmem:[#allocation2 + $0x50] sm:$0xff] %v1575
        %1584 = vst [vmem:[#allocation2 + $0x58] sm:$0xff] %v1576
        %1585 = vst [vmem:[#allocation2 + $0x60] sm:$0xff] %v1577
        %1586 = vst [vmem:[#allocation2 + $0x68] sm:$0xff] %v1578
        %1587 = vst [vmem:[#allocation2 + $0x70] sm:$0xff] %v1579
        %1588 = vst [vmem:[#allocation2 + $0x78] sm:$0xff] %v1580
        %1589 = vset.pattern.permute.xlu0 5
        %1590 = vperm.xlu0 %1589, %v429
        %v1591 = vpop.permute.xlu0 %1590
        %1593 = vset.pattern.permute.xlu0 5
        %1594 = vperm.xlu0 %1593, %v430
        %v1595 = vpop.permute.xlu0 %1594
        %1597 = vset.pattern.permute.xlu0 5
        %1598 = vperm.xlu0 %1597, %v431
        %v1599 = vpop.permute.xlu0 %1598
        %1601 = vset.pattern.permute.xlu0 5
        %1602 = vperm.xlu0 %1601, %v432
        %v1603 = vpop.permute.xlu0 %1602
        %1605 = vset.pattern.permute.xlu0 5
        %1606 = vperm.xlu0 %1605, %v433
        %v1607 = vpop.permute.xlu0 %1606
        %1609 = vset.pattern.permute.xlu0 5
        %1610 = vperm.xlu0 %1609, %v434
        %v1611 = vpop.permute.xlu0 %1610
        %1613 = vset.pattern.permute.xlu0 5
        %1614 = vperm.xlu0 %1613, %v435
        %v1615 = vpop.permute.xlu0 %1614
        %1617 = vset.pattern.permute.xlu0 5
        %1618 = vperm.xlu0 %1617, %v436
        %v1619 = vpop.permute.xlu0 %1618
        %v1621 = vadd.f32 %v1471, %v1591
        %v1622 = vadd.f32 %v1473, %v1591
        %v1623 = vadd.f32 %v1475, %v1595
        %v1624 = vadd.f32 %v1477, %v1595
        %v1625 = vadd.f32 %v1481, %v1599
        %v1626 = vadd.f32 %v1483, %v1599
        %v1627 = vadd.f32 %v1485, %v1603
        %v1628 = vadd.f32 %v1487, %v1603
        %v1629 = vadd.f32 %v1491, %v1607
        %v1630 = vadd.f32 %v1493, %v1607
        %v1631 = vadd.f32 %v1495, %v1611
        %v1632 = vadd.f32 %v1497, %v1611
        %v1633 = vadd.f32 %v1501, %v1615
        %v1634 = vadd.f32 %v1503, %v1615
        %v1635 = vadd.f32 %v1505, %v1619
        %v1636 = vadd.f32 %v1507, %v1619
        %v1637 = vpack.c.bf16 %v1623, %v1621
        %v1638 = vpack.c.bf16 %v1624, %v1622
        %v1639 = vpack.c.bf16 %v1627, %v1625
        %v1640 = vpack.c.bf16 %v1628, %v1626
        %v1641 = vpack.c.bf16 %v1631, %v1629
        %v1642 = vpack.c.bf16 %v1632, %v1630
        %v1643 = vpack.c.bf16 %v1635, %v1633
        %v1644 = vpack.c.bf16 %v1636, %v1634
        %1645 = vst [vmem:[#allocation2 + $0x80] sm:$0xff] %v1637
        %1646 = vst [vmem:[#allocation2 + $0x88] sm:$0xff] %v1638
        %1647 = vst [vmem:[#allocation2 + $0x90] sm:$0xff] %v1639
        %1648 = vst [vmem:[#allocation2 + $0x98] sm:$0xff] %v1640
        %1649 = vst [vmem:[#allocation2 + $0xa0] sm:$0xff] %v1641
        %1650 = vst [vmem:[#allocation2 + $0xa8] sm:$0xff] %v1642
        %1651 = vst [vmem:[#allocation2 + $0xb0] sm:$0xff] %v1643
        %1652 = vst [vmem:[#allocation2 + $0xb8] sm:$0xff] %v1644
        %v1653 = vld [vmem:[#allocation2] sm:$0xff]
        %v1654 = vld [vmem:[#allocation2 + $0x8] sm:$0xff]
        %v1655 = vld [vmem:[#allocation2 + $0x10] sm:$0xff]
        %v1656 = vld [vmem:[#allocation2 + $0x18] sm:$0xff]
        %v1657 = vld [vmem:[#allocation2 + $0x20] sm:$0xff]
        %v1658 = vld [vmem:[#allocation2 + $0x28] sm:$0xff]
        %1659 = vxpose.xlu0.c.b16.start [1/8] %v1655, 128
        %1660 = vxpose.xlu0.c.b16.cont [2/8] 0, 128
        %1661 = vxpose.xlu0.c.b16.cont [3/8] 0, 128
        %1662 = vxpose.xlu0.c.b16.cont [4/8] 0, 128
        %1663 = vxpose.xlu0.c.b16.cont [5/8] 0, 128
        %1664 = vxpose.xlu0.c.b16.cont [6/8] 0, 128
        %1665 = vxpose.xlu0.c.b16.cont [7/8] 0, 128
        %1666 = vxpose.xlu0.c.b16.end [8/8] 0, 128
        %v1667 = vpop.trf.xlu0
        %v1668 = vpop.trf.xlu0
        %v1669 = vpop.trf.xlu0
        %v1670 = vpop.trf.xlu0
        %v1671 = vpop.trf.xlu0
        %v1672 = vpop.trf.xlu0
        %v1673 = vpop.trf.xlu0
        %v1674 = vpop.trf.xlu0
        %1675 = vxpose.xlu0.c.b16.start [1/8] %v1656, 128
        %1676 = vxpose.xlu0.c.b16.cont [2/8] 0, 128
        %1677 = vxpose.xlu0.c.b16.cont [3/8] 0, 128
        %1678 = vxpose.xlu0.c.b16.cont [4/8] 0, 128
        %1679 = vxpose.xlu0.c.b16.cont [5/8] 0, 128
        %1680 = vxpose.xlu0.c.b16.cont [6/8] 0, 128
        %1681 = vxpose.xlu0.c.b16.cont [7/8] 0, 128
        %1682 = vxpose.xlu0.c.b16.end [8/8] 0, 128
        %v1683 = vpop.trf.xlu0
        %v1684 = vpop.trf.xlu0
        %v1685 = vpop.trf.xlu0
        %v1686 = vpop.trf.xlu0
        %v1687 = vpop.trf.xlu0
        %v1688 = vpop.trf.xlu0
        %v1689 = vpop.trf.xlu0
        %v1690 = vpop.trf.xlu0
        %vm1691 = vcmask 130048
        %v1693 = vsel %vm1691, %v1667, 0
        %v1696 = vsel %vm1691, %v1668, 0
        %v1699 = vsel %vm1691, %v1669, 0
        %v1702 = vsel %vm1691, %v1670, 0
        %v1705 = vsel %vm1691, %v1671, 0
        %v1708 = vsel %vm1691, %v1672, 0
        %v1711 = vsel %vm1691, %v1673, 0
        %v1714 = vsel %vm1691, %v1674, 0
        %v1717 = vsel %vm1691, %v1683, 0
        %v1720 = vsel %vm1691, %v1684, 0
        %v1723 = vsel %vm1691, %v1685, 0
        %v1726 = vsel %vm1691, %v1686, 0
        %v1729 = vsel %vm1691, %v1687, 0
        %v1732 = vsel %vm1691, %v1688, 0
        %v1735 = vsel %vm1691, %v1689, 0
        %v1738 = vsel %vm1691, %v1690, 0
        %1740 = vmatprep.subr.bf16.mxu0 %v1654
        %1741 = vmatpush1.bf16.msra.mxu0 %v1653
        %1742 = vmatprep.subr.bf16.mxu0 0
        %1743 = vmatpush1.bf16.msra.mxu0 0
        %1744 = vmatprep.subr.bf16.mxu0 0
        %1745 = vmatpush1.bf16.msra.mxu0 0
        %1746 = vmatprep.subr.bf16.mxu0 0
        %1747 = vmatpush1.bf16.msra.mxu0 0
        %1748 = vmatprep.subr.bf16.mxu0 0
        %1749 = vmatpush1.bf16.msra.mxu0 0
        %1750 = vmatprep.subr.bf16.mxu0 0
        %1751 = vmatpush1.bf16.msra.mxu0 0
        %1752 = vmatprep.subr.bf16.mxu0 0
        %1753 = vmatpush1.bf16.msra.mxu0 0
        %1754 = vmatprep.subr.bf16.mxu0 0
        %1755 = vmatpush1.bf16.msra.mxu0 0
        %1756 = vmatprep.subr.bf16.mxu0 0
        %1757 = vmatpush1.bf16.msra.mxu0 0
        %1758 = vmatprep.subr.bf16.mxu0 0
        %1759 = vmatpush1.bf16.msra.mxu0 0
        %1760 = vmatprep.subr.bf16.mxu0 0
        %1761 = vmatpush1.bf16.msra.mxu0 0
        %1762 = vmatprep.subr.bf16.mxu0 0
        %1763 = vmatpush1.bf16.msra.mxu0 0
        %1764 = vmatprep.subr.bf16.mxu0 0
        %1765 = vmatpush1.bf16.msra.mxu0 0
        %1766 = vmatprep.subr.bf16.mxu0 0
        %1767 = vmatpush1.bf16.msra.mxu0 0
        %1768 = vmatprep.subr.bf16.mxu0 0
        %1769 = vmatpush1.bf16.msra.mxu0 0
        %1770 = vmatprep.subr.bf16.mxu0 0
        %1771 = vmatpush1.bf16.msra.mxu0 0
        %1772 = vmatprep.mubr.bf16.mxu0 0
        %1773 = vmatmul.mubr.bf16.gmra.mrb[0].mxu0 %v1693
        %v1774 = vpop.f32.mrb[0].mxu0
        %v1775 = vadd.f32 0.0, %v1774
        %v1776 = vpop.f32.mrb[0].mxu0
        %v1777 = vadd.f32 0.0, %v1776
        %v1778 = vpop.f32.mrb[0].mxu0
        %v1779 = vadd.f32 0.0, %v1778
        %v1780 = vpop.f32.mrb[0].mxu0
        %v1781 = vadd.f32 0.0, %v1780
        %1782 = vmatprep.mubr.bf16.mxu0 0
        %1783 = vmatmul.mubr.bf16.gmra.mrb[0].mxu0 %v1696
        %v1784 = vpop.f32.mrb[0].mxu0
        %v1785 = vadd.f32 0.0, %v1784
        %v1786 = vpop.f32.mrb[0].mxu0
        %v1787 = vadd.f32 0.0, %v1786
        %v1788 = vpop.f32.mrb[0].mxu0
        %v1789 = vadd.f32 0.0, %v1788
        %v1790 = vpop.f32.mrb[0].mxu0
        %v1791 = vadd.f32 0.0, %v1790
        %1792 = vmatprep.mubr.bf16.mxu0 0
        %1793 = vmatmul.mubr.bf16.gmra.mrb[0].mxu0 %v1699
        %v1794 = vpop.f32.mrb[0].mxu0
        %v1795 = vadd.f32 0.0, %v1794
        %v1796 = vpop.f32.mrb[0].mxu0
        %v1797 = vadd.f32 0.0, %v1796
        %v1798 = vpop.f32.mrb[0].mxu0
        %v1799 = vadd.f32 0.0, %v1798
        %v1800 = vpop.f32.mrb[0].mxu0
        %v1801 = vadd.f32 0.0, %v1800
        %1802 = vmatprep.mubr.bf16.mxu0 0
        %1803 = vmatmul.mubr.bf16.gmra.mrb[0].mxu0 %v1702
        %v1804 = vpop.f32.mrb[0].mxu0
        %v1805 = vadd.f32 0.0, %v1804
        %v1806 = vpop.f32.mrb[0].mxu0
        %v1807 = vadd.f32 0.0, %v1806
        %v1808 = vpop.f32.mrb[0].mxu0
        %v1809 = vadd.f32 0.0, %v1808
        %v1810 = vpop.f32.mrb[0].mxu0
        %v1811 = vadd.f32 0.0, %v1810
        %1812 = vmatprep.mubr.bf16.mxu0 0
        %1813 = vmatmul.mubr.bf16.gmra.mrb[0].mxu0 %v1705
        %v1814 = vpop.f32.mrb[0].mxu0
        %v1815 = vadd.f32 0.0, %v1814
        %v1816 = vpop.f32.mrb[0].mxu0
        %v1817 = vadd.f32 0.0, %v1816
        %v1818 = vpop.f32.mrb[0].mxu0
        %v1819 = vadd.f32 0.0, %v1818
        %v1820 = vpop.f32.mrb[0].mxu0
        %v1821 = vadd.f32 0.0, %v1820
        %1822 = vmatprep.mubr.bf16.mxu0 0
        %1823 = vmatmul.mubr.bf16.gmra.mrb[0].mxu0 %v1708
        %v1824 = vpop.f32.mrb[0].mxu0
        %v1825 = vadd.f32 0.0, %v1824
        %v1826 = vpop.f32.mrb[0].mxu0
        %v1827 = vadd.f32 0.0, %v1826
        %v1828 = vpop.f32.mrb[0].mxu0
        %v1829 = vadd.f32 0.0, %v1828
        %v1830 = vpop.f32.mrb[0].mxu0
        %v1831 = vadd.f32 0.0, %v1830
        %1832 = vmatprep.mubr.bf16.mxu0 0
        %1833 = vmatmul.mubr.bf16.gmra.mrb[0].mxu0 %v1711
        %v1834 = vpop.f32.mrb[0].mxu0
        %v1835 = vadd.f32 0.0, %v1834
        %v1836 = vpop.f32.mrb[0].mxu0
        %v1837 = vadd.f32 0.0, %v1836
        %v1838 = vpop.f32.mrb[0].mxu0
        %v1839 = vadd.f32 0.0, %v1838
        %v1840 = vpop.f32.mrb[0].mxu0
        %v1841 = vadd.f32 0.0, %v1840
        %1842 = vmatprep.mubr.bf16.mxu0 0
        %1843 = vmatmul.mubr.bf16.gmra.mrb[0].mxu0 %v1714
        %v1844 = vpop.f32.mrb[0].mxu0
        %v1845 = vadd.f32 0.0, %v1844
        %v1846 = vpop.f32.mrb[0].mxu0
        %v1847 = vadd.f32 0.0, %v1846
        %v1848 = vpop.f32.mrb[0].mxu0
        %v1849 = vadd.f32 0.0, %v1848
        %v1850 = vpop.f32.mrb[0].mxu0
        %v1851 = vadd.f32 0.0, %v1850
        %1852 = vmatprep.mubr.bf16.mxu0 0
        %1853 = vmatmul.mubr.bf16.gmra.mrb[0].mxu0 %v1717
        %v1854 = vpop.f32.mrb[0].mxu0
        %v1855 = vadd.f32 0.0, %v1854
        %v1856 = vpop.f32.mrb[0].mxu0
        %v1857 = vadd.f32 0.0, %v1856
        %v1858 = vpop.f32.mrb[0].mxu0
        %v1859 = vadd.f32 0.0, %v1858
        %v1860 = vpop.f32.mrb[0].mxu0
        %v1861 = vadd.f32 0.0, %v1860
        %1862 = vmatprep.mubr.bf16.mxu0 0
        %1863 = vmatmul.mubr.bf16.gmra.mrb[0].mxu0 %v1720
        %v1864 = vpop.f32.mrb[0].mxu0
        %v1865 = vadd.f32 0.0, %v1864
        %v1866 = vpop.f32.mrb[0].mxu0
        %v1867 = vadd.f32 0.0, %v1866
        %v1868 = vpop.f32.mrb[0].mxu0
        %v1869 = vadd.f32 0.0, %v1868
        %v1870 = vpop.f32.mrb[0].mxu0
        %v1871 = vadd.f32 0.0, %v1870
        %1872 = vmatprep.mubr.bf16.mxu0 0
        %1873 = vmatmul.mubr.bf16.gmra.mrb[0].mxu0 %v1723
        %v1874 = vpop.f32.mrb[0].mxu0
        %v1875 = vadd.f32 0.0, %v1874
        %v1876 = vpop.f32.mrb[0].mxu0
        %v1877 = vadd.f32 0.0, %v1876
        %v1878 = vpop.f32.mrb[0].mxu0
        %v1879 = vadd.f32 0.0, %v1878
        %v1880 = vpop.f32.mrb[0].mxu0
        %v1881 = vadd.f32 0.0, %v1880
        %1882 = vmatprep.mubr.bf16.mxu0 0
        %1883 = vmatmul.mubr.bf16.gmra.mrb[0].mxu0 %v1726
        %v1884 = vpop.f32.mrb[0].mxu0
        %v1885 = vadd.f32 0.0, %v1884
        %v1886 = vpop.f32.mrb[0].mxu0
        %v1887 = vadd.f32 0.0, %v1886
        %v1888 = vpop.f32.mrb[0].mxu0
        %v1889 = vadd.f32 0.0, %v1888
        %v1890 = vpop.f32.mrb[0].mxu0
        %v1891 = vadd.f32 0.0, %v1890
        %1892 = vmatprep.mubr.bf16.mxu0 0
        %1893 = vmatmul.mubr.bf16.gmra.mrb[0].mxu0 %v1729
        %v1894 = vpop.f32.mrb[0].mxu0
        %v1895 = vadd.f32 0.0, %v1894
        %v1896 = vpop.f32.mrb[0].mxu0
        %v1897 = vadd.f32 0.0, %v1896
        %v1898 = vpop.f32.mrb[0].mxu0
        %v1899 = vadd.f32 0.0, %v1898
        %v1900 = vpop.f32.mrb[0].mxu0
        %v1901 = vadd.f32 0.0, %v1900
        %1902 = vmatprep.mubr.bf16.mxu0 0
        %1903 = vmatmul.mubr.bf16.gmra.mrb[0].mxu0 %v1732
        %v1904 = vpop.f32.mrb[0].mxu0
        %v1905 = vadd.f32 0.0, %v1904
        %v1906 = vpop.f32.mrb[0].mxu0
        %v1907 = vadd.f32 0.0, %v1906
        %v1908 = vpop.f32.mrb[0].mxu0
        %v1909 = vadd.f32 0.0, %v1908
        %v1910 = vpop.f32.mrb[0].mxu0
        %v1911 = vadd.f32 0.0, %v1910
        %1912 = vmatprep.mubr.bf16.mxu0 0
        %1913 = vmatmul.mubr.bf16.gmra.mrb[0].mxu0 %v1735
        %v1914 = vpop.f32.mrb[0].mxu0
        %v1915 = vadd.f32 0.0, %v1914
        %v1916 = vpop.f32.mrb[0].mxu0
        %v1917 = vadd.f32 0.0, %v1916
        %v1918 = vpop.f32.mrb[0].mxu0
        %v1919 = vadd.f32 0.0, %v1918
        %v1920 = vpop.f32.mrb[0].mxu0
        %v1921 = vadd.f32 0.0, %v1920
        %1922 = vmatprep.mubr.bf16.mxu0 0
        %1923 = vmatmul.mubr.bf16.gmra.mrb[0].mxu0 %v1738
        %v1924 = vpop.f32.mrb[0].mxu0
        %v1925 = vadd.f32 0.0, %v1924
        %v1926 = vpop.f32.mrb[0].mxu0
        %v1927 = vadd.f32 0.0, %v1926
        %v1928 = vpop.f32.mrb[0].mxu0
        %v1929 = vadd.f32 0.0, %v1928
        %v1930 = vpop.f32.mrb[0].mxu0
        %v1931 = vadd.f32 0.0, %v1930
        %1932 = vdwg.mxu0
        %v1933 = vmul.f32 %v1775, 0.25
        %v1934 = vmul.f32 %v1777, 0.25
        %v1935 = vmul.f32 %v1779, 0.25
        %v1936 = vmul.f32 %v1781, 0.25
        %v1937 = vmul.f32 %v1785, 0.25
        %v1938 = vmul.f32 %v1787, 0.25
        %v1939 = vmul.f32 %v1789, 0.25
        %v1940 = vmul.f32 %v1791, 0.25
        %v1941 = vmul.f32 %v1795, 0.25
        %v1942 = vmul.f32 %v1797, 0.25
        %v1943 = vmul.f32 %v1799, 0.25
        %v1944 = vmul.f32 %v1801, 0.25
        %v1945 = vmul.f32 %v1805, 0.25
        %v1946 = vmul.f32 %v1807, 0.25
        %v1947 = vmul.f32 %v1809, 0.25
        %v1948 = vmul.f32 %v1811, 0.25
        %v1949 = vmul.f32 %v1815, 0.25
        %v1950 = vmul.f32 %v1817, 0.25
        %v1951 = vmul.f32 %v1819, 0.25
        %v1952 = vmul.f32 %v1821, 0.25
        %v1953 = vmul.f32 %v1825, 0.25
        %v1954 = vmul.f32 %v1827, 0.25
        %v1955 = vmul.f32 %v1829, 0.25
        %v1956 = vmul.f32 %v1831, 0.25
        %v1957 = vmul.f32 %v1835, 0.25
        %v1958 = vmul.f32 %v1837, 0.25
        %v1959 = vmul.f32 %v1839, 0.25
        %v1960 = vmul.f32 %v1841, 0.25
        %v1961 = vmul.f32 %v1845, 0.25
        %v1962 = vmul.f32 %v1847, 0.25
        %v1963 = vmul.f32 %v1849, 0.25
        %v1964 = vmul.f32 %v1851, 0.25
        %v1965 = vmul.f32 %v1855, 0.25
        %v1966 = vmul.f32 %v1857, 0.25
        %v1967 = vmul.f32 %v1859, 0.25
        %v1968 = vmul.f32 %v1861, 0.25
        %v1969 = vmul.f32 %v1865, 0.25
        %v1970 = vmul.f32 %v1867, 0.25
        %v1971 = vmul.f32 %v1869, 0.25
        %v1972 = vmul.f32 %v1871, 0.25
        %v1973 = vmul.f32 %v1875, 0.25
        %v1974 = vmul.f32 %v1877, 0.25
        %v1975 = vmul.f32 %v1879, 0.25
        %v1976 = vmul.f32 %v1881, 0.25
        %v1977 = vmul.f32 %v1885, 0.25
        %v1978 = vmul.f32 %v1887, 0.25
        %v1979 = vmul.f32 %v1889, 0.25
        %v1980 = vmul.f32 %v1891, 0.25
        %v1981 = vmul.f32 %v1895, 0.25
        %v1982 = vmul.f32 %v1897, 0.25
        %v1983 = vmul.f32 %v1899, 0.25
        %v1984 = vmul.f32 %v1901, 0.25
        %v1985 = vmul.f32 %v1905, 0.25
        %v1986 = vmul.f32 %v1907, 0.25
        %v1987 = vmul.f32 %v1909, 0.25
        %v1988 = vmul.f32 %v1911, 0.25
        %v1989 = vmul.f32 %v1915, 0.25
        %v1990 = vmul.f32 %v1917, 0.25
        %v1991 = vmul.f32 %v1919, 0.25
        %v1992 = vmul.f32 %v1921, 0.25
        %v1993 = vmul.f32 %v1925, 0.25
        %v1994 = vmul.f32 %v1927, 0.25
        %v1995 = vmul.f32 %v1929, 0.25
        %v1996 = vmul.f32 %v1931, 0.25
        %v1997 = vmax.f32 %v1933, %v1937
        %v1998 = vmax.f32 %v1935, %v1939
        %v1999 = vmax.f32 %v1997, %v1941
        %v2000 = vmax.f32 %v1998, %v1943
        %v2001 = vmax.f32 %v1999, %v1945
        %v2002 = vmax.f32 %v2000, %v1947
        %v2003 = vmax.f32 %v2001, %v1949
        %v2004 = vmax.f32 %v2002, %v1951
        %v2005 = vmax.f32 %v2003, %v1953
        %v2006 = vmax.f32 %v2004, %v1955
        %v2007 = vmax.f32 %v2005, %v1957
        %v2008 = vmax.f32 %v2006, %v1959
        %v2009 = vmax.f32 %v2007, %v1961
        %v2010 = vmax.f32 %v2008, %v1963
        %v2011 = vmax.f32 %v2009, %v1965
        %v2012 = vmax.f32 %v2010, %v1967
        %v2013 = vmax.f32 %v2011, %v1969
        %v2014 = vmax.f32 %v2012, %v1971
        %v2015 = vmax.f32 %v2013, %v1973
        %v2016 = vmax.f32 %v2014, %v1975
        %v2017 = vmax.f32 %v2015, %v1977
        %v2018 = vmax.f32 %v2016, %v1979
        %v2019 = vmax.f32 %v2017, %v1981
        %v2020 = vmax.f32 %v2018, %v1983
        %v2021 = vmax.f32 %v2019, %v1985
        %v2022 = vmax.f32 %v2020, %v1987
        %v2023 = vmax.f32 %v2021, %v1989
        %v2024 = vmax.f32 %v2022, %v1991
        %v2025 = vmax.f32 %v2023, %v1993
        %v2026 = vmax.f32 %v2024, %v1995
        %v2027 = vmax.f32 %v2025, %v2026
        %v2028 = vrot.slane %v2027, 4
        %v2029 = vmax.f32 %v2027, %v2028
        %v2030 = vrot.slane %v2029, 2
        %v2031 = vmax.f32 %v2029, %v2030
        %v2032 = vrot.slane %v2031, 1
        %v2033 = vmax.f32 %v2031, %v2032
        %v2034 = vmax.f32 %v1934, %v1938
        %v2035 = vmax.f32 %v1936, %v1940
        %v2036 = vmax.f32 %v2034, %v1942
        %v2037 = vmax.f32 %v2035, %v1944
        %v2038 = vmax.f32 %v2036, %v1946
        %v2039 = vmax.f32 %v2037, %v1948
        %v2040 = vmax.f32 %v2038, %v1950
        %v2041 = vmax.f32 %v2039, %v1952
        %v2042 = vmax.f32 %v2040, %v1954
        %v2043 = vmax.f32 %v2041, %v1956
        %v2044 = vmax.f32 %v2042, %v1958
        %v2045 = vmax.f32 %v2043, %v1960
        %v2046 = vmax.f32 %v2044, %v1962
        %v2047 = vmax.f32 %v2045, %v1964
        %v2048 = vmax.f32 %v2046, %v1966
        %v2049 = vmax.f32 %v2047, %v1968
        %v2050 = vmax.f32 %v2048, %v1970
        %v2051 = vmax.f32 %v2049, %v1972
        %v2052 = vmax.f32 %v2050, %v1974
        %v2053 = vmax.f32 %v2051, %v1976
        %v2054 = vmax.f32 %v2052, %v1978
        %v2055 = vmax.f32 %v2053, %v1980
        %v2056 = vmax.f32 %v2054, %v1982
        %v2057 = vmax.f32 %v2055, %v1984
        %v2058 = vmax.f32 %v2056, %v1986
        %v2059 = vmax.f32 %v2057, %v1988
        %v2060 = vmax.f32 %v2058, %v1990
        %v2061 = vmax.f32 %v2059, %v1992
        %v2062 = vmax.f32 %v2060, %v1994
        %v2063 = vmax.f32 %v2061, %v1996
        %v2064 = vmax.f32 %v2062, %v2063
        %v2065 = vrot.slane %v2064, 4
        %v2066 = vmax.f32 %v2064, %v2065
        %v2067 = vrot.slane %v2066, 2
        %v2068 = vmax.f32 %v2066, %v2067
        %v2069 = vrot.slane %v2068, 1
        %v2070 = vmax.f32 %v2068, %v2069
        %v2071 = vsub.f32 %v1933, %v2033
        %v2072 = vsub.f32 %v1934, %v2070
        %v2073 = vsub.f32 %v1935, %v2033
        %v2074 = vsub.f32 %v1936, %v2070
        %v2075 = vsub.f32 %v1937, %v2033
        %v2076 = vsub.f32 %v1938, %v2070
        %v2077 = vsub.f32 %v1939, %v2033
        %v2078 = vsub.f32 %v1940, %v2070
        %v2079 = vsub.f32 %v1941, %v2033
        %v2080 = vsub.f32 %v1942, %v2070
        %v2081 = vsub.f32 %v1943, %v2033
        %v2082 = vsub.f32 %v1944, %v2070
        %v2083 = vsub.f32 %v1945, %v2033
        %v2084 = vsub.f32 %v1946, %v2070
        %v2085 = vsub.f32 %v1947, %v2033
        %v2086 = vsub.f32 %v1948, %v2070
        %v2087 = vsub.f32 %v1949, %v2033
        %v2088 = vsub.f32 %v1950, %v2070
        %v2089 = vsub.f32 %v1951, %v2033
        %v2090 = vsub.f32 %v1952, %v2070
        %v2091 = vsub.f32 %v1953, %v2033
        %v2092 = vsub.f32 %v1954, %v2070
        %v2093 = vsub.f32 %v1955, %v2033
        %v2094 = vsub.f32 %v1956, %v2070
        %v2095 = vsub.f32 %v1957, %v2033
        %v2096 = vsub.f32 %v1958, %v2070
        %v2097 = vsub.f32 %v1959, %v2033
        %v2098 = vsub.f32 %v1960, %v2070
        %v2099 = vsub.f32 %v1961, %v2033
        %v2100 = vsub.f32 %v1962, %v2070
        %v2101 = vsub.f32 %v1963, %v2033
        %v2102 = vsub.f32 %v1964, %v2070
        %v2103 = vsub.f32 %v1965, %v2033
        %v2104 = vsub.f32 %v1966, %v2070
        %v2105 = vsub.f32 %v1967, %v2033
        %v2106 = vsub.f32 %v1968, %v2070
        %v2107 = vsub.f32 %v1969, %v2033
        %v2108 = vsub.f32 %v1970, %v2070
        %v2109 = vsub.f32 %v1971, %v2033
        %v2110 = vsub.f32 %v1972, %v2070
        %v2111 = vsub.f32 %v1973, %v2033
        %v2112 = vsub.f32 %v1974, %v2070
        %v2113 = vsub.f32 %v1975, %v2033
        %v2114 = vsub.f32 %v1976, %v2070
        %v2115 = vsub.f32 %v1977, %v2033
        %v2116 = vsub.f32 %v1978, %v2070
        %v2117 = vsub.f32 %v1979, %v2033
        %v2118 = vsub.f32 %v1980, %v2070
        %v2119 = vsub.f32 %v1981, %v2033
        %v2120 = vsub.f32 %v1982, %v2070
        %v2121 = vsub.f32 %v1983, %v2033
        %v2122 = vsub.f32 %v1984, %v2070
        %v2123 = vsub.f32 %v1985, %v2033
        %v2124 = vsub.f32 %v1986, %v2070
        %v2125 = vsub.f32 %v1987, %v2033
        %v2126 = vsub.f32 %v1988, %v2070
        %v2127 = vsub.f32 %v1989, %v2033
        %v2128 = vsub.f32 %v1990, %v2070
        %v2129 = vsub.f32 %v1991, %v2033
        %v2130 = vsub.f32 %v1992, %v2070
        %v2131 = vsub.f32 %v1993, %v2033
        %v2132 = vsub.f32 %v1994, %v2070
        %v2133 = vsub.f32 %v1995, %v2033
        %v2134 = vsub.f32 %v1996, %v2070
        %v2135 = vpack.c.bf16 %v2073, %v2071
        %v2136 = vpack.c.bf16 %v2074, %v2072
        %v2137 = vpack.c.bf16 %v2077, %v2075
        %v2138 = vpack.c.bf16 %v2078, %v2076
        %v2139 = vpack.c.bf16 %v2081, %v2079
        %v2140 = vpack.c.bf16 %v2082, %v2080
        %v2141 = vpack.c.bf16 %v2085, %v2083
        %v2142 = vpack.c.bf16 %v2086, %v2084
        %v2143 = vpack.c.bf16 %v2089, %v2087
        %v2144 = vpack.c.bf16 %v2090, %v2088
        %v2145 = vpack.c.bf16 %v2093, %v2091
        %v2146 = vpack.c.bf16 %v2094, %v2092
        %v2147 = vpack.c.bf16 %v2097, %v2095
        %v2148 = vpack.c.bf16 %v2098, %v2096
        %v2149 = vpack.c.bf16 %v2101, %v2099
        %v2150 = vpack.c.bf16 %v2102, %v2100
        %v2151 = vpack.c.bf16 %v2105, %v2103
        %v2152 = vpack.c.bf16 %v2106, %v2104
        %v2153 = vpack.c.bf16 %v2109, %v2107
        %v2154 = vpack.c.bf16 %v2110, %v2108
        %v2155 = vpack.c.bf16 %v2113, %v2111
        %v2156 = vpack.c.bf16 %v2114, %v2112
        %v2157 = vpack.c.bf16 %v2117, %v2115
        %v2158 = vpack.c.bf16 %v2118, %v2116
        %v2159 = vpack.c.bf16 %v2121, %v2119
        %v2160 = vpack.c.bf16 %v2122, %v2120
        %v2161 = vpack.c.bf16 %v2125, %v2123
        %v2162 = vpack.c.bf16 %v2126, %v2124
        %v2163 = vpack.c.bf16 %v2129, %v2127
        %v2164 = vpack.c.bf16 %v2130, %v2128
        %v2165 = vpack.c.bf16 %v2133, %v2131
        %v2166 = vpack.c.bf16 %v2134, %v2132
        %v2168 = vmul.bf16 %v2135, 1069105081
        %v2169 = vpow.bf16.pop %v2168
        %v2171 = vmul.bf16 %v2136, 1069105081
        %v2172 = vpow.bf16.pop %v2171
        %v2174 = vmul.bf16 %v2137, 1069105081
        %v2175 = vpow.bf16.pop %v2174
        %v2177 = vmul.bf16 %v2138, 1069105081
        %v2178 = vpow.bf16.pop %v2177
        %v2180 = vmul.bf16 %v2139, 1069105081
        %v2181 = vpow.bf16.pop %v2180
        %v2183 = vmul.bf16 %v2140, 1069105081
        %v2184 = vpow.bf16.pop %v2183
        %v2186 = vmul.bf16 %v2141, 1069105081
        %v2187 = vpow.bf16.pop %v2186
        %v2189 = vmul.bf16 %v2142, 1069105081
        %v2190 = vpow.bf16.pop %v2189
        %v2192 = vmul.bf16 %v2143, 1069105081
        %v2193 = vpow.bf16.pop %v2192
        %v2195 = vmul.bf16 %v2144, 1069105081
        %v2196 = vpow.bf16.pop %v2195
        %v2198 = vmul.bf16 %v2145, 1069105081
        %v2199 = vpow.bf16.pop %v2198
        %v2201 = vmul.bf16 %v2146, 1069105081
        %v2202 = vpow.bf16.pop %v2201
        %v2204 = vmul.bf16 %v2147, 1069105081
        %v2205 = vpow.bf16.pop %v2204
        %v2207 = vmul.bf16 %v2148, 1069105081
        %v2208 = vpow.bf16.pop %v2207
        %v2210 = vmul.bf16 %v2149, 1069105081
        %v2211 = vpow.bf16.pop %v2210
        %v2213 = vmul.bf16 %v2150, 1069105081
        %v2214 = vpow.bf16.pop %v2213
        %v2216 = vmul.bf16 %v2151, 1069105081
        %v2217 = vpow.bf16.pop %v2216
        %v2219 = vmul.bf16 %v2152, 1069105081
        %v2220 = vpow.bf16.pop %v2219
        %v2222 = vmul.bf16 %v2153, 1069105081
        %v2223 = vpow.bf16.pop %v2222
        %v2225 = vmul.bf16 %v2154, 1069105081
        %v2226 = vpow.bf16.pop %v2225
        %v2228 = vmul.bf16 %v2155, 1069105081
        %v2229 = vpow.bf16.pop %v2228
        %v2231 = vmul.bf16 %v2156, 1069105081
        %v2232 = vpow.bf16.pop %v2231
        %v2234 = vmul.bf16 %v2157, 1069105081
        %v2235 = vpow.bf16.pop %v2234
        %v2237 = vmul.bf16 %v2158, 1069105081
        %v2238 = vpow.bf16.pop %v2237
        %v2240 = vmul.bf16 %v2159, 1069105081
        %v2241 = vpow.bf16.pop %v2240
        %v2243 = vmul.bf16 %v2160, 1069105081
        %v2244 = vpow.bf16.pop %v2243
        %v2246 = vmul.bf16 %v2161, 1069105081
        %v2247 = vpow.bf16.pop %v2246
        %v2249 = vmul.bf16 %v2162, 1069105081
        %v2250 = vpow.bf16.pop %v2249
        %v2252 = vmul.bf16 %v2163, 1069105081
        %v2253 = vpow.bf16.pop %v2252
        %v2255 = vmul.bf16 %v2164, 1069105081
        %v2256 = vpow.bf16.pop %v2255
        %v2258 = vmul.bf16 %v2165, 1069105081
        %v2259 = vpow.bf16.pop %v2258
        %v2261 = vmul.bf16 %v2166, 1069105081
        %v2262 = vpow.bf16.pop %v2261
        %2263 = vmatprep.subr.bf16.mxu0 %v2172
        %2264 = vmatpush1.bf16.msra.mxu0 %v2169
        %2265 = vmatprep.subr.bf16.mxu0 %v2178
        %2266 = vmatpush1.bf16.msra.mxu0 %v2175
        %2267 = vmatprep.subr.bf16.mxu0 %v2184
        %2268 = vmatpush1.bf16.msra.mxu0 %v2181
        %2269 = vmatprep.subr.bf16.mxu0 %v2190
        %2270 = vmatpush1.bf16.msra.mxu0 %v2187
        %2271 = vmatprep.subr.bf16.mxu0 %v2196
        %2272 = vmatpush1.bf16.msra.mxu0 %v2193
        %2273 = vmatprep.subr.bf16.mxu0 %v2202
        %2274 = vmatpush1.bf16.msra.mxu0 %v2199
        %2275 = vmatprep.subr.bf16.mxu0 %v2208
        %2276 = vmatpush1.bf16.msra.mxu0 %v2205
        %2277 = vmatprep.subr.bf16.mxu0 %v2214
        %2278 = vmatpush1.bf16.msra.mxu0 %v2211
        %2279 = vmatprep.subr.bf16.mxu0 %v2220
        %2280 = vmatpush1.bf16.msra.mxu0 %v2217
        %2281 = vmatprep.subr.bf16.mxu0 %v2226
        %2282 = vmatpush1.bf16.msra.mxu0 %v2223
        %2283 = vmatprep.subr.bf16.mxu0 %v2232
        %2284 = vmatpush1.bf16.msra.mxu0 %v2229
        %2285 = vmatprep.subr.bf16.mxu0 %v2238
        %2286 = vmatpush1.bf16.msra.mxu0 %v2235
        %2287 = vmatprep.subr.bf16.mxu0 %v2244
        %2288 = vmatpush1.bf16.msra.mxu0 %v2241
        %2289 = vmatprep.subr.bf16.mxu0 %v2250
        %2290 = vmatpush1.bf16.msra.mxu0 %v2247
        %2291 = vmatprep.subr.bf16.mxu0 %v2256
        %2292 = vmatpush1.bf16.msra.mxu0 %v2253
        %2293 = vmatprep.subr.bf16.mxu0 %v2262
        %2294 = vmatpush1.bf16.msra.mxu0 %v2259
        %2295 = vmatprep.mubr.bf16.mxu0 1065369472
        %2296 = vmatmul.mubr.bf16.gmra.mrb[0].mxu0 1065369472
        %v2297 = vpop.f32.mrb[0].mxu0
        %v2298 = vadd.f32 0.0, %v2297
        %v2299 = vpop.f32.mrb[0].mxu0
        %v2300 = vadd.f32 0.0, %v2299
        %v2301 = vpop.f32.mrb[0].mxu0
        %v2302 = vpop.f32.mrb[0].mxu0
        %2303 = vdwg.mxu0
        %2304 = vmatprep.subr.bf16.mxu0 %v2172
        %2305 = vmatpush1.bf16.msra.mxu0 %v2169
        %2306 = vmatprep.subr.bf16.mxu0 %v2178
        %2307 = vmatpush1.bf16.msra.mxu0 %v2175
        %2308 = vmatprep.subr.bf16.mxu0 %v2184
        %2309 = vmatpush1.bf16.msra.mxu0 %v2181
        %2310 = vmatprep.subr.bf16.mxu0 %v2190
        %2311 = vmatpush1.bf16.msra.mxu0 %v2187
        %2312 = vmatprep.subr.bf16.mxu0 %v2196
        %2313 = vmatpush1.bf16.msra.mxu0 %v2193
        %2314 = vmatprep.subr.bf16.mxu0 %v2202
        %2315 = vmatpush1.bf16.msra.mxu0 %v2199
        %2316 = vmatprep.subr.bf16.mxu0 %v2208
        %2317 = vmatpush1.bf16.msra.mxu0 %v2205
        %2318 = vmatprep.subr.bf16.mxu0 %v2214
        %2319 = vmatpush1.bf16.msra.mxu0 %v2211
        %2320 = vmatprep.subr.bf16.mxu0 %v2220
        %2321 = vmatpush1.bf16.msra.mxu0 %v2217
        %2322 = vmatprep.subr.bf16.mxu0 %v2226
        %2323 = vmatpush1.bf16.msra.mxu0 %v2223
        %2324 = vmatprep.subr.bf16.mxu0 %v2232
        %2325 = vmatpush1.bf16.msra.mxu0 %v2229
        %2326 = vmatprep.subr.bf16.mxu0 %v2238
        %2327 = vmatpush1.bf16.msra.mxu0 %v2235
        %2328 = vmatprep.subr.bf16.mxu0 %v2244
        %2329 = vmatpush1.bf16.msra.mxu0 %v2241
        %2330 = vmatprep.subr.bf16.mxu0 %v2250
        %2331 = vmatpush1.bf16.msra.mxu0 %v2247
        %2332 = vmatprep.subr.bf16.mxu0 %v2256
        %2333 = vmatpush1.bf16.msra.mxu0 %v2253
        %2334 = vmatprep.subr.bf16.mxu0 %v2262
        %2335 = vmatpush1.bf16.msra.mxu0 %v2259
        %2336 = vmatprep.mubr.bf16.mxu0 %v1658
        %2337 = vmatmul.mubr.bf16.gmra.mrb[0].mxu0 %v1657
        %v2338 = vpop.f32.mrb[0].mxu0
        %v2339 = vadd.f32 0.0, %v2338
        %v2340 = vpop.f32.mrb[0].mxu0
        %v2341 = vadd.f32 0.0, %v2340
        %v2342 = vpop.f32.mrb[0].mxu0
        %v2343 = vadd.f32 0.0, %v2342
        %v2344 = vpop.f32.mrb[0].mxu0
        %v2345 = vadd.f32 0.0, %v2344
        %2346 = vdwg.mxu0
        %v2347 = vrcp.pop %v2298
        %v2348 = vrcp.pop %v2300
        %v2349 = vlaneseq
        %v2350 = vshrl.u32 %v2349, 7
        %v2351 = vsub.s32 0, %v2350
        %v2352 = vrot.slane %v2347, %v2351
        %v2353 = vlaneseq
        %v2354 = vshrl.u32 %v2353, 7
        %v2355 = vsub.s32 0, %v2354
        %v2356 = vrot.slane %v2348, %v2355
        %v2357 = vmul.f32 %v2339, %v2352
        %v2358 = vmul.f32 %v2341, %v2356
        %v2359 = vmul.f32 %v2343, %v2352
        %v2360 = vmul.f32 %v2345, %v2356
        %2361 = vst [vmem:[%s405] sm:$0xff] %v2357
        %2362 = vst [vmem:[%s405 + $0x8] sm:$0xff] %v2358
        %2363 = vst [vmem:[%s405 + $0x10] sm:$0xff] %v2359
        %2364 = vst [vmem:[%s405 + $0x18] sm:$0xff] %v2360
        %v2365 = vld [vmem:[#allocation2 + $0x30] sm:$0xff]
        %v2366 = vld [vmem:[#allocation2 + $0x38] sm:$0xff]
        %v2367 = vld [vmem:[#allocation2 + $0x40] sm:$0xff]
        %v2368 = vld [vmem:[#allocation2 + $0x48] sm:$0xff]
        %v2369 = vld [vmem:[#allocation2 + $0x50] sm:$0xff]
        %v2370 = vld [vmem:[#allocation2 + $0x58] sm:$0xff]
        %2371 = vxpose.xlu0.c.b16.start [1/8] %v2367, 128
        %2372 = vxpose.xlu0.c.b16.cont [2/8] 0, 128
        %2373 = vxpose.xlu0.c.b16.cont [3/8] 0, 128
        %2374 = vxpose.xlu0.c.b16.cont [4/8] 0, 128
        %2375 = vxpose.xlu0.c.b16.cont [5/8] 0, 128
        %2376 = vxpose.xlu0.c.b16.cont [6/8] 0, 128
        %2377 = vxpose.xlu0.c.b16.cont [7/8] 0, 128
        %2378 = vxpose.xlu0.c.b16.end [8/8] 0, 128
        %v2379 = vpop.trf.xlu0
        %v2380 = vpop.trf.xlu0
        %v2381 = vpop.trf.xlu0
        %v2382 = vpop.trf.xlu0
        %v2383 = vpop.trf.xlu0
        %v2384 = vpop.trf.xlu0
        %v2385 = vpop.trf.xlu0
        %v2386 = vpop.trf.xlu0
        %2387 = vxpose.xlu0.c.b16.start [1/8] %v2368, 128
        %2388 = vxpose.xlu0.c.b16.cont [2/8] 0, 128
        %2389 = vxpose.xlu0.c.b16.cont [3/8] 0, 128
        %2390 = vxpose.xlu0.c.b16.cont [4/8] 0, 128
        %2391 = vxpose.xlu0.c.b16.cont [5/8] 0, 128
        %2392 = vxpose.xlu0.c.b16.cont [6/8] 0, 128
        %2393 = vxpose.xlu0.c.b16.cont [7/8] 0, 128
        %2394 = vxpose.xlu0.c.b16.end [8/8] 0, 128
        %v2395 = vpop.trf.xlu0
        %v2396 = vpop.trf.xlu0
        %v2397 = vpop.trf.xlu0
        %v2398 = vpop.trf.xlu0
        %v2399 = vpop.trf.xlu0
        %v2400 = vpop.trf.xlu0
        %v2401 = vpop.trf.xlu0
        %v2402 = vpop.trf.xlu0
        %v2404 = vsel %vm1691, %v2379, 0
        %v2407 = vsel %vm1691, %v2380, 0
        %v2410 = vsel %vm1691, %v2381, 0
        %v2413 = vsel %vm1691, %v2382, 0
        %v2416 = vsel %vm1691, %v2383, 0
        %v2419 = vsel %vm1691, %v2384, 0
        %v2422 = vsel %vm1691, %v2385, 0
        %v2425 = vsel %vm1691, %v2386, 0
        %v2428 = vsel %vm1691, %v2395, 0
        %v2431 = vsel %vm1691, %v2396, 0
        %v2434 = vsel %vm1691, %v2397, 0
        %v2437 = vsel %vm1691, %v2398, 0
        %v2440 = vsel %vm1691, %v2399, 0
        %v2443 = vsel %vm1691, %v2400, 0
        %v2446 = vsel %vm1691, %v2401, 0
        %v2449 = vsel %vm1691, %v2402, 0
        %2451 = vmatprep.subr.bf16.mxu0 %v2366
        %2452 = vmatpush1.bf16.msra.mxu0 %v2365
        %2453 = vmatprep.subr.bf16.mxu0 0
        %2454 = vmatpush1.bf16.msra.mxu0 0
        %2455 = vmatprep.subr.bf16.mxu0 0
        %2456 = vmatpush1.bf16.msra.mxu0 0
        %2457 = vmatprep.subr.bf16.mxu0 0
        %2458 = vmatpush1.bf16.msra.mxu0 0
        %2459 = vmatprep.subr.bf16.mxu0 0
        %2460 = vmatpush1.bf16.msra.mxu0 0
        %2461 = vmatprep.subr.bf16.mxu0 0
        %2462 = vmatpush1.bf16.msra.mxu0 0
        %2463 = vmatprep.subr.bf16.mxu0 0
        %2464 = vmatpush1.bf16.msra.mxu0 0
        %2465 = vmatprep.subr.bf16.mxu0 0
        %2466 = vmatpush1.bf16.msra.mxu0 0
        %2467 = vmatprep.subr.bf16.mxu0 0
        %2468 = vmatpush1.bf16.msra.mxu0 0
        %2469 = vmatprep.subr.bf16.mxu0 0
        %2470 = vmatpush1.bf16.msra.mxu0 0
        %2471 = vmatprep.subr.bf16.mxu0 0
        %2472 = vmatpush1.bf16.msra.mxu0 0
        %2473 = vmatprep.subr.bf16.mxu0 0
        %2474 = vmatpush1.bf16.msra.mxu0 0
        %2475 = vmatprep.subr.bf16.mxu0 0
        %2476 = vmatpush1.bf16.msra.mxu0 0
        %2477 = vmatprep.subr.bf16.mxu0 0
        %2478 = vmatpush1.bf16.msra.mxu0 0
        %2479 = vmatprep.subr.bf16.mxu0 0
        %2480 = vmatpush1.bf16.msra.mxu0 0
        %2481 = vmatprep.subr.bf16.mxu0 0
        %2482 = vmatpush1.bf16.msra.mxu0 0
        %2483 = vmatprep.mubr.bf16.mxu0 0
        %2484 = vmatmul.mubr.bf16.gmra.mrb[0].mxu0 %v2404
        %v2485 = vpop.f32.mrb[0].mxu0
        %v2486 = vadd.f32 0.0, %v2485
        %v2487 = vpop.f32.mrb[0].mxu0
        %v2488 = vadd.f32 0.0, %v2487
        %v2489 = vpop.f32.mrb[0].mxu0
        %v2490 = vadd.f32 0.0, %v2489
        %v2491 = vpop.f32.mrb[0].mxu0
        %v2492 = vadd.f32 0.0, %v2491
        %2493 = vmatprep.mubr.bf16.mxu0 0
        %2494 = vmatmul.mubr.bf16.gmra.mrb[0].mxu0 %v2407
        %v2495 = vpop.f32.mrb[0].mxu0
        %v2496 = vadd.f32 0.0, %v2495
        %v2497 = vpop.f32.mrb[0].mxu0
        %v2498 = vadd.f32 0.0, %v2497
        %v2499 = vpop.f32.mrb[0].mxu0
        %v2500 = vadd.f32 0.0, %v2499
        %v2501 = vpop.f32.mrb[0].mxu0
        %v2502 = vadd.f32 0.0, %v2501
        %2503 = vmatprep.mubr.bf16.mxu0 0
        %2504 = vmatmul.mubr.bf16.gmra.mrb[0].mxu0 %v2410
        %v2505 = vpop.f32.mrb[0].mxu0
        %v2506 = vadd.f32 0.0, %v2505
        %v2507 = vpop.f32.mrb[0].mxu0
        %v2508 = vadd.f32 0.0, %v2507
        %v2509 = vpop.f32.mrb[0].mxu0
        %v2510 = vadd.f32 0.0, %v2509
        %v2511 = vpop.f32.mrb[0].mxu0
        %v2512 = vadd.f32 0.0, %v2511
        %2513 = vmatprep.mubr.bf16.mxu0 0
        %2514 = vmatmul.mubr.bf16.gmra.mrb[0].mxu0 %v2413
        %v2515 = vpop.f32.mrb[0].mxu0
        %v2516 = vadd.f32 0.0, %v2515
        %v2517 = vpop.f32.mrb[0].mxu0
        %v2518 = vadd.f32 0.0, %v2517
        %v2519 = vpop.f32.mrb[0].mxu0
        %v2520 = vadd.f32 0.0, %v2519
        %v2521 = vpop.f32.mrb[0].mxu0
        %v2522 = vadd.f32 0.0, %v2521
        %2523 = vmatprep.mubr.bf16.mxu0 0
        %2524 = vmatmul.mubr.bf16.gmra.mrb[0].mxu0 %v2416
        %v2525 = vpop.f32.mrb[0].mxu0
        %v2526 = vadd.f32 0.0, %v2525
        %v2527 = vpop.f32.mrb[0].mxu0
        %v2528 = vadd.f32 0.0, %v2527
        %v2529 = vpop.f32.mrb[0].mxu0
        %v2530 = vadd.f32 0.0, %v2529
        %v2531 = vpop.f32.mrb[0].mxu0
        %v2532 = vadd.f32 0.0, %v2531
        %2533 = vmatprep.mubr.bf16.mxu0 0
        %2534 = vmatmul.mubr.bf16.gmra.mrb[0].mxu0 %v2419
        %v2535 = vpop.f32.mrb[0].mxu0
        %v2536 = vadd.f32 0.0, %v2535
        %v2537 = vpop.f32.mrb[0].mxu0
        %v2538 = vadd.f32 0.0, %v2537
        %v2539 = vpop.f32.mrb[0].mxu0
        %v2540 = vadd.f32 0.0, %v2539
        %v2541 = vpop.f32.mrb[0].mxu0
        %v2542 = vadd.f32 0.0, %v2541
        %2543 = vmatprep.mubr.bf16.mxu0 0
        %2544 = vmatmul.mubr.bf16.gmra.mrb[0].mxu0 %v2422
        %v2545 = vpop.f32.mrb[0].mxu0
        %v2546 = vadd.f32 0.0, %v2545
        %v2547 = vpop.f32.mrb[0].mxu0
        %v2548 = vadd.f32 0.0, %v2547
        %v2549 = vpop.f32.mrb[0].mxu0
        %v2550 = vadd.f32 0.0, %v2549
        %v2551 = vpop.f32.mrb[0].mxu0
        %v2552 = vadd.f32 0.0, %v2551
        %2553 = vmatprep.mubr.bf16.mxu0 0
        %2554 = vmatmul.mubr.bf16.gmra.mrb[0].mxu0 %v2425
        %v2555 = vpop.f32.mrb[0].mxu0
        %v2556 = vadd.f32 0.0, %v2555
        %v2557 = vpop.f32.mrb[0].mxu0
        %v2558 = vadd.f32 0.0, %v2557
        %v2559 = vpop.f32.mrb[0].mxu0
        %v2560 = vadd.f32 0.0, %v2559
        %v2561 = vpop.f32.mrb[0].mxu0
        %v2562 = vadd.f32 0.0, %v2561
        %2563 = vmatprep.mubr.bf16.mxu0 0
        %2564 = vmatmul.mubr.bf16.gmra.mrb[0].mxu0 %v2428
        %v2565 = vpop.f32.mrb[0].mxu0
        %v2566 = vadd.f32 0.0, %v2565
        %v2567 = vpop.f32.mrb[0].mxu0
        %v2568 = vadd.f32 0.0, %v2567
        %v2569 = vpop.f32.mrb[0].mxu0
        %v2570 = vadd.f32 0.0, %v2569
        %v2571 = vpop.f32.mrb[0].mxu0
        %v2572 = vadd.f32 0.0, %v2571
        %2573 = vmatprep.mubr.bf16.mxu0 0
        %2574 = vmatmul.mubr.bf16.gmra.mrb[0].mxu0 %v2431
        %v2575 = vpop.f32.mrb[0].mxu0
        %v2576 = vadd.f32 0.0, %v2575
        %v2577 = vpop.f32.mrb[0].mxu0
        %v2578 = vadd.f32 0.0, %v2577
        %v2579 = vpop.f32.mrb[0].mxu0
        %v2580 = vadd.f32 0.0, %v2579
        %v2581 = vpop.f32.mrb[0].mxu0
        %v2582 = vadd.f32 0.0, %v2581
        %2583 = vmatprep.mubr.bf16.mxu0 0
        %2584 = vmatmul.mubr.bf16.gmra.mrb[0].mxu0 %v2434
        %v2585 = vpop.f32.mrb[0].mxu0
        %v2586 = vadd.f32 0.0, %v2585
        %v2587 = vpop.f32.mrb[0].mxu0
        %v2588 = vadd.f32 0.0, %v2587
        %v2589 = vpop.f32.mrb[0].mxu0
        %v2590 = vadd.f32 0.0, %v2589
        %v2591 = vpop.f32.mrb[0].mxu0
        %v2592 = vadd.f32 0.0, %v2591
        %2593 = vmatprep.mubr.bf16.mxu0 0
        %2594 = vmatmul.mubr.bf16.gmra.mrb[0].mxu0 %v2437
        %v2595 = vpop.f32.mrb[0].mxu0
        %v2596 = vadd.f32 0.0, %v2595
        %v2597 = vpop.f32.mrb[0].mxu0
        %v2598 = vadd.f32 0.0, %v2597
        %v2599 = vpop.f32.mrb[0].mxu0
        %v2600 = vadd.f32 0.0, %v2599
        %v2601 = vpop.f32.mrb[0].mxu0
        %v2602 = vadd.f32 0.0, %v2601
        %2603 = vmatprep.mubr.bf16.mxu0 0
        %2604 = vmatmul.mubr.bf16.gmra.mrb[0].mxu0 %v2440
        %v2605 = vpop.f32.mrb[0].mxu0
        %v2606 = vadd.f32 0.0, %v2605
        %v2607 = vpop.f32.mrb[0].mxu0
        %v2608 = vadd.f32 0.0, %v2607
        %v2609 = vpop.f32.mrb[0].mxu0
        %v2610 = vadd.f32 0.0, %v2609
        %v2611 = vpop.f32.mrb[0].mxu0
        %v2612 = vadd.f32 0.0, %v2611
        %2613 = vmatprep.mubr.bf16.mxu0 0
        %2614 = vmatmul.mubr.bf16.gmra.mrb[0].mxu0 %v2443
        %v2615 = vpop.f32.mrb[0].mxu0
        %v2616 = vadd.f32 0.0, %v2615
        %v2617 = vpop.f32.mrb[0].mxu0
        %v2618 = vadd.f32 0.0, %v2617
        %v2619 = vpop.f32.mrb[0].mxu0
        %v2620 = vadd.f32 0.0, %v2619
        %v2621 = vpop.f32.mrb[0].mxu0
        %v2622 = vadd.f32 0.0, %v2621
        %2623 = vmatprep.mubr.bf16.mxu0 0
        %2624 = vmatmul.mubr.bf16.gmra.mrb[0].mxu0 %v2446
        %v2625 = vpop.f32.mrb[0].mxu0
        %v2626 = vadd.f32 0.0, %v2625
        %v2627 = vpop.f32.mrb[0].mxu0
        %v2628 = vadd.f32 0.0, %v2627
        %v2629 = vpop.f32.mrb[0].mxu0
        %v2630 = vadd.f32 0.0, %v2629
        %v2631 = vpop.f32.mrb[0].mxu0
        %v2632 = vadd.f32 0.0, %v2631
        %2633 = vmatprep.mubr.bf16.mxu0 0
        %2634 = vmatmul.mubr.bf16.gmra.mrb[0].mxu0 %v2449
        %v2635 = vpop.f32.mrb[0].mxu0
        %v2636 = vadd.f32 0.0, %v2635
        %v2637 = vpop.f32.mrb[0].mxu0
        %v2638 = vadd.f32 0.0, %v2637
        %v2639 = vpop.f32.mrb[0].mxu0
        %v2640 = vadd.f32 0.0, %v2639
        %v2641 = vpop.f32.mrb[0].mxu0
        %v2642 = vadd.f32 0.0, %v2641
        %2643 = vdwg.mxu0
        %v2644 = vmul.f32 %v2486, 0.25
        %v2645 = vmul.f32 %v2488, 0.25
        %v2646 = vmul.f32 %v2490, 0.25
        %v2647 = vmul.f32 %v2492, 0.25
        %v2648 = vmul.f32 %v2496, 0.25
        %v2649 = vmul.f32 %v2498, 0.25
        %v2650 = vmul.f32 %v2500, 0.25
        %v2651 = vmul.f32 %v2502, 0.25
        %v2652 = vmul.f32 %v2506, 0.25
        %v2653 = vmul.f32 %v2508, 0.25
        %v2654 = vmul.f32 %v2510, 0.25
        %v2655 = vmul.f32 %v2512, 0.25
        %v2656 = vmul.f32 %v2516, 0.25
        %v2657 = vmul.f32 %v2518, 0.25
        %v2658 = vmul.f32 %v2520, 0.25
        %v2659 = vmul.f32 %v2522, 0.25
        %v2660 = vmul.f32 %v2526, 0.25
        %v2661 = vmul.f32 %v2528, 0.25
        %v2662 = vmul.f32 %v2530, 0.25
        %v2663 = vmul.f32 %v2532, 0.25
        %v2664 = vmul.f32 %v2536, 0.25
        %v2665 = vmul.f32 %v2538, 0.25
        %v2666 = vmul.f32 %v2540, 0.25
        %v2667 = vmul.f32 %v2542, 0.25
        %v2668 = vmul.f32 %v2546, 0.25
        %v2669 = vmul.f32 %v2548, 0.25
        %v2670 = vmul.f32 %v2550, 0.25
        %v2671 = vmul.f32 %v2552, 0.25
        %v2672 = vmul.f32 %v2556, 0.25
        %v2673 = vmul.f32 %v2558, 0.25
        %v2674 = vmul.f32 %v2560, 0.25
        %v2675 = vmul.f32 %v2562, 0.25
        %v2676 = vmul.f32 %v2566, 0.25
        %v2677 = vmul.f32 %v2568, 0.25
        %v2678 = vmul.f32 %v2570, 0.25
        %v2679 = vmul.f32 %v2572, 0.25
        %v2680 = vmul.f32 %v2576, 0.25
        %v2681 = vmul.f32 %v2578, 0.25
        %v2682 = vmul.f32 %v2580, 0.25
        %v2683 = vmul.f32 %v2582, 0.25
        %v2684 = vmul.f32 %v2586, 0.25
        %v2685 = vmul.f32 %v2588, 0.25
        %v2686 = vmul.f32 %v2590, 0.25
        %v2687 = vmul.f32 %v2592, 0.25
        %v2688 = vmul.f32 %v2596, 0.25
        %v2689 = vmul.f32 %v2598, 0.25
        %v2690 = vmul.f32 %v2600, 0.25
        %v2691 = vmul.f32 %v2602, 0.25
        %v2692 = vmul.f32 %v2606, 0.25
        %v2693 = vmul.f32 %v2608, 0.25
        %v2694 = vmul.f32 %v2610, 0.25
        %v2695 = vmul.f32 %v2612, 0.25
        %v2696 = vmul.f32 %v2616, 0.25
        %v2697 = vmul.f32 %v2618, 0.25
        %v2698 = vmul.f32 %v2620, 0.25
        %v2699 = vmul.f32 %v2622, 0.25
        %v2700 = vmul.f32 %v2626, 0.25
        %v2701 = vmul.f32 %v2628, 0.25
        %v2702 = vmul.f32 %v2630, 0.25
        %v2703 = vmul.f32 %v2632, 0.25
        %v2704 = vmul.f32 %v2636, 0.25
        %v2705 = vmul.f32 %v2638, 0.25
        %v2706 = vmul.f32 %v2640, 0.25
        %v2707 = vmul.f32 %v2642, 0.25
        %v2708 = vmax.f32 %v2644, %v2648
        %v2709 = vmax.f32 %v2646, %v2650
        %v2710 = vmax.f32 %v2708, %v2652
        %v2711 = vmax.f32 %v2709, %v2654
        %v2712 = vmax.f32 %v2710, %v2656
        %v2713 = vmax.f32 %v2711, %v2658
        %v2714 = vmax.f32 %v2712, %v2660
        %v2715 = vmax.f32 %v2713, %v2662
        %v2716 = vmax.f32 %v2714, %v2664
        %v2717 = vmax.f32 %v2715, %v2666
        %v2718 = vmax.f32 %v2716, %v2668
        %v2719 = vmax.f32 %v2717, %v2670
        %v2720 = vmax.f32 %v2718, %v2672
        %v2721 = vmax.f32 %v2719, %v2674
        %v2722 = vmax.f32 %v2720, %v2676
        %v2723 = vmax.f32 %v2721, %v2678
        %v2724 = vmax.f32 %v2722, %v2680
        %v2725 = vmax.f32 %v2723, %v2682
        %v2726 = vmax.f32 %v2724, %v2684
        %v2727 = vmax.f32 %v2725, %v2686
        %v2728 = vmax.f32 %v2726, %v2688
        %v2729 = vmax.f32 %v2727, %v2690
        %v2730 = vmax.f32 %v2728, %v2692
        %v2731 = vmax.f32 %v2729, %v2694
        %v2732 = vmax.f32 %v2730, %v2696
        %v2733 = vmax.f32 %v2731, %v2698
        %v2734 = vmax.f32 %v2732, %v2700
        %v2735 = vmax.f32 %v2733, %v2702
        %v2736 = vmax.f32 %v2734, %v2704
        %v2737 = vmax.f32 %v2735, %v2706
        %v2738 = vmax.f32 %v2736, %v2737
        %v2739 = vrot.slane %v2738, 4
        %v2740 = vmax.f32 %v2738, %v2739
        %v2741 = vrot.slane %v2740, 2
        %v2742 = vmax.f32 %v2740, %v2741
        %v2743 = vrot.slane %v2742, 1
        %v2744 = vmax.f32 %v2742, %v2743
        %v2745 = vmax.f32 %v2645, %v2649
        %v2746 = vmax.f32 %v2647, %v2651
        %v2747 = vmax.f32 %v2745, %v2653
        %v2748 = vmax.f32 %v2746, %v2655
        %v2749 = vmax.f32 %v2747, %v2657
        %v2750 = vmax.f32 %v2748, %v2659
        %v2751 = vmax.f32 %v2749, %v2661
        %v2752 = vmax.f32 %v2750, %v2663
        %v2753 = vmax.f32 %v2751, %v2665
        %v2754 = vmax.f32 %v2752, %v2667
        %v2755 = vmax.f32 %v2753, %v2669
        %v2756 = vmax.f32 %v2754, %v2671
        %v2757 = vmax.f32 %v2755, %v2673
        %v2758 = vmax.f32 %v2756, %v2675
        %v2759 = vmax.f32 %v2757, %v2677
        %v2760 = vmax.f32 %v2758, %v2679
        %v2761 = vmax.f32 %v2759, %v2681
        %v2762 = vmax.f32 %v2760, %v2683
        %v2763 = vmax.f32 %v2761, %v2685
        %v2764 = vmax.f32 %v2762, %v2687
        %v2765 = vmax.f32 %v2763, %v2689
        %v2766 = vmax.f32 %v2764, %v2691
        %v2767 = vmax.f32 %v2765, %v2693
        %v2768 = vmax.f32 %v2766, %v2695
        %v2769 = vmax.f32 %v2767, %v2697
        %v2770 = vmax.f32 %v2768, %v2699
        %v2771 = vmax.f32 %v2769, %v2701
        %v2772 = vmax.f32 %v2770, %v2703
        %v2773 = vmax.f32 %v2771, %v2705
        %v2774 = vmax.f32 %v2772, %v2707
        %v2775 = vmax.f32 %v2773, %v2774
        %v2776 = vrot.slane %v2775, 4
        %v2777 = vmax.f32 %v2775, %v2776
        %v2778 = vrot.slane %v2777, 2
        %v2779 = vmax.f32 %v2777, %v2778
        %v2780 = vrot.slane %v2779, 1
        %v2781 = vmax.f32 %v2779, %v2780
        %v2782 = vsub.f32 %v2644, %v2744
        %v2783 = vsub.f32 %v2645, %v2781
        %v2784 = vsub.f32 %v2646, %v2744
        %v2785 = vsub.f32 %v2647, %v2781
        %v2786 = vsub.f32 %v2648, %v2744
        %v2787 = vsub.f32 %v2649, %v2781
        %v2788 = vsub.f32 %v2650, %v2744
        %v2789 = vsub.f32 %v2651, %v2781
        %v2790 = vsub.f32 %v2652, %v2744
        %v2791 = vsub.f32 %v2653, %v2781
        %v2792 = vsub.f32 %v2654, %v2744
        %v2793 = vsub.f32 %v2655, %v2781
        %v2794 = vsub.f32 %v2656, %v2744
        %v2795 = vsub.f32 %v2657, %v2781
        %v2796 = vsub.f32 %v2658, %v2744
        %v2797 = vsub.f32 %v2659, %v2781
        %v2798 = vsub.f32 %v2660, %v2744
        %v2799 = vsub.f32 %v2661, %v2781
        %v2800 = vsub.f32 %v2662, %v2744
        %v2801 = vsub.f32 %v2663, %v2781
        %v2802 = vsub.f32 %v2664, %v2744
        %v2803 = vsub.f32 %v2665, %v2781
        %v2804 = vsub.f32 %v2666, %v2744
        %v2805 = vsub.f32 %v2667, %v2781
        %v2806 = vsub.f32 %v2668, %v2744
        %v2807 = vsub.f32 %v2669, %v2781
        %v2808 = vsub.f32 %v2670, %v2744
        %v2809 = vsub.f32 %v2671, %v2781
        %v2810 = vsub.f32 %v2672, %v2744
        %v2811 = vsub.f32 %v2673, %v2781
        %v2812 = vsub.f32 %v2674, %v2744
        %v2813 = vsub.f32 %v2675, %v2781
        %v2814 = vsub.f32 %v2676, %v2744
        %v2815 = vsub.f32 %v2677, %v2781
        %v2816 = vsub.f32 %v2678, %v2744
        %v2817 = vsub.f32 %v2679, %v2781
        %v2818 = vsub.f32 %v2680, %v2744
        %v2819 = vsub.f32 %v2681, %v2781
        %v2820 = vsub.f32 %v2682, %v2744
        %v2821 = vsub.f32 %v2683, %v2781
        %v2822 = vsub.f32 %v2684, %v2744
        %v2823 = vsub.f32 %v2685, %v2781
        %v2824 = vsub.f32 %v2686, %v2744
        %v2825 = vsub.f32 %v2687, %v2781
        %v2826 = vsub.f32 %v2688, %v2744
        %v2827 = vsub.f32 %v2689, %v2781
        %v2828 = vsub.f32 %v2690, %v2744
        %v2829 = vsub.f32 %v2691, %v2781
        %v2830 = vsub.f32 %v2692, %v2744
        %v2831 = vsub.f32 %v2693, %v2781
        %v2832 = vsub.f32 %v2694, %v2744
        %v2833 = vsub.f32 %v2695, %v2781
        %v2834 = vsub.f32 %v2696, %v2744
        %v2835 = vsub.f32 %v2697, %v2781
        %v2836 = vsub.f32 %v2698, %v2744
        %v2837 = vsub.f32 %v2699, %v2781
        %v2838 = vsub.f32 %v2700, %v2744
        %v2839 = vsub.f32 %v2701, %v2781
        %v2840 = vsub.f32 %v2702, %v2744
        %v2841 = vsub.f32 %v2703, %v2781
        %v2842 = vsub.f32 %v2704, %v2744
        %v2843 = vsub.f32 %v2705, %v2781
        %v2844 = vsub.f32 %v2706, %v2744
        %v2845 = vsub.f32 %v2707, %v2781
        %v2846 = vpack.c.bf16 %v2784, %v2782
        %v2847 = vpack.c.bf16 %v2785, %v2783
        %v2848 = vpack.c.bf16 %v2788, %v2786
        %v2849 = vpack.c.bf16 %v2789, %v2787
        %v2850 = vpack.c.bf16 %v2792, %v2790
        %v2851 = vpack.c.bf16 %v2793, %v2791
        %v2852 = vpack.c.bf16 %v2796, %v2794
        %v2853 = vpack.c.bf16 %v2797, %v2795
        %v2854 = vpack.c.bf16 %v2800, %v2798
        %v2855 = vpack.c.bf16 %v2801, %v2799
        %v2856 = vpack.c.bf16 %v2804, %v2802
        %v2857 = vpack.c.bf16 %v2805, %v2803
        %v2858 = vpack.c.bf16 %v2808, %v2806
        %v2859 = vpack.c.bf16 %v2809, %v2807
        %v2860 = vpack.c.bf16 %v2812, %v2810
        %v2861 = vpack.c.bf16 %v2813, %v2811
        %v2862 = vpack.c.bf16 %v2816, %v2814
        %v2863 = vpack.c.bf16 %v2817, %v2815
        %v2864 = vpack.c.bf16 %v2820, %v2818
        %v2865 = vpack.c.bf16 %v2821, %v2819
        %v2866 = vpack.c.bf16 %v2824, %v2822
        %v2867 = vpack.c.bf16 %v2825, %v2823
        %v2868 = vpack.c.bf16 %v2828, %v2826
        %v2869 = vpack.c.bf16 %v2829, %v2827
        %v2870 = vpack.c.bf16 %v2832, %v2830
        %v2871 = vpack.c.bf16 %v2833, %v2831
        %v2872 = vpack.c.bf16 %v2836, %v2834
        %v2873 = vpack.c.bf16 %v2837, %v2835
        %v2874 = vpack.c.bf16 %v2840, %v2838
        %v2875 = vpack.c.bf16 %v2841, %v2839
        %v2876 = vpack.c.bf16 %v2844, %v2842
        %v2877 = vpack.c.bf16 %v2845, %v2843
        %v2879 = vmul.bf16 %v2846, 1069105081
        %v2880 = vpow.bf16.pop %v2879
        %v2882 = vmul.bf16 %v2847, 1069105081
        %v2883 = vpow.bf16.pop %v2882
        %v2885 = vmul.bf16 %v2848, 1069105081
        %v2886 = vpow.bf16.pop %v2885
        %v2888 = vmul.bf16 %v2849, 1069105081
        %v2889 = vpow.bf16.pop %v2888
        %v2891 = vmul.bf16 %v2850, 1069105081
        %v2892 = vpow.bf16.pop %v2891
        %v2894 = vmul.bf16 %v2851, 1069105081
        %v2895 = vpow.bf16.pop %v2894
        %v2897 = vmul.bf16 %v2852, 1069105081
        %v2898 = vpow.bf16.pop %v2897
        %v2900 = vmul.bf16 %v2853, 1069105081
        %v2901 = vpow.bf16.pop %v2900
        %v2903 = vmul.bf16 %v2854, 1069105081
        %v2904 = vpow.bf16.pop %v2903
        %v2906 = vmul.bf16 %v2855, 1069105081
        %v2907 = vpow.bf16.pop %v2906
        %v2909 = vmul.bf16 %v2856, 1069105081
        %v2910 = vpow.bf16.pop %v2909
        %v2912 = vmul.bf16 %v2857, 1069105081
        %v2913 = vpow.bf16.pop %v2912
        %v2915 = vmul.bf16 %v2858, 1069105081
        %v2916 = vpow.bf16.pop %v2915
        %v2918 = vmul.bf16 %v2859, 1069105081
        %v2919 = vpow.bf16.pop %v2918
        %v2921 = vmul.bf16 %v2860, 1069105081
        %v2922 = vpow.bf16.pop %v2921
        %v2924 = vmul.bf16 %v2861, 1069105081
        %v2925 = vpow.bf16.pop %v2924
        %v2927 = vmul.bf16 %v2862, 1069105081
        %v2928 = vpow.bf16.pop %v2927
        %v2930 = vmul.bf16 %v2863, 1069105081
        %v2931 = vpow.bf16.pop %v2930
        %v2933 = vmul.bf16 %v2864, 1069105081
        %v2934 = vpow.bf16.pop %v2933
        %v2936 = vmul.bf16 %v2865, 1069105081
        %v2937 = vpow.bf16.pop %v2936
        %v2939 = vmul.bf16 %v2866, 1069105081
        %v2940 = vpow.bf16.pop %v2939
        %v2942 = vmul.bf16 %v2867, 1069105081
        %v2943 = vpow.bf16.pop %v2942
        %v2945 = vmul.bf16 %v2868, 1069105081
        %v2946 = vpow.bf16.pop %v2945
        %v2948 = vmul.bf16 %v2869, 1069105081
        %v2949 = vpow.bf16.pop %v2948
        %v2951 = vmul.bf16 %v2870, 1069105081
        %v2952 = vpow.bf16.pop %v2951
        %v2954 = vmul.bf16 %v2871, 1069105081
        %v2955 = vpow.bf16.pop %v2954
        %v2957 = vmul.bf16 %v2872, 1069105081
        %v2958 = vpow.bf16.pop %v2957
        %v2960 = vmul.bf16 %v2873, 1069105081
        %v2961 = vpow.bf16.pop %v2960
        %v2963 = vmul.bf16 %v2874, 1069105081
        %v2964 = vpow.bf16.pop %v2963
        %v2966 = vmul.bf16 %v2875, 1069105081
        %v2967 = vpow.bf16.pop %v2966
        %v2969 = vmul.bf16 %v2876, 1069105081
        %v2970 = vpow.bf16.pop %v2969
        %v2972 = vmul.bf16 %v2877, 1069105081
        %v2973 = vpow.bf16.pop %v2972
        %2974 = vmatprep.subr.bf16.mxu0 %v2883
        %2975 = vmatpush1.bf16.msra.mxu0 %v2880
        %2976 = vmatprep.subr.bf16.mxu0 %v2889
        %2977 = vmatpush1.bf16.msra.mxu0 %v2886
        %2978 = vmatprep.subr.bf16.mxu0 %v2895
        %2979 = vmatpush1.bf16.msra.mxu0 %v2892
        %2980 = vmatprep.subr.bf16.mxu0 %v2901
        %2981 = vmatpush1.bf16.msra.mxu0 %v2898
        %2982 = vmatprep.subr.bf16.mxu0 %v2907
        %2983 = vmatpush1.bf16.msra.mxu0 %v2904
        %2984 = vmatprep.subr.bf16.mxu0 %v2913
        %2985 = vmatpush1.bf16.msra.mxu0 %v2910
        %2986 = vmatprep.subr.bf16.mxu0 %v2919
        %2987 = vmatpush1.bf16.msra.mxu0 %v2916
        %2988 = vmatprep.subr.bf16.mxu0 %v2925
        %2989 = vmatpush1.bf16.msra.mxu0 %v2922
        %2990 = vmatprep.subr.bf16.mxu0 %v2931
        %2991 = vmatpush1.bf16.msra.mxu0 %v2928
        %2992 = vmatprep.subr.bf16.mxu0 %v2937
        %2993 = vmatpush1.bf16.msra.mxu0 %v2934
        %2994 = vmatprep.subr.bf16.mxu0 %v2943
        %2995 = vmatpush1.bf16.msra.mxu0 %v2940
        %2996 = vmatprep.subr.bf16.mxu0 %v2949
        %2997 = vmatpush1.bf16.msra.mxu0 %v2946
        %2998 = vmatprep.subr.bf16.mxu0 %v2955
        %2999 = vmatpush1.bf16.msra.mxu0 %v2952
        %3000 = vmatprep.subr.bf16.mxu0 %v2961
        %3001 = vmatpush1.bf16.msra.mxu0 %v2958
        %3002 = vmatprep.subr.bf16.mxu0 %v2967
        %3003 = vmatpush1.bf16.msra.mxu0 %v2964
        %3004 = vmatprep.subr.bf16.mxu0 %v2973
        %3005 = vmatpush1.bf16.msra.mxu0 %v2970
        %3006 = vmatprep.mubr.bf16.mxu0 1065369472
        %3007 = vmatmul.mubr.bf16.gmra.mrb[0].mxu0 1065369472
        %v3008 = vpop.f32.mrb[0].mxu0
        %v3009 = vadd.f32 0.0, %v3008
        %v3010 = vpop.f32.mrb[0].mxu0
        %v3011 = vadd.f32 0.0, %v3010
        %v3012 = vpop.f32.mrb[0].mxu0
        %v3013 = vpop.f32.mrb[0].mxu0
        %3014 = vdwg.mxu0
        %3015 = vmatprep.subr.bf16.mxu0 %v2883
        %3016 = vmatpush1.bf16.msra.mxu0 %v2880
        %3017 = vmatprep.subr.bf16.mxu0 %v2889
        %3018 = vmatpush1.bf16.msra.mxu0 %v2886
        %3019 = vmatprep.subr.bf16.mxu0 %v2895
        %3020 = vmatpush1.bf16.msra.mxu0 %v2892
        %3021 = vmatprep.subr.bf16.mxu0 %v2901
        %3022 = vmatpush1.bf16.msra.mxu0 %v2898
        %3023 = vmatprep.subr.bf16.mxu0 %v2907
        %3024 = vmatpush1.bf16.msra.mxu0 %v2904
        %3025 = vmatprep.subr.bf16.mxu0 %v2913
        %3026 = vmatpush1.bf16.msra.mxu0 %v2910
        %3027 = vmatprep.subr.bf16.mxu0 %v2919
        %3028 = vmatpush1.bf16.msra.mxu0 %v2916
        %3029 = vmatprep.subr.bf16.mxu0 %v2925
        %3030 = vmatpush1.bf16.msra.mxu0 %v2922
        %3031 = vmatprep.subr.bf16.mxu0 %v2931
        %3032 = vmatpush1.bf16.msra.mxu0 %v2928
        %3033 = vmatprep.subr.bf16.mxu0 %v2937
        %3034 = vmatpush1.bf16.msra.mxu0 %v2934
        %3035 = vmatprep.subr.bf16.mxu0 %v2943
        %3036 = vmatpush1.bf16.msra.mxu0 %v2940
        %3037 = vmatprep.subr.bf16.mxu0 %v2949
        %3038 = vmatpush1.bf16.msra.mxu0 %v2946
        %3039 = vmatprep.subr.bf16.mxu0 %v2955
        %3040 = vmatpush1.bf16.msra.mxu0 %v2952
        %3041 = vmatprep.subr.bf16.mxu0 %v2961
        %3042 = vmatpush1.bf16.msra.mxu0 %v2958
        %3043 = vmatprep.subr.bf16.mxu0 %v2967
        %3044 = vmatpush1.bf16.msra.mxu0 %v2964
        %3045 = vmatprep.subr.bf16.mxu0 %v2973
        %3046 = vmatpush1.bf16.msra.mxu0 %v2970
        %3047 = vmatprep.mubr.bf16.mxu0 %v2370
        %3048 = vmatmul.mubr.bf16.gmra.mrb[0].mxu0 %v2369
        %v3049 = vpop.f32.mrb[0].mxu0
        %v3050 = vadd.f32 0.0, %v3049
        %v3051 = vpop.f32.mrb[0].mxu0
        %v3052 = vadd.f32 0.0, %v3051
        %v3053 = vpop.f32.mrb[0].mxu0
        %v3054 = vadd.f32 0.0, %v3053
        %v3055 = vpop.f32.mrb[0].mxu0
        %v3056 = vadd.f32 0.0, %v3055
        %3057 = vdwg.mxu0
        %v3058 = vrcp.pop %v3009
        %v3059 = vrcp.pop %v3011
        %v3060 = vlaneseq
        %v3061 = vshrl.u32 %v3060, 7
        %v3062 = vsub.s32 0, %v3061
        %v3063 = vrot.slane %v3058, %v3062
        %v3064 = vlaneseq
        %v3065 = vshrl.u32 %v3064, 7
        %v3066 = vsub.s32 0, %v3065
        %v3067 = vrot.slane %v3059, %v3066
        %v3068 = vmul.f32 %v3050, %v3063
        %v3069 = vmul.f32 %v3052, %v3067
        %v3070 = vmul.f32 %v3054, %v3063
        %v3071 = vmul.f32 %v3056, %v3067
        %3072 = vst [vmem:[%s405 + $0x20] sm:$0xff] %v3068
        %3073 = vst [vmem:[%s405 + $0x28] sm:$0xff] %v3069
        %3074 = vst [vmem:[%s405 + $0x30] sm:$0xff] %v3070
        %3075 = vst [vmem:[%s405 + $0x38] sm:$0xff] %v3071
        %v3076 = vld [vmem:[#allocation2 + $0x60] sm:$0xff]
        %v3077 = vld [vmem:[#allocation2 + $0x68] sm:$0xff]
        %v3078 = vld [vmem:[#allocation2 + $0x70] sm:$0xff]
        %v3079 = vld [vmem:[#allocation2 + $0x78] sm:$0xff]
        %v3080 = vld [vmem:[#allocation2 + $0x80] sm:$0xff]
        %v3081 = vld [vmem:[#allocation2 + $0x88] sm:$0xff]
        %3082 = vxpose.xlu0.c.b16.start [1/8] %v3078, 128
        %3083 = vxpose.xlu0.c.b16.cont [2/8] 0, 128
        %3084 = vxpose.xlu0.c.b16.cont [3/8] 0, 128
        %3085 = vxpose.xlu0.c.b16.cont [4/8] 0, 128
        %3086 = vxpose.xlu0.c.b16.cont [5/8] 0, 128
        %3087 = vxpose.xlu0.c.b16.cont [6/8] 0, 128
        %3088 = vxpose.xlu0.c.b16.cont [7/8] 0, 128
        %3089 = vxpose.xlu0.c.b16.end [8/8] 0, 128
        %v3090 = vpop.trf.xlu0
        %v3091 = vpop.trf.xlu0
        %v3092 = vpop.trf.xlu0
        %v3093 = vpop.trf.xlu0
        %v3094 = vpop.trf.xlu0
        %v3095 = vpop.trf.xlu0
        %v3096 = vpop.trf.xlu0
        %v3097 = vpop.trf.xlu0
        %3098 = vxpose.xlu0.c.b16.start [1/8] %v3079, 128
        %3099 = vxpose.xlu0.c.b16.cont [2/8] 0, 128
        %3100 = vxpose.xlu0.c.b16.cont [3/8] 0, 128
        %3101 = vxpose.xlu0.c.b16.cont [4/8] 0, 128
        %3102 = vxpose.xlu0.c.b16.cont [5/8] 0, 128
        %3103 = vxpose.xlu0.c.b16.cont [6/8] 0, 128
        %3104 = vxpose.xlu0.c.b16.cont [7/8] 0, 128
        %3105 = vxpose.xlu0.c.b16.end [8/8] 0, 128
        %v3106 = vpop.trf.xlu0
        %v3107 = vpop.trf.xlu0
        %v3108 = vpop.trf.xlu0
        %v3109 = vpop.trf.xlu0
        %v3110 = vpop.trf.xlu0
        %v3111 = vpop.trf.xlu0
        %v3112 = vpop.trf.xlu0
        %v3113 = vpop.trf.xlu0
        %v3115 = vsel %vm1691, %v3090, 0
        %v3118 = vsel %vm1691, %v3091, 0
        %v3121 = vsel %vm1691, %v3092, 0
        %v3124 = vsel %vm1691, %v3093, 0
        %v3127 = vsel %vm1691, %v3094, 0
        %v3130 = vsel %vm1691, %v3095, 0
        %v3133 = vsel %vm1691, %v3096, 0
        %v3136 = vsel %vm1691, %v3097, 0
        %v3139 = vsel %vm1691, %v3106, 0
        %v3142 = vsel %vm1691, %v3107, 0
        %v3145 = vsel %vm1691, %v3108, 0
        %v3148 = vsel %vm1691, %v3109, 0
        %v3151 = vsel %vm1691, %v3110, 0
        %v3154 = vsel %vm1691, %v3111, 0
        %v3157 = vsel %vm1691, %v3112, 0
        %v3160 = vsel %vm1691, %v3113, 0
        %3162 = vmatprep.subr.bf16.mxu0 %v3077
        %3163 = vmatpush1.bf16.msra.mxu0 %v3076
        %3164 = vmatprep.subr.bf16.mxu0 0
        %3165 = vmatpush1.bf16.msra.mxu0 0
        %3166 = vmatprep.subr.bf16.mxu0 0
        %3167 = vmatpush1.bf16.msra.mxu0 0
        %3168 = vmatprep.subr.bf16.mxu0 0
        %3169 = vmatpush1.bf16.msra.mxu0 0
        %3170 = vmatprep.subr.bf16.mxu0 0
        %3171 = vmatpush1.bf16.msra.mxu0 0
        %3172 = vmatprep.subr.bf16.mxu0 0
        %3173 = vmatpush1.bf16.msra.mxu0 0
        %3174 = vmatprep.subr.bf16.mxu0 0
        %3175 = vmatpush1.bf16.msra.mxu0 0
        %3176 = vmatprep.subr.bf16.mxu0 0
        %3177 = vmatpush1.bf16.msra.mxu0 0
        %3178 = vmatprep.subr.bf16.mxu0 0
        %3179 = vmatpush1.bf16.msra.mxu0 0
        %3180 = vmatprep.subr.bf16.mxu0 0
        %3181 = vmatpush1.bf16.msra.mxu0 0
        %3182 = vmatprep.subr.bf16.mxu0 0
        %3183 = vmatpush1.bf16.msra.mxu0 0
        %3184 = vmatprep.subr.bf16.mxu0 0
        %3185 = vmatpush1.bf16.msra.mxu0 0
        %3186 = vmatprep.subr.bf16.mxu0 0
        %3187 = vmatpush1.bf16.msra.mxu0 0
        %3188 = vmatprep.subr.bf16.mxu0 0
        %3189 = vmatpush1.bf16.msra.mxu0 0
        %3190 = vmatprep.subr.bf16.mxu0 0
        %3191 = vmatpush1.bf16.msra.mxu0 0
        %3192 = vmatprep.subr.bf16.mxu0 0
        %3193 = vmatpush1.bf16.msra.mxu0 0
        %3194 = vmatprep.mubr.bf16.mxu0 0
        %3195 = vmatmul.mubr.bf16.gmra.mrb[0].mxu0 %v3115
        %v3196 = vpop.f32.mrb[0].mxu0
        %v3197 = vadd.f32 0.0, %v3196
        %v3198 = vpop.f32.mrb[0].mxu0
        %v3199 = vadd.f32 0.0, %v3198
        %v3200 = vpop.f32.mrb[0].mxu0
        %v3201 = vadd.f32 0.0, %v3200
        %v3202 = vpop.f32.mrb[0].mxu0
        %v3203 = vadd.f32 0.0, %v3202
        %3204 = vmatprep.mubr.bf16.mxu0 0
        %3205 = vmatmul.mubr.bf16.gmra.mrb[0].mxu0 %v3118
        %v3206 = vpop.f32.mrb[0].mxu0
        %v3207 = vadd.f32 0.0, %v3206
        %v3208 = vpop.f32.mrb[0].mxu0
        %v3209 = vadd.f32 0.0, %v3208
        %v3210 = vpop.f32.mrb[0].mxu0
        %v3211 = vadd.f32 0.0, %v3210
        %v3212 = vpop.f32.mrb[0].mxu0
        %v3213 = vadd.f32 0.0, %v3212
        %3214 = vmatprep.mubr.bf16.mxu0 0
        %3215 = vmatmul.mubr.bf16.gmra.mrb[0].mxu0 %v3121
        %v3216 = vpop.f32.mrb[0].mxu0
        %v3217 = vadd.f32 0.0, %v3216
        %v3218 = vpop.f32.mrb[0].mxu0
        %v3219 = vadd.f32 0.0, %v3218
        %v3220 = vpop.f32.mrb[0].mxu0
        %v3221 = vadd.f32 0.0, %v3220
        %v3222 = vpop.f32.mrb[0].mxu0
        %v3223 = vadd.f32 0.0, %v3222
        %3224 = vmatprep.mubr.bf16.mxu0 0
        %3225 = vmatmul.mubr.bf16.gmra.mrb[0].mxu0 %v3124
        %v3226 = vpop.f32.mrb[0].mxu0
        %v3227 = vadd.f32 0.0, %v3226
        %v3228 = vpop.f32.mrb[0].mxu0
        %v3229 = vadd.f32 0.0, %v3228
        %v3230 = vpop.f32.mrb[0].mxu0
        %v3231 = vadd.f32 0.0, %v3230
        %v3232 = vpop.f32.mrb[0].mxu0
        %v3233 = vadd.f32 0.0, %v3232
        %3234 = vmatprep.mubr.bf16.mxu0 0
        %3235 = vmatmul.mubr.bf16.gmra.mrb[0].mxu0 %v3127
        %v3236 = vpop.f32.mrb[0].mxu0
        %v3237 = vadd.f32 0.0, %v3236
        %v3238 = vpop.f32.mrb[0].mxu0
        %v3239 = vadd.f32 0.0, %v3238
        %v3240 = vpop.f32.mrb[0].mxu0
        %v3241 = vadd.f32 0.0, %v3240
        %v3242 = vpop.f32.mrb[0].mxu0
        %v3243 = vadd.f32 0.0, %v3242
        %3244 = vmatprep.mubr.bf16.mxu0 0
        %3245 = vmatmul.mubr.bf16.gmra.mrb[0].mxu0 %v3130
        %v3246 = vpop.f32.mrb[0].mxu0
        %v3247 = vadd.f32 0.0, %v3246
        %v3248 = vpop.f32.mrb[0].mxu0
        %v3249 = vadd.f32 0.0, %v3248
        %v3250 = vpop.f32.mrb[0].mxu0
        %v3251 = vadd.f32 0.0, %v3250
        %v3252 = vpop.f32.mrb[0].mxu0
        %v3253 = vadd.f32 0.0, %v3252
        %3254 = vmatprep.mubr.bf16.mxu0 0
        %3255 = vmatmul.mubr.bf16.gmra.mrb[0].mxu0 %v3133
        %v3256 = vpop.f32.mrb[0].mxu0
        %v3257 = vadd.f32 0.0, %v3256
        %v3258 = vpop.f32.mrb[0].mxu0
        %v3259 = vadd.f32 0.0, %v3258
        %v3260 = vpop.f32.mrb[0].mxu0
        %v3261 = vadd.f32 0.0, %v3260
        %v3262 = vpop.f32.mrb[0].mxu0
        %v3263 = vadd.f32 0.0, %v3262
        %3264 = vmatprep.mubr.bf16.mxu0 0
        %3265 = vmatmul.mubr.bf16.gmra.mrb[0].mxu0 %v3136
        %v3266 = vpop.f32.mrb[0].mxu0
        %v3267 = vadd.f32 0.0, %v3266
        %v3268 = vpop.f32.mrb[0].mxu0
        %v3269 = vadd.f32 0.0, %v3268
        %v3270 = vpop.f32.mrb[0].mxu0
        %v3271 = vadd.f32 0.0, %v3270
        %v3272 = vpop.f32.mrb[0].mxu0
        %v3273 = vadd.f32 0.0, %v3272
        %3274 = vmatprep.mubr.bf16.mxu0 0
        %3275 = vmatmul.mubr.bf16.gmra.mrb[0].mxu0 %v3139
        %v3276 = vpop.f32.mrb[0].mxu0
        %v3277 = vadd.f32 0.0, %v3276
        %v3278 = vpop.f32.mrb[0].mxu0
        %v3279 = vadd.f32 0.0, %v3278
        %v3280 = vpop.f32.mrb[0].mxu0
        %v3281 = vadd.f32 0.0, %v3280
        %v3282 = vpop.f32.mrb[0].mxu0
        %v3283 = vadd.f32 0.0, %v3282
        %3284 = vmatprep.mubr.bf16.mxu0 0
        %3285 = vmatmul.mubr.bf16.gmra.mrb[0].mxu0 %v3142
        %v3286 = vpop.f32.mrb[0].mxu0
        %v3287 = vadd.f32 0.0, %v3286
        %v3288 = vpop.f32.mrb[0].mxu0
        %v3289 = vadd.f32 0.0, %v3288
        %v3290 = vpop.f32.mrb[0].mxu0
        %v3291 = vadd.f32 0.0, %v3290
        %v3292 = vpop.f32.mrb[0].mxu0
        %v3293 = vadd.f32 0.0, %v3292
        %3294 = vmatprep.mubr.bf16.mxu0 0
        %3295 = vmatmul.mubr.bf16.gmra.mrb[0].mxu0 %v3145
        %v3296 = vpop.f32.mrb[0].mxu0
        %v3297 = vadd.f32 0.0, %v3296
        %v3298 = vpop.f32.mrb[0].mxu0
        %v3299 = vadd.f32 0.0, %v3298
        %v3300 = vpop.f32.mrb[0].mxu0
        %v3301 = vadd.f32 0.0, %v3300
        %v3302 = vpop.f32.mrb[0].mxu0
        %v3303 = vadd.f32 0.0, %v3302
        %3304 = vmatprep.mubr.bf16.mxu0 0
        %3305 = vmatmul.mubr.bf16.gmra.mrb[0].mxu0 %v3148
        %v3306 = vpop.f32.mrb[0].mxu0
        %v3307 = vadd.f32 0.0, %v3306
        %v3308 = vpop.f32.mrb[0].mxu0
        %v3309 = vadd.f32 0.0, %v3308
        %v3310 = vpop.f32.mrb[0].mxu0
        %v3311 = vadd.f32 0.0, %v3310
        %v3312 = vpop.f32.mrb[0].mxu0
        %v3313 = vadd.f32 0.0, %v3312
        %3314 = vmatprep.mubr.bf16.mxu0 0
        %3315 = vmatmul.mubr.bf16.gmra.mrb[0].mxu0 %v3151
        %v3316 = vpop.f32.mrb[0].mxu0
        %v3317 = vadd.f32 0.0, %v3316
        %v3318 = vpop.f32.mrb[0].mxu0
        %v3319 = vadd.f32 0.0, %v3318
        %v3320 = vpop.f32.mrb[0].mxu0
        %v3321 = vadd.f32 0.0, %v3320
        %v3322 = vpop.f32.mrb[0].mxu0
        %v3323 = vadd.f32 0.0, %v3322
        %3324 = vmatprep.mubr.bf16.mxu0 0
        %3325 = vmatmul.mubr.bf16.gmra.mrb[0].mxu0 %v3154
        %v3326 = vpop.f32.mrb[0].mxu0
        %v3327 = vadd.f32 0.0, %v3326
        %v3328 = vpop.f32.mrb[0].mxu0
        %v3329 = vadd.f32 0.0, %v3328
        %v3330 = vpop.f32.mrb[0].mxu0
        %v3331 = vadd.f32 0.0, %v3330
        %v3332 = vpop.f32.mrb[0].mxu0
        %v3333 = vadd.f32 0.0, %v3332
        %3334 = vmatprep.mubr.bf16.mxu0 0
        %3335 = vmatmul.mubr.bf16.gmra.mrb[0].mxu0 %v3157
        %v3336 = vpop.f32.mrb[0].mxu0
        %v3337 = vadd.f32 0.0, %v3336
        %v3338 = vpop.f32.mrb[0].mxu0
        %v3339 = vadd.f32 0.0, %v3338
        %v3340 = vpop.f32.mrb[0].mxu0
        %v3341 = vadd.f32 0.0, %v3340
        %v3342 = vpop.f32.mrb[0].mxu0
        %v3343 = vadd.f32 0.0, %v3342
        %3344 = vmatprep.mubr.bf16.mxu0 0
        %3345 = vmatmul.mubr.bf16.gmra.mrb[0].mxu0 %v3160
        %v3346 = vpop.f32.mrb[0].mxu0
        %v3347 = vadd.f32 0.0, %v3346
        %v3348 = vpop.f32.mrb[0].mxu0
        %v3349 = vadd.f32 0.0, %v3348
        %v3350 = vpop.f32.mrb[0].mxu0
        %v3351 = vadd.f32 0.0, %v3350
        %v3352 = vpop.f32.mrb[0].mxu0
        %v3353 = vadd.f32 0.0, %v3352
        %3354 = vdwg.mxu0
        %v3355 = vmul.f32 %v3197, 0.25
        %v3356 = vmul.f32 %v3199, 0.25
        %v3357 = vmul.f32 %v3201, 0.25
        %v3358 = vmul.f32 %v3203, 0.25
        %v3359 = vmul.f32 %v3207, 0.25
        %v3360 = vmul.f32 %v3209, 0.25
        %v3361 = vmul.f32 %v3211, 0.25
        %v3362 = vmul.f32 %v3213, 0.25
        %v3363 = vmul.f32 %v3217, 0.25
        %v3364 = vmul.f32 %v3219, 0.25
        %v3365 = vmul.f32 %v3221, 0.25
        %v3366 = vmul.f32 %v3223, 0.25
        %v3367 = vmul.f32 %v3227, 0.25
        %v3368 = vmul.f32 %v3229, 0.25
        %v3369 = vmul.f32 %v3231, 0.25
        %v3370 = vmul.f32 %v3233, 0.25
        %v3371 = vmul.f32 %v3237, 0.25
        %v3372 = vmul.f32 %v3239, 0.25
        %v3373 = vmul.f32 %v3241, 0.25
        %v3374 = vmul.f32 %v3243, 0.25
        %v3375 = vmul.f32 %v3247, 0.25
        %v3376 = vmul.f32 %v3249, 0.25
        %v3377 = vmul.f32 %v3251, 0.25
        %v3378 = vmul.f32 %v3253, 0.25
        %v3379 = vmul.f32 %v3257, 0.25
        %v3380 = vmul.f32 %v3259, 0.25
        %v3381 = vmul.f32 %v3261, 0.25
        %v3382 = vmul.f32 %v3263, 0.25
        %v3383 = vmul.f32 %v3267, 0.25
        %v3384 = vmul.f32 %v3269, 0.25
        %v3385 = vmul.f32 %v3271, 0.25
        %v3386 = vmul.f32 %v3273, 0.25
        %v3387 = vmul.f32 %v3277, 0.25
        %v3388 = vmul.f32 %v3279, 0.25
        %v3389 = vmul.f32 %v3281, 0.25
        %v3390 = vmul.f32 %v3283, 0.25
        %v3391 = vmul.f32 %v3287, 0.25
        %v3392 = vmul.f32 %v3289, 0.25
        %v3393 = vmul.f32 %v3291, 0.25
        %v3394 = vmul.f32 %v3293, 0.25
        %v3395 = vmul.f32 %v3297, 0.25
        %v3396 = vmul.f32 %v3299, 0.25
        %v3397 = vmul.f32 %v3301, 0.25
        %v3398 = vmul.f32 %v3303, 0.25
        %v3399 = vmul.f32 %v3307, 0.25
        %v3400 = vmul.f32 %v3309, 0.25
        %v3401 = vmul.f32 %v3311, 0.25
        %v3402 = vmul.f32 %v3313, 0.25
        %v3403 = vmul.f32 %v3317, 0.25
        %v3404 = vmul.f32 %v3319, 0.25
        %v3405 = vmul.f32 %v3321, 0.25
        %v3406 = vmul.f32 %v3323, 0.25
        %v3407 = vmul.f32 %v3327, 0.25
        %v3408 = vmul.f32 %v3329, 0.25
        %v3409 = vmul.f32 %v3331, 0.25
        %v3410 = vmul.f32 %v3333, 0.25
        %v3411 = vmul.f32 %v3337, 0.25
        %v3412 = vmul.f32 %v3339, 0.25
        %v3413 = vmul.f32 %v3341, 0.25
        %v3414 = vmul.f32 %v3343, 0.25
        %v3415 = vmul.f32 %v3347, 0.25
        %v3416 = vmul.f32 %v3349, 0.25
        %v3417 = vmul.f32 %v3351, 0.25
        %v3418 = vmul.f32 %v3353, 0.25
        %v3419 = vmax.f32 %v3355, %v3359
        %v3420 = vmax.f32 %v3357, %v3361
        %v3421 = vmax.f32 %v3419, %v3363
        %v3422 = vmax.f32 %v3420, %v3365
        %v3423 = vmax.f32 %v3421, %v3367
        %v3424 = vmax.f32 %v3422, %v3369
        %v3425 = vmax.f32 %v3423, %v3371
        %v3426 = vmax.f32 %v3424, %v3373
        %v3427 = vmax.f32 %v3425, %v3375
        %v3428 = vmax.f32 %v3426, %v3377
        %v3429 = vmax.f32 %v3427, %v3379
        %v3430 = vmax.f32 %v3428, %v3381
        %v3431 = vmax.f32 %v3429, %v3383
        %v3432 = vmax.f32 %v3430, %v3385
        %v3433 = vmax.f32 %v3431, %v3387
        %v3434 = vmax.f32 %v3432, %v3389
        %v3435 = vmax.f32 %v3433, %v3391
        %v3436 = vmax.f32 %v3434, %v3393
        %v3437 = vmax.f32 %v3435, %v3395
        %v3438 = vmax.f32 %v3436, %v3397
        %v3439 = vmax.f32 %v3437, %v3399
        %v3440 = vmax.f32 %v3438, %v3401
        %v3441 = vmax.f32 %v3439, %v3403
        %v3442 = vmax.f32 %v3440, %v3405
        %v3443 = vmax.f32 %v3441, %v3407
        %v3444 = vmax.f32 %v3442, %v3409
        %v3445 = vmax.f32 %v3443, %v3411
        %v3446 = vmax.f32 %v3444, %v3413
        %v3447 = vmax.f32 %v3445, %v3415
        %v3448 = vmax.f32 %v3446, %v3417
        %v3449 = vmax.f32 %v3447, %v3448
        %v3450 = vrot.slane %v3449, 4
        %v3451 = vmax.f32 %v3449, %v3450
        %v3452 = vrot.slane %v3451, 2
        %v3453 = vmax.f32 %v3451, %v3452
        %v3454 = vrot.slane %v3453, 1
        %v3455 = vmax.f32 %v3453, %v3454
        %v3456 = vmax.f32 %v3356, %v3360
        %v3457 = vmax.f32 %v3358, %v3362
        %v3458 = vmax.f32 %v3456, %v3364
        %v3459 = vmax.f32 %v3457, %v3366
        %v3460 = vmax.f32 %v3458, %v3368
        %v3461 = vmax.f32 %v3459, %v3370
        %v3462 = vmax.f32 %v3460, %v3372
        %v3463 = vmax.f32 %v3461, %v3374
        %v3464 = vmax.f32 %v3462, %v3376
        %v3465 = vmax.f32 %v3463, %v3378
        %v3466 = vmax.f32 %v3464, %v3380
        %v3467 = vmax.f32 %v3465, %v3382
        %v3468 = vmax.f32 %v3466, %v3384
        %v3469 = vmax.f32 %v3467, %v3386
        %v3470 = vmax.f32 %v3468, %v3388
        %v3471 = vmax.f32 %v3469, %v3390
        %v3472 = vmax.f32 %v3470, %v3392
        %v3473 = vmax.f32 %v3471, %v3394
        %v3474 = vmax.f32 %v3472, %v3396
        %v3475 = vmax.f32 %v3473, %v3398
        %v3476 = vmax.f32 %v3474, %v3400
        %v3477 = vmax.f32 %v3475, %v3402
        %v3478 = vmax.f32 %v3476, %v3404
        %v3479 = vmax.f32 %v3477, %v3406
        %v3480 = vmax.f32 %v3478, %v3408
        %v3481 = vmax.f32 %v3479, %v3410
        %v3482 = vmax.f32 %v3480, %v3412
        %v3483 = vmax.f32 %v3481, %v3414
        %v3484 = vmax.f32 %v3482, %v3416
        %v3485 = vmax.f32 %v3483, %v3418
        %v3486 = vmax.f32 %v3484, %v3485
        %v3487 = vrot.slane %v3486, 4
        %v3488 = vmax.f32 %v3486, %v3487
        %v3489 = vrot.slane %v3488, 2
        %v3490 = vmax.f32 %v3488, %v3489
        %v3491 = vrot.slane %v3490, 1
        %v3492 = vmax.f32 %v3490, %v3491
        %v3493 = vsub.f32 %v3355, %v3455
        %v3494 = vsub.f32 %v3356, %v3492
        %v3495 = vsub.f32 %v3357, %v3455
        %v3496 = vsub.f32 %v3358, %v3492
        %v3497 = vsub.f32 %v3359, %v3455
        %v3498 = vsub.f32 %v3360, %v3492
        %v3499 = vsub.f32 %v3361, %v3455
        %v3500 = vsub.f32 %v3362, %v3492
        %v3501 = vsub.f32 %v3363, %v3455
        %v3502 = vsub.f32 %v3364, %v3492
        %v3503 = vsub.f32 %v3365, %v3455
        %v3504 = vsub.f32 %v3366, %v3492
        %v3505 = vsub.f32 %v3367, %v3455
        %v3506 = vsub.f32 %v3368, %v3492
        %v3507 = vsub.f32 %v3369, %v3455
        %v3508 = vsub.f32 %v3370, %v3492
        %v3509 = vsub.f32 %v3371, %v3455
        %v3510 = vsub.f32 %v3372, %v3492
        %v3511 = vsub.f32 %v3373, %v3455
        %v3512 = vsub.f32 %v3374, %v3492
        %v3513 = vsub.f32 %v3375, %v3455
        %v3514 = vsub.f32 %v3376, %v3492
        %v3515 = vsub.f32 %v3377, %v3455
        %v3516 = vsub.f32 %v3378, %v3492
        %v3517 = vsub.f32 %v3379, %v3455
        %v3518 = vsub.f32 %v3380, %v3492
        %v3519 = vsub.f32 %v3381, %v3455
        %v3520 = vsub.f32 %v3382, %v3492
        %v3521 = vsub.f32 %v3383, %v3455
        %v3522 = vsub.f32 %v3384, %v3492
        %v3523 = vsub.f32 %v3385, %v3455
        %v3524 = vsub.f32 %v3386, %v3492
        %v3525 = vsub.f32 %v3387, %v3455
        %v3526 = vsub.f32 %v3388, %v3492
        %v3527 = vsub.f32 %v3389, %v3455
        %v3528 = vsub.f32 %v3390, %v3492
        %v3529 = vsub.f32 %v3391, %v3455
        %v3530 = vsub.f32 %v3392, %v3492
        %v3531 = vsub.f32 %v3393, %v3455
        %v3532 = vsub.f32 %v3394, %v3492
        %v3533 = vsub.f32 %v3395, %v3455
        %v3534 = vsub.f32 %v3396, %v3492
        %v3535 = vsub.f32 %v3397, %v3455
        %v3536 = vsub.f32 %v3398, %v3492
        %v3537 = vsub.f32 %v3399, %v3455
        %v3538 = vsub.f32 %v3400, %v3492
        %v3539 = vsub.f32 %v3401, %v3455
        %v3540 = vsub.f32 %v3402, %v3492
        %v3541 = vsub.f32 %v3403, %v3455
        %v3542 = vsub.f32 %v3404, %v3492
        %v3543 = vsub.f32 %v3405, %v3455
        %v3544 = vsub.f32 %v3406, %v3492
        %v3545 = vsub.f32 %v3407, %v3455
        %v3546 = vsub.f32 %v3408, %v3492
        %v3547 = vsub.f32 %v3409, %v3455
        %v3548 = vsub.f32 %v3410, %v3492
        %v3549 = vsub.f32 %v3411, %v3455
        %v3550 = vsub.f32 %v3412, %v3492
        %v3551 = vsub.f32 %v3413, %v3455
        %v3552 = vsub.f32 %v3414, %v3492
        %v3553 = vsub.f32 %v3415, %v3455
        %v3554 = vsub.f32 %v3416, %v3492
        %v3555 = vsub.f32 %v3417, %v3455
        %v3556 = vsub.f32 %v3418, %v3492
        %v3557 = vpack.c.bf16 %v3495, %v3493
        %v3558 = vpack.c.bf16 %v3496, %v3494
        %v3559 = vpack.c.bf16 %v3499, %v3497
        %v3560 = vpack.c.bf16 %v3500, %v3498
        %v3561 = vpack.c.bf16 %v3503, %v3501
        %v3562 = vpack.c.bf16 %v3504, %v3502
        %v3563 = vpack.c.bf16 %v3507, %v3505
        %v3564 = vpack.c.bf16 %v3508, %v3506
        %v3565 = vpack.c.bf16 %v3511, %v3509
        %v3566 = vpack.c.bf16 %v3512, %v3510
        %v3567 = vpack.c.bf16 %v3515, %v3513
        %v3568 = vpack.c.bf16 %v3516, %v3514
        %v3569 = vpack.c.bf16 %v3519, %v3517
        %v3570 = vpack.c.bf16 %v3520, %v3518
        %v3571 = vpack.c.bf16 %v3523, %v3521
        %v3572 = vpack.c.bf16 %v3524, %v3522
        %v3573 = vpack.c.bf16 %v3527, %v3525
        %v3574 = vpack.c.bf16 %v3528, %v3526
        %v3575 = vpack.c.bf16 %v3531, %v3529
        %v3576 = vpack.c.bf16 %v3532, %v3530
        %v3577 = vpack.c.bf16 %v3535, %v3533
        %v3578 = vpack.c.bf16 %v3536, %v3534
        %v3579 = vpack.c.bf16 %v3539, %v3537
        %v3580 = vpack.c.bf16 %v3540, %v3538
        %v3581 = vpack.c.bf16 %v3543, %v3541
        %v3582 = vpack.c.bf16 %v3544, %v3542
        %v3583 = vpack.c.bf16 %v3547, %v3545
        %v3584 = vpack.c.bf16 %v3548, %v3546
        %v3585 = vpack.c.bf16 %v3551, %v3549
        %v3586 = vpack.c.bf16 %v3552, %v3550
        %v3587 = vpack.c.bf16 %v3555, %v3553
        %v3588 = vpack.c.bf16 %v3556, %v3554
        %v3590 = vmul.bf16 %v3557, 1069105081
        %v3591 = vpow.bf16.pop %v3590
        %v3593 = vmul.bf16 %v3558, 1069105081
        %v3594 = vpow.bf16.pop %v3593
        %v3596 = vmul.bf16 %v3559, 1069105081
        %v3597 = vpow.bf16.pop %v3596
        %v3599 = vmul.bf16 %v3560, 1069105081
        %v3600 = vpow.bf16.pop %v3599
        %v3602 = vmul.bf16 %v3561, 1069105081
        %v3603 = vpow.bf16.pop %v3602
        %v3605 = vmul.bf16 %v3562, 1069105081
        %v3606 = vpow.bf16.pop %v3605
        %v3608 = vmul.bf16 %v3563, 1069105081
        %v3609 = vpow.bf16.pop %v3608
        %v3611 = vmul.bf16 %v3564, 1069105081
        %v3612 = vpow.bf16.pop %v3611
        %v3614 = vmul.bf16 %v3565, 1069105081
        %v3615 = vpow.bf16.pop %v3614
        %v3617 = vmul.bf16 %v3566, 1069105081
        %v3618 = vpow.bf16.pop %v3617
        %v3620 = vmul.bf16 %v3567, 1069105081
        %v3621 = vpow.bf16.pop %v3620
        %v3623 = vmul.bf16 %v3568, 1069105081
        %v3624 = vpow.bf16.pop %v3623
        %v3626 = vmul.bf16 %v3569, 1069105081
        %v3627 = vpow.bf16.pop %v3626
        %v3629 = vmul.bf16 %v3570, 1069105081
        %v3630 = vpow.bf16.pop %v3629
        %v3632 = vmul.bf16 %v3571, 1069105081
        %v3633 = vpow.bf16.pop %v3632
        %v3635 = vmul.bf16 %v3572, 1069105081
        %v3636 = vpow.bf16.pop %v3635
        %v3638 = vmul.bf16 %v3573, 1069105081
        %v3639 = vpow.bf16.pop %v3638
        %v3641 = vmul.bf16 %v3574, 1069105081
        %v3642 = vpow.bf16.pop %v3641
        %v3644 = vmul.bf16 %v3575, 1069105081
        %v3645 = vpow.bf16.pop %v3644
        %v3647 = vmul.bf16 %v3576, 1069105081
        %v3648 = vpow.bf16.pop %v3647
        %v3650 = vmul.bf16 %v3577, 1069105081
        %v3651 = vpow.bf16.pop %v3650
        %v3653 = vmul.bf16 %v3578, 1069105081
        %v3654 = vpow.bf16.pop %v3653
        %v3656 = vmul.bf16 %v3579, 1069105081
        %v3657 = vpow.bf16.pop %v3656
        %v3659 = vmul.bf16 %v3580, 1069105081
        %v3660 = vpow.bf16.pop %v3659
        %v3662 = vmul.bf16 %v3581, 1069105081
        %v3663 = vpow.bf16.pop %v3662
        %v3665 = vmul.bf16 %v3582, 1069105081
        %v3666 = vpow.bf16.pop %v3665
        %v3668 = vmul.bf16 %v3583, 1069105081
        %v3669 = vpow.bf16.pop %v3668
        %v3671 = vmul.bf16 %v3584, 1069105081
        %v3672 = vpow.bf16.pop %v3671
        %v3674 = vmul.bf16 %v3585, 1069105081
        %v3675 = vpow.bf16.pop %v3674
        %v3677 = vmul.bf16 %v3586, 1069105081
        %v3678 = vpow.bf16.pop %v3677
        %v3680 = vmul.bf16 %v3587, 1069105081
        %v3681 = vpow.bf16.pop %v3680
        %v3683 = vmul.bf16 %v3588, 1069105081
        %v3684 = vpow.bf16.pop %v3683
        %3685 = vmatprep.subr.bf16.mxu0 %v3594
        %3686 = vmatpush1.bf16.msra.mxu0 %v3591
        %3687 = vmatprep.subr.bf16.mxu0 %v3600
        %3688 = vmatpush1.bf16.msra.mxu0 %v3597
        %3689 = vmatprep.subr.bf16.mxu0 %v3606
        %3690 = vmatpush1.bf16.msra.mxu0 %v3603
        %3691 = vmatprep.subr.bf16.mxu0 %v3612
        %3692 = vmatpush1.bf16.msra.mxu0 %v3609
        %3693 = vmatprep.subr.bf16.mxu0 %v3618
        %3694 = vmatpush1.bf16.msra.mxu0 %v3615
        %3695 = vmatprep.subr.bf16.mxu0 %v3624
        %3696 = vmatpush1.bf16.msra.mxu0 %v3621
        %3697 = vmatprep.subr.bf16.mxu0 %v3630
        %3698 = vmatpush1.bf16.msra.mxu0 %v3627
        %3699 = vmatprep.subr.bf16.mxu0 %v3636
        %3700 = vmatpush1.bf16.msra.mxu0 %v3633
        %3701 = vmatprep.subr.bf16.mxu0 %v3642
        %3702 = vmatpush1.bf16.msra.mxu0 %v3639
        %3703 = vmatprep.subr.bf16.mxu0 %v3648
        %3704 = vmatpush1.bf16.msra.mxu0 %v3645
        %3705 = vmatprep.subr.bf16.mxu0 %v3654
        %3706 = vmatpush1.bf16.msra.mxu0 %v3651
        %3707 = vmatprep.subr.bf16.mxu0 %v3660
        %3708 = vmatpush1.bf16.msra.mxu0 %v3657
        %3709 = vmatprep.subr.bf16.mxu0 %v3666
        %3710 = vmatpush1.bf16.msra.mxu0 %v3663
        %3711 = vmatprep.subr.bf16.mxu0 %v3672
        %3712 = vmatpush1.bf16.msra.mxu0 %v3669
        %3713 = vmatprep.subr.bf16.mxu0 %v3678
        %3714 = vmatpush1.bf16.msra.mxu0 %v3675
        %3715 = vmatprep.subr.bf16.mxu0 %v3684
        %3716 = vmatpush1.bf16.msra.mxu0 %v3681
        %3717 = vmatprep.mubr.bf16.mxu0 1065369472
        %3718 = vmatmul.mubr.bf16.gmra.mrb[0].mxu0 1065369472
        %v3719 = vpop.f32.mrb[0].mxu0
        %v3720 = vadd.f32 0.0, %v3719
        %v3721 = vpop.f32.mrb[0].mxu0
        %v3722 = vadd.f32 0.0, %v3721
        %v3723 = vpop.f32.mrb[0].mxu0
        %v3724 = vpop.f32.mrb[0].mxu0
        %3725 = vdwg.mxu0
        %3726 = vmatprep.subr.bf16.mxu0 %v3594
        %3727 = vmatpush1.bf16.msra.mxu0 %v3591
        %3728 = vmatprep.subr.bf16.mxu0 %v3600
        %3729 = vmatpush1.bf16.msra.mxu0 %v3597
        %3730 = vmatprep.subr.bf16.mxu0 %v3606
        %3731 = vmatpush1.bf16.msra.mxu0 %v3603
        %3732 = vmatprep.subr.bf16.mxu0 %v3612
        %3733 = vmatpush1.bf16.msra.mxu0 %v3609
        %3734 = vmatprep.subr.bf16.mxu0 %v3618
        %3735 = vmatpush1.bf16.msra.mxu0 %v3615
        %3736 = vmatprep.subr.bf16.mxu0 %v3624
        %3737 = vmatpush1.bf16.msra.mxu0 %v3621
        %3738 = vmatprep.subr.bf16.mxu0 %v3630
        %3739 = vmatpush1.bf16.msra.mxu0 %v3627
        %3740 = vmatprep.subr.bf16.mxu0 %v3636
        %3741 = vmatpush1.bf16.msra.mxu0 %v3633
        %3742 = vmatprep.subr.bf16.mxu0 %v3642
        %3743 = vmatpush1.bf16.msra.mxu0 %v3639
        %3744 = vmatprep.subr.bf16.mxu0 %v3648
        %3745 = vmatpush1.bf16.msra.mxu0 %v3645
        %3746 = vmatprep.subr.bf16.mxu0 %v3654
        %3747 = vmatpush1.bf16.msra.mxu0 %v3651
        %3748 = vmatprep.subr.bf16.mxu0 %v3660
        %3749 = vmatpush1.bf16.msra.mxu0 %v3657
        %3750 = vmatprep.subr.bf16.mxu0 %v3666
        %3751 = vmatpush1.bf16.msra.mxu0 %v3663
        %3752 = vmatprep.subr.bf16.mxu0 %v3672
        %3753 = vmatpush1.bf16.msra.mxu0 %v3669
        %3754 = vmatprep.subr.bf16.mxu0 %v3678
        %3755 = vmatpush1.bf16.msra.mxu0 %v3675
        %3756 = vmatprep.subr.bf16.mxu0 %v3684
        %3757 = vmatpush1.bf16.msra.mxu0 %v3681
        %3758 = vmatprep.mubr.bf16.mxu0 %v3081
        %3759 = vmatmul.mubr.bf16.gmra.mrb[0].mxu0 %v3080
        %v3760 = vpop.f32.mrb[0].mxu0
        %v3761 = vadd.f32 0.0, %v3760
        %v3762 = vpop.f32.mrb[0].mxu0
        %v3763 = vadd.f32 0.0, %v3762
        %v3764 = vpop.f32.mrb[0].mxu0
        %v3765 = vadd.f32 0.0, %v3764
        %v3766 = vpop.f32.mrb[0].mxu0
        %v3767 = vadd.f32 0.0, %v3766
        %3768 = vdwg.mxu0
        %v3769 = vrcp.pop %v3720
        %v3770 = vrcp.pop %v3722
        %v3771 = vlaneseq
        %v3772 = vshrl.u32 %v3771, 7
        %v3773 = vsub.s32 0, %v3772
        %v3774 = vrot.slane %v3769, %v3773
        %v3775 = vlaneseq
        %v3776 = vshrl.u32 %v3775, 7
        %v3777 = vsub.s32 0, %v3776
        %v3778 = vrot.slane %v3770, %v3777
        %v3779 = vmul.f32 %v3761, %v3774
        %v3780 = vmul.f32 %v3763, %v3778
        %v3781 = vmul.f32 %v3765, %v3774
        %v3782 = vmul.f32 %v3767, %v3778
        %3783 = vst [vmem:[%s405 + $0x40] sm:$0xff] %v3779
        %3784 = vst [vmem:[%s405 + $0x48] sm:$0xff] %v3780
        %3785 = vst [vmem:[%s405 + $0x50] sm:$0xff] %v3781
        %3786 = vst [vmem:[%s405 + $0x58] sm:$0xff] %v3782
        %v3787 = vld [vmem:[#allocation2 + $0x90] sm:$0xff]
        %v3788 = vld [vmem:[#allocation2 + $0x98] sm:$0xff]
        %v3789 = vld [vmem:[#allocation2 + $0xa0] sm:$0xff]
        %v3790 = vld [vmem:[#allocation2 + $0xa8] sm:$0xff]
        %v3791 = vld [vmem:[#allocation2 + $0xb0] sm:$0xff]
        %v3792 = vld [vmem:[#allocation2 + $0xb8] sm:$0xff]
        %3793 = vxpose.xlu0.c.b16.start [1/8] %v3789, 128
        %3794 = vxpose.xlu0.c.b16.cont [2/8] 0, 128
        %3795 = vxpose.xlu0.c.b16.cont [3/8] 0, 128
        %3796 = vxpose.xlu0.c.b16.cont [4/8] 0, 128
        %3797 = vxpose.xlu0.c.b16.cont [5/8] 0, 128
        %3798 = vxpose.xlu0.c.b16.cont [6/8] 0, 128
        %3799 = vxpose.xlu0.c.b16.cont [7/8] 0, 128
        %3800 = vxpose.xlu0.c.b16.end [8/8] 0, 128
        %v3801 = vpop.trf.xlu0
        %v3802 = vpop.trf.xlu0
        %v3803 = vpop.trf.xlu0
        %v3804 = vpop.trf.xlu0
        %v3805 = vpop.trf.xlu0
        %v3806 = vpop.trf.xlu0
        %v3807 = vpop.trf.xlu0
        %v3808 = vpop.trf.xlu0
        %3809 = vxpose.xlu0.c.b16.start [1/8] %v3790, 128
        %3810 = vxpose.xlu0.c.b16.cont [2/8] 0, 128
        %3811 = vxpose.xlu0.c.b16.cont [3/8] 0, 128
        %3812 = vxpose.xlu0.c.b16.cont [4/8] 0, 128
        %3813 = vxpose.xlu0.c.b16.cont [5/8] 0, 128
        %3814 = vxpose.xlu0.c.b16.cont [6/8] 0, 128
        %3815 = vxpose.xlu0.c.b16.cont [7/8] 0, 128
        %3816 = vxpose.xlu0.c.b16.end [8/8] 0, 128
        %v3817 = vpop.trf.xlu0
        %v3818 = vpop.trf.xlu0
        %v3819 = vpop.trf.xlu0
        %v3820 = vpop.trf.xlu0
        %v3821 = vpop.trf.xlu0
        %v3822 = vpop.trf.xlu0
        %v3823 = vpop.trf.xlu0
        %v3824 = vpop.trf.xlu0
        %v3826 = vsel %vm1691, %v3801, 0
        %v3829 = vsel %vm1691, %v3802, 0
        %v3832 = vsel %vm1691, %v3803, 0
        %v3835 = vsel %vm1691, %v3804, 0
        %v3838 = vsel %vm1691, %v3805, 0
        %v3841 = vsel %vm1691, %v3806, 0
        %v3844 = vsel %vm1691, %v3807, 0
        %v3847 = vsel %vm1691, %v3808, 0
        %v3850 = vsel %vm1691, %v3817, 0
        %v3853 = vsel %vm1691, %v3818, 0
        %v3856 = vsel %vm1691, %v3819, 0
        %v3859 = vsel %vm1691, %v3820, 0
        %v3862 = vsel %vm1691, %v3821, 0
        %v3865 = vsel %vm1691, %v3822, 0
        %v3868 = vsel %vm1691, %v3823, 0
        %v3871 = vsel %vm1691, %v3824, 0
        %3873 = vmatprep.subr.bf16.mxu0 %v3788
        %3874 = vmatpush1.bf16.msra.mxu0 %v3787
        %3875 = vmatprep.subr.bf16.mxu0 0
        %3876 = vmatpush1.bf16.msra.mxu0 0
        %3877 = vmatprep.subr.bf16.mxu0 0
        %3878 = vmatpush1.bf16.msra.mxu0 0
        %3879 = vmatprep.subr.bf16.mxu0 0
        %3880 = vmatpush1.bf16.msra.mxu0 0
        %3881 = vmatprep.subr.bf16.mxu0 0
        %3882 = vmatpush1.bf16.msra.mxu0 0
        %3883 = vmatprep.subr.bf16.mxu0 0
        %3884 = vmatpush1.bf16.msra.mxu0 0
        %3885 = vmatprep.subr.bf16.mxu0 0
        %3886 = vmatpush1.bf16.msra.mxu0 0
        %3887 = vmatprep.subr.bf16.mxu0 0
        %3888 = vmatpush1.bf16.msra.mxu0 0
        %3889 = vmatprep.subr.bf16.mxu0 0
        %3890 = vmatpush1.bf16.msra.mxu0 0
        %3891 = vmatprep.subr.bf16.mxu0 0
        %3892 = vmatpush1.bf16.msra.mxu0 0
        %3893 = vmatprep.subr.bf16.mxu0 0
        %3894 = vmatpush1.bf16.msra.mxu0 0
        %3895 = vmatprep.subr.bf16.mxu0 0
        %3896 = vmatpush1.bf16.msra.mxu0 0
        %3897 = vmatprep.subr.bf16.mxu0 0
        %3898 = vmatpush1.bf16.msra.mxu0 0
        %3899 = vmatprep.subr.bf16.mxu0 0
        %3900 = vmatpush1.bf16.msra.mxu0 0
        %3901 = vmatprep.subr.bf16.mxu0 0
        %3902 = vmatpush1.bf16.msra.mxu0 0
        %3903 = vmatprep.subr.bf16.mxu0 0
        %3904 = vmatpush1.bf16.msra.mxu0 0
        %3905 = vmatprep.mubr.bf16.mxu0 0
        %3906 = vmatmul.mubr.bf16.gmra.mrb[0].mxu0 %v3826
        %v3907 = vpop.f32.mrb[0].mxu0
        %v3908 = vadd.f32 0.0, %v3907
        %v3909 = vpop.f32.mrb[0].mxu0
        %v3910 = vadd.f32 0.0, %v3909
        %v3911 = vpop.f32.mrb[0].mxu0
        %v3912 = vadd.f32 0.0, %v3911
        %v3913 = vpop.f32.mrb[0].mxu0
        %v3914 = vadd.f32 0.0, %v3913
        %3915 = vmatprep.mubr.bf16.mxu0 0
        %3916 = vmatmul.mubr.bf16.gmra.mrb[0].mxu0 %v3829
        %v3917 = vpop.f32.mrb[0].mxu0
        %v3918 = vadd.f32 0.0, %v3917
        %v3919 = vpop.f32.mrb[0].mxu0
        %v3920 = vadd.f32 0.0, %v3919
        %v3921 = vpop.f32.mrb[0].mxu0
        %v3922 = vadd.f32 0.0, %v3921
        %v3923 = vpop.f32.mrb[0].mxu0
        %v3924 = vadd.f32 0.0, %v3923
        %3925 = vmatprep.mubr.bf16.mxu0 0
        %3926 = vmatmul.mubr.bf16.gmra.mrb[0].mxu0 %v3832
        %v3927 = vpop.f32.mrb[0].mxu0
        %v3928 = vadd.f32 0.0, %v3927
        %v3929 = vpop.f32.mrb[0].mxu0
        %v3930 = vadd.f32 0.0, %v3929
        %v3931 = vpop.f32.mrb[0].mxu0
        %v3932 = vadd.f32 0.0, %v3931
        %v3933 = vpop.f32.mrb[0].mxu0
        %v3934 = vadd.f32 0.0, %v3933
        %3935 = vmatprep.mubr.bf16.mxu0 0
        %3936 = vmatmul.mubr.bf16.gmra.mrb[0].mxu0 %v3835
        %v3937 = vpop.f32.mrb[0].mxu0
        %v3938 = vadd.f32 0.0, %v3937
        %v3939 = vpop.f32.mrb[0].mxu0
        %v3940 = vadd.f32 0.0, %v3939
        %v3941 = vpop.f32.mrb[0].mxu0
        %v3942 = vadd.f32 0.0, %v3941
        %v3943 = vpop.f32.mrb[0].mxu0
        %v3944 = vadd.f32 0.0, %v3943
        %3945 = vmatprep.mubr.bf16.mxu0 0
        %3946 = vmatmul.mubr.bf16.gmra.mrb[0].mxu0 %v3838
        %v3947 = vpop.f32.mrb[0].mxu0
        %v3948 = vadd.f32 0.0, %v3947
        %v3949 = vpop.f32.mrb[0].mxu0
        %v3950 = vadd.f32 0.0, %v3949
        %v3951 = vpop.f32.mrb[0].mxu0
        %v3952 = vadd.f32 0.0, %v3951
        %v3953 = vpop.f32.mrb[0].mxu0
        %v3954 = vadd.f32 0.0, %v3953
        %3955 = vmatprep.mubr.bf16.mxu0 0
        %3956 = vmatmul.mubr.bf16.gmra.mrb[0].mxu0 %v3841
        %v3957 = vpop.f32.mrb[0].mxu0
        %v3958 = vadd.f32 0.0, %v3957
        %v3959 = vpop.f32.mrb[0].mxu0
        %v3960 = vadd.f32 0.0, %v3959
        %v3961 = vpop.f32.mrb[0].mxu0
        %v3962 = vadd.f32 0.0, %v3961
        %v3963 = vpop.f32.mrb[0].mxu0
        %v3964 = vadd.f32 0.0, %v3963
        %3965 = vmatprep.mubr.bf16.mxu0 0
        %3966 = vmatmul.mubr.bf16.gmra.mrb[0].mxu0 %v3844
        %v3967 = vpop.f32.mrb[0].mxu0
        %v3968 = vadd.f32 0.0, %v3967
        %v3969 = vpop.f32.mrb[0].mxu0
        %v3970 = vadd.f32 0.0, %v3969
        %v3971 = vpop.f32.mrb[0].mxu0
        %v3972 = vadd.f32 0.0, %v3971
        %v3973 = vpop.f32.mrb[0].mxu0
        %v3974 = vadd.f32 0.0, %v3973
        %3975 = vmatprep.mubr.bf16.mxu0 0
        %3976 = vmatmul.mubr.bf16.gmra.mrb[0].mxu0 %v3847
        %v3977 = vpop.f32.mrb[0].mxu0
        %v3978 = vadd.f32 0.0, %v3977
        %v3979 = vpop.f32.mrb[0].mxu0
        %v3980 = vadd.f32 0.0, %v3979
        %v3981 = vpop.f32.mrb[0].mxu0
        %v3982 = vadd.f32 0.0, %v3981
        %v3983 = vpop.f32.mrb[0].mxu0
        %v3984 = vadd.f32 0.0, %v3983
        %3985 = vmatprep.mubr.bf16.mxu0 0
        %3986 = vmatmul.mubr.bf16.gmra.mrb[0].mxu0 %v3850
        %v3987 = vpop.f32.mrb[0].mxu0
        %v3988 = vadd.f32 0.0, %v3987
        %v3989 = vpop.f32.mrb[0].mxu0
        %v3990 = vadd.f32 0.0, %v3989
        %v3991 = vpop.f32.mrb[0].mxu0
        %v3992 = vadd.f32 0.0, %v3991
        %v3993 = vpop.f32.mrb[0].mxu0
        %v3994 = vadd.f32 0.0, %v3993
        %3995 = vmatprep.mubr.bf16.mxu0 0
        %3996 = vmatmul.mubr.bf16.gmra.mrb[0].mxu0 %v3853
        %v3997 = vpop.f32.mrb[0].mxu0
        %v3998 = vadd.f32 0.0, %v3997
        %v3999 = vpop.f32.mrb[0].mxu0
        %v4000 = vadd.f32 0.0, %v3999
        %v4001 = vpop.f32.mrb[0].mxu0
        %v4002 = vadd.f32 0.0, %v4001
        %v4003 = vpop.f32.mrb[0].mxu0
        %v4004 = vadd.f32 0.0, %v4003
        %4005 = vmatprep.mubr.bf16.mxu0 0
        %4006 = vmatmul.mubr.bf16.gmra.mrb[0].mxu0 %v3856
        %v4007 = vpop.f32.mrb[0].mxu0
        %v4008 = vadd.f32 0.0, %v4007
        %v4009 = vpop.f32.mrb[0].mxu0
        %v4010 = vadd.f32 0.0, %v4009
        %v4011 = vpop.f32.mrb[0].mxu0
        %v4012 = vadd.f32 0.0, %v4011
        %v4013 = vpop.f32.mrb[0].mxu0
        %v4014 = vadd.f32 0.0, %v4013
        %4015 = vmatprep.mubr.bf16.mxu0 0
        %4016 = vmatmul.mubr.bf16.gmra.mrb[0].mxu0 %v3859
        %v4017 = vpop.f32.mrb[0].mxu0
        %v4018 = vadd.f32 0.0, %v4017
        %v4019 = vpop.f32.mrb[0].mxu0
        %v4020 = vadd.f32 0.0, %v4019
        %v4021 = vpop.f32.mrb[0].mxu0
        %v4022 = vadd.f32 0.0, %v4021
        %v4023 = vpop.f32.mrb[0].mxu0
        %v4024 = vadd.f32 0.0, %v4023
        %4025 = vmatprep.mubr.bf16.mxu0 0
        %4026 = vmatmul.mubr.bf16.gmra.mrb[0].mxu0 %v3862
        %v4027 = vpop.f32.mrb[0].mxu0
        %v4028 = vadd.f32 0.0, %v4027
        %v4029 = vpop.f32.mrb[0].mxu0
        %v4030 = vadd.f32 0.0, %v4029
        %v4031 = vpop.f32.mrb[0].mxu0
        %v4032 = vadd.f32 0.0, %v4031
        %v4033 = vpop.f32.mrb[0].mxu0
        %v4034 = vadd.f32 0.0, %v4033
        %4035 = vmatprep.mubr.bf16.mxu0 0
        %4036 = vmatmul.mubr.bf16.gmra.mrb[0].mxu0 %v3865
        %v4037 = vpop.f32.mrb[0].mxu0
        %v4038 = vadd.f32 0.0, %v4037
        %v4039 = vpop.f32.mrb[0].mxu0
        %v4040 = vadd.f32 0.0, %v4039
        %v4041 = vpop.f32.mrb[0].mxu0
        %v4042 = vadd.f32 0.0, %v4041
        %v4043 = vpop.f32.mrb[0].mxu0
        %v4044 = vadd.f32 0.0, %v4043
        %4045 = vmatprep.mubr.bf16.mxu0 0
        %4046 = vmatmul.mubr.bf16.gmra.mrb[0].mxu0 %v3868
        %v4047 = vpop.f32.mrb[0].mxu0
        %v4048 = vadd.f32 0.0, %v4047
        %v4049 = vpop.f32.mrb[0].mxu0
        %v4050 = vadd.f32 0.0, %v4049
        %v4051 = vpop.f32.mrb[0].mxu0
        %v4052 = vadd.f32 0.0, %v4051
        %v4053 = vpop.f32.mrb[0].mxu0
        %v4054 = vadd.f32 0.0, %v4053
        %4055 = vmatprep.mubr.bf16.mxu0 0
        %4056 = vmatmul.mubr.bf16.gmra.mrb[0].mxu0 %v3871
        %v4057 = vpop.f32.mrb[0].mxu0
        %v4058 = vadd.f32 0.0, %v4057
        %v4059 = vpop.f32.mrb[0].mxu0
        %v4060 = vadd.f32 0.0, %v4059
        %v4061 = vpop.f32.mrb[0].mxu0
        %v4062 = vadd.f32 0.0, %v4061
        %v4063 = vpop.f32.mrb[0].mxu0
        %v4064 = vadd.f32 0.0, %v4063
        %4065 = vdwg.mxu0
        %v4066 = vmul.f32 %v3908, 0.25
        %v4067 = vmul.f32 %v3910, 0.25
        %v4068 = vmul.f32 %v3912, 0.25
        %v4069 = vmul.f32 %v3914, 0.25
        %v4070 = vmul.f32 %v3918, 0.25
        %v4071 = vmul.f32 %v3920, 0.25
        %v4072 = vmul.f32 %v3922, 0.25
        %v4073 = vmul.f32 %v3924, 0.25
        %v4074 = vmul.f32 %v3928, 0.25
        %v4075 = vmul.f32 %v3930, 0.25
        %v4076 = vmul.f32 %v3932, 0.25
        %v4077 = vmul.f32 %v3934, 0.25
        %v4078 = vmul.f32 %v3938, 0.25
        %v4079 = vmul.f32 %v3940, 0.25
        %v4080 = vmul.f32 %v3942, 0.25
        %v4081 = vmul.f32 %v3944, 0.25
        %v4082 = vmul.f32 %v3948, 0.25
        %v4083 = vmul.f32 %v3950, 0.25
        %v4084 = vmul.f32 %v3952, 0.25
        %v4085 = vmul.f32 %v3954, 0.25
        %v4086 = vmul.f32 %v3958, 0.25
        %v4087 = vmul.f32 %v3960, 0.25
        %v4088 = vmul.f32 %v3962, 0.25
        %v4089 = vmul.f32 %v3964, 0.25
        %v4090 = vmul.f32 %v3968, 0.25
        %v4091 = vmul.f32 %v3970, 0.25
        %v4092 = vmul.f32 %v3972, 0.25
        %v4093 = vmul.f32 %v3974, 0.25
        %v4094 = vmul.f32 %v3978, 0.25
        %v4095 = vmul.f32 %v3980, 0.25
        %v4096 = vmul.f32 %v3982, 0.25
        %v4097 = vmul.f32 %v3984, 0.25
        %v4098 = vmul.f32 %v3988, 0.25
        %v4099 = vmul.f32 %v3990, 0.25
        %v4100 = vmul.f32 %v3992, 0.25
        %v4101 = vmul.f32 %v3994, 0.25
        %v4102 = vmul.f32 %v3998, 0.25
        %v4103 = vmul.f32 %v4000, 0.25
        %v4104 = vmul.f32 %v4002, 0.25
        %v4105 = vmul.f32 %v4004, 0.25
        %v4106 = vmul.f32 %v4008, 0.25
        %v4107 = vmul.f32 %v4010, 0.25
        %v4108 = vmul.f32 %v4012, 0.25
        %v4109 = vmul.f32 %v4014, 0.25
        %v4110 = vmul.f32 %v4018, 0.25
        %v4111 = vmul.f32 %v4020, 0.25
        %v4112 = vmul.f32 %v4022, 0.25
        %v4113 = vmul.f32 %v4024, 0.25
        %v4114 = vmul.f32 %v4028, 0.25
        %v4115 = vmul.f32 %v4030, 0.25
        %v4116 = vmul.f32 %v4032, 0.25
        %v4117 = vmul.f32 %v4034, 0.25
        %v4118 = vmul.f32 %v4038, 0.25
        %v4119 = vmul.f32 %v4040, 0.25
        %v4120 = vmul.f32 %v4042, 0.25
        %v4121 = vmul.f32 %v4044, 0.25
        %v4122 = vmul.f32 %v4048, 0.25
        %v4123 = vmul.f32 %v4050, 0.25
        %v4124 = vmul.f32 %v4052, 0.25
        %v4125 = vmul.f32 %v4054, 0.25
        %v4126 = vmul.f32 %v4058, 0.25
        %v4127 = vmul.f32 %v4060, 0.25
        %v4128 = vmul.f32 %v4062, 0.25
        %v4129 = vmul.f32 %v4064, 0.25
        %v4130 = vmax.f32 %v4066, %v4070
        %v4131 = vmax.f32 %v4068, %v4072
        %v4132 = vmax.f32 %v4130, %v4074
        %v4133 = vmax.f32 %v4131, %v4076
        %v4134 = vmax.f32 %v4132, %v4078
        %v4135 = vmax.f32 %v4133, %v4080
        %v4136 = vmax.f32 %v4134, %v4082
        %v4137 = vmax.f32 %v4135, %v4084
        %v4138 = vmax.f32 %v4136, %v4086
        %v4139 = vmax.f32 %v4137, %v4088
        %v4140 = vmax.f32 %v4138, %v4090
        %v4141 = vmax.f32 %v4139, %v4092
        %v4142 = vmax.f32 %v4140, %v4094
        %v4143 = vmax.f32 %v4141, %v4096
        %v4144 = vmax.f32 %v4142, %v4098
        %v4145 = vmax.f32 %v4143, %v4100
        %v4146 = vmax.f32 %v4144, %v4102
        %v4147 = vmax.f32 %v4145, %v4104
        %v4148 = vmax.f32 %v4146, %v4106
        %v4149 = vmax.f32 %v4147, %v4108
        %v4150 = vmax.f32 %v4148, %v4110
        %v4151 = vmax.f32 %v4149, %v4112
        %v4152 = vmax.f32 %v4150, %v4114
        %v4153 = vmax.f32 %v4151, %v4116
        %v4154 = vmax.f32 %v4152, %v4118
        %v4155 = vmax.f32 %v4153, %v4120
        %v4156 = vmax.f32 %v4154, %v4122
        %v4157 = vmax.f32 %v4155, %v4124
        %v4158 = vmax.f32 %v4156, %v4126
        %v4159 = vmax.f32 %v4157, %v4128
        %v4160 = vmax.f32 %v4158, %v4159
        %v4161 = vrot.slane %v4160, 4
        %v4162 = vmax.f32 %v4160, %v4161
        %v4163 = vrot.slane %v4162, 2
        %v4164 = vmax.f32 %v4162, %v4163
        %v4165 = vrot.slane %v4164, 1
        %v4166 = vmax.f32 %v4164, %v4165
        %v4167 = vmax.f32 %v4067, %v4071
        %v4168 = vmax.f32 %v4069, %v4073
        %v4169 = vmax.f32 %v4167, %v4075
        %v4170 = vmax.f32 %v4168, %v4077
        %v4171 = vmax.f32 %v4169, %v4079
        %v4172 = vmax.f32 %v4170, %v4081
        %v4173 = vmax.f32 %v4171, %v4083
        %v4174 = vmax.f32 %v4172, %v4085
        %v4175 = vmax.f32 %v4173, %v4087
        %v4176 = vmax.f32 %v4174, %v4089
        %v4177 = vmax.f32 %v4175, %v4091
        %v4178 = vmax.f32 %v4176, %v4093
        %v4179 = vmax.f32 %v4177, %v4095
        %v4180 = vmax.f32 %v4178, %v4097
        %v4181 = vmax.f32 %v4179, %v4099
        %v4182 = vmax.f32 %v4180, %v4101
        %v4183 = vmax.f32 %v4181, %v4103
        %v4184 = vmax.f32 %v4182, %v4105
        %v4185 = vmax.f32 %v4183, %v4107
        %v4186 = vmax.f32 %v4184, %v4109
        %v4187 = vmax.f32 %v4185, %v4111
        %v4188 = vmax.f32 %v4186, %v4113
        %v4189 = vmax.f32 %v4187, %v4115
        %v4190 = vmax.f32 %v4188, %v4117
        %v4191 = vmax.f32 %v4189, %v4119
        %v4192 = vmax.f32 %v4190, %v4121
        %v4193 = vmax.f32 %v4191, %v4123
        %v4194 = vmax.f32 %v4192, %v4125
        %v4195 = vmax.f32 %v4193, %v4127
        %v4196 = vmax.f32 %v4194, %v4129
        %v4197 = vmax.f32 %v4195, %v4196
        %v4198 = vrot.slane %v4197, 4
        %v4199 = vmax.f32 %v4197, %v4198
        %v4200 = vrot.slane %v4199, 2
        %v4201 = vmax.f32 %v4199, %v4200
        %v4202 = vrot.slane %v4201, 1
        %v4203 = vmax.f32 %v4201, %v4202
        %v4204 = vsub.f32 %v4066, %v4166
        %v4205 = vsub.f32 %v4067, %v4203
        %v4206 = vsub.f32 %v4068, %v4166
        %v4207 = vsub.f32 %v4069, %v4203
        %v4208 = vsub.f32 %v4070, %v4166
        %v4209 = vsub.f32 %v4071, %v4203
        %v4210 = vsub.f32 %v4072, %v4166
        %v4211 = vsub.f32 %v4073, %v4203
        %v4212 = vsub.f32 %v4074, %v4166
        %v4213 = vsub.f32 %v4075, %v4203
        %v4214 = vsub.f32 %v4076, %v4166
        %v4215 = vsub.f32 %v4077, %v4203
        %v4216 = vsub.f32 %v4078, %v4166
        %v4217 = vsub.f32 %v4079, %v4203
        %v4218 = vsub.f32 %v4080, %v4166
        %v4219 = vsub.f32 %v4081, %v4203
        %v4220 = vsub.f32 %v4082, %v4166
        %v4221 = vsub.f32 %v4083, %v4203
        %v4222 = vsub.f32 %v4084, %v4166
        %v4223 = vsub.f32 %v4085, %v4203
        %v4224 = vsub.f32 %v4086, %v4166
        %v4225 = vsub.f32 %v4087, %v4203
        %v4226 = vsub.f32 %v4088, %v4166
        %v4227 = vsub.f32 %v4089, %v4203
        %v4228 = vsub.f32 %v4090, %v4166
        %v4229 = vsub.f32 %v4091, %v4203
        %v4230 = vsub.f32 %v4092, %v4166
        %v4231 = vsub.f32 %v4093, %v4203
        %v4232 = vsub.f32 %v4094, %v4166
        %v4233 = vsub.f32 %v4095, %v4203
        %v4234 = vsub.f32 %v4096, %v4166
        %v4235 = vsub.f32 %v4097, %v4203
        %v4236 = vsub.f32 %v4098, %v4166
        %v4237 = vsub.f32 %v4099, %v4203
        %v4238 = vsub.f32 %v4100, %v4166
        %v4239 = vsub.f32 %v4101, %v4203
        %v4240 = vsub.f32 %v4102, %v4166
        %v4241 = vsub.f32 %v4103, %v4203
        %v4242 = vsub.f32 %v4104, %v4166
        %v4243 = vsub.f32 %v4105, %v4203
        %v4244 = vsub.f32 %v4106, %v4166
        %v4245 = vsub.f32 %v4107, %v4203
        %v4246 = vsub.f32 %v4108, %v4166
        %v4247 = vsub.f32 %v4109, %v4203
        %v4248 = vsub.f32 %v4110, %v4166
        %v4249 = vsub.f32 %v4111, %v4203
        %v4250 = vsub.f32 %v4112, %v4166
        %v4251 = vsub.f32 %v4113, %v4203
        %v4252 = vsub.f32 %v4114, %v4166
        %v4253 = vsub.f32 %v4115, %v4203
        %v4254 = vsub.f32 %v4116, %v4166
        %v4255 = vsub.f32 %v4117, %v4203
        %v4256 = vsub.f32 %v4118, %v4166
        %v4257 = vsub.f32 %v4119, %v4203
        %v4258 = vsub.f32 %v4120, %v4166
        %v4259 = vsub.f32 %v4121, %v4203
        %v4260 = vsub.f32 %v4122, %v4166
        %v4261 = vsub.f32 %v4123, %v4203
        %v4262 = vsub.f32 %v4124, %v4166
        %v4263 = vsub.f32 %v4125, %v4203
        %v4264 = vsub.f32 %v4126, %v4166
        %v4265 = vsub.f32 %v4127, %v4203
        %v4266 = vsub.f32 %v4128, %v4166
        %v4267 = vsub.f32 %v4129, %v4203
        %v4268 = vpack.c.bf16 %v4206, %v4204
        %v4269 = vpack.c.bf16 %v4207, %v4205
        %v4270 = vpack.c.bf16 %v4210, %v4208
        %v4271 = vpack.c.bf16 %v4211, %v4209
        %v4272 = vpack.c.bf16 %v4214, %v4212
        %v4273 = vpack.c.bf16 %v4215, %v4213
        %v4274 = vpack.c.bf16 %v4218, %v4216
        %v4275 = vpack.c.bf16 %v4219, %v4217
        %v4276 = vpack.c.bf16 %v4222, %v4220
        %v4277 = vpack.c.bf16 %v4223, %v4221
        %v4278 = vpack.c.bf16 %v4226, %v4224
        %v4279 = vpack.c.bf16 %v4227, %v4225
        %v4280 = vpack.c.bf16 %v4230, %v4228
        %v4281 = vpack.c.bf16 %v4231, %v4229
        %v4282 = vpack.c.bf16 %v4234, %v4232
        %v4283 = vpack.c.bf16 %v4235, %v4233
        %v4284 = vpack.c.bf16 %v4238, %v4236
        %v4285 = vpack.c.bf16 %v4239, %v4237
        %v4286 = vpack.c.bf16 %v4242, %v4240
        %v4287 = vpack.c.bf16 %v4243, %v4241
        %v4288 = vpack.c.bf16 %v4246, %v4244
        %v4289 = vpack.c.bf16 %v4247, %v4245
        %v4290 = vpack.c.bf16 %v4250, %v4248
        %v4291 = vpack.c.bf16 %v4251, %v4249
        %v4292 = vpack.c.bf16 %v4254, %v4252
        %v4293 = vpack.c.bf16 %v4255, %v4253
        %v4294 = vpack.c.bf16 %v4258, %v4256
        %v4295 = vpack.c.bf16 %v4259, %v4257
        %v4296 = vpack.c.bf16 %v4262, %v4260
        %v4297 = vpack.c.bf16 %v4263, %v4261
        %v4298 = vpack.c.bf16 %v4266, %v4264
        %v4299 = vpack.c.bf16 %v4267, %v4265
        %v4301 = vmul.bf16 %v4268, 1069105081
        %v4302 = vpow.bf16.pop %v4301
        %v4304 = vmul.bf16 %v4269, 1069105081
        %v4305 = vpow.bf16.pop %v4304
        %v4307 = vmul.bf16 %v4270, 1069105081
        %v4308 = vpow.bf16.pop %v4307
        %v4310 = vmul.bf16 %v4271, 1069105081
        %v4311 = vpow.bf16.pop %v4310
        %v4313 = vmul.bf16 %v4272, 1069105081
        %v4314 = vpow.bf16.pop %v4313
        %v4316 = vmul.bf16 %v4273, 1069105081
        %v4317 = vpow.bf16.pop %v4316
        %v4319 = vmul.bf16 %v4274, 1069105081
        %v4320 = vpow.bf16.pop %v4319
        %v4322 = vmul.bf16 %v4275, 1069105081
        %v4323 = vpow.bf16.pop %v4322
        %v4325 = vmul.bf16 %v4276, 1069105081
        %v4326 = vpow.bf16.pop %v4325
        %v4328 = vmul.bf16 %v4277, 1069105081
        %v4329 = vpow.bf16.pop %v4328
        %v4331 = vmul.bf16 %v4278, 1069105081
        %v4332 = vpow.bf16.pop %v4331
        %v4334 = vmul.bf16 %v4279, 1069105081
        %v4335 = vpow.bf16.pop %v4334
        %v4337 = vmul.bf16 %v4280, 1069105081
        %v4338 = vpow.bf16.pop %v4337
        %v4340 = vmul.bf16 %v4281, 1069105081
        %v4341 = vpow.bf16.pop %v4340
        %v4343 = vmul.bf16 %v4282, 1069105081
        %v4344 = vpow.bf16.pop %v4343
        %v4346 = vmul.bf16 %v4283, 1069105081
        %v4347 = vpow.bf16.pop %v4346
        %v4349 = vmul.bf16 %v4284, 1069105081
        %v4350 = vpow.bf16.pop %v4349
        %v4352 = vmul.bf16 %v4285, 1069105081
        %v4353 = vpow.bf16.pop %v4352
        %v4355 = vmul.bf16 %v4286, 1069105081
        %v4356 = vpow.bf16.pop %v4355
        %v4358 = vmul.bf16 %v4287, 1069105081
        %v4359 = vpow.bf16.pop %v4358
        %v4361 = vmul.bf16 %v4288, 1069105081
        %v4362 = vpow.bf16.pop %v4361
        %v4364 = vmul.bf16 %v4289, 1069105081
        %v4365 = vpow.bf16.pop %v4364
        %v4367 = vmul.bf16 %v4290, 1069105081
        %v4368 = vpow.bf16.pop %v4367
        %v4370 = vmul.bf16 %v4291, 1069105081
        %v4371 = vpow.bf16.pop %v4370
        %v4373 = vmul.bf16 %v4292, 1069105081
        %v4374 = vpow.bf16.pop %v4373
        %v4376 = vmul.bf16 %v4293, 1069105081
        %v4377 = vpow.bf16.pop %v4376
        %v4379 = vmul.bf16 %v4294, 1069105081
        %v4380 = vpow.bf16.pop %v4379
        %v4382 = vmul.bf16 %v4295, 1069105081
        %v4383 = vpow.bf16.pop %v4382
        %v4385 = vmul.bf16 %v4296, 1069105081
        %v4386 = vpow.bf16.pop %v4385
        %v4388 = vmul.bf16 %v4297, 1069105081
        %v4389 = vpow.bf16.pop %v4388
        %v4391 = vmul.bf16 %v4298, 1069105081
        %v4392 = vpow.bf16.pop %v4391
        %v4394 = vmul.bf16 %v4299, 1069105081
        %v4395 = vpow.bf16.pop %v4394
        %4396 = vmatprep.subr.bf16.mxu0 %v4305
        %4397 = vmatpush1.bf16.msra.mxu0 %v4302
        %4398 = vmatprep.subr.bf16.mxu0 %v4311
        %4399 = vmatpush1.bf16.msra.mxu0 %v4308
        %4400 = vmatprep.subr.bf16.mxu0 %v4317
        %4401 = vmatpush1.bf16.msra.mxu0 %v4314
        %4402 = vmatprep.subr.bf16.mxu0 %v4323
        %4403 = vmatpush1.bf16.msra.mxu0 %v4320
        %4404 = vmatprep.subr.bf16.mxu0 %v4329
        %4405 = vmatpush1.bf16.msra.mxu0 %v4326
        %4406 = vmatprep.subr.bf16.mxu0 %v4335
        %4407 = vmatpush1.bf16.msra.mxu0 %v4332
        %4408 = vmatprep.subr.bf16.mxu0 %v4341
        %4409 = vmatpush1.bf16.msra.mxu0 %v4338
        %4410 = vmatprep.subr.bf16.mxu0 %v4347
        %4411 = vmatpush1.bf16.msra.mxu0 %v4344
        %4412 = vmatprep.subr.bf16.mxu0 %v4353
        %4413 = vmatpush1.bf16.msra.mxu0 %v4350
        %4414 = vmatprep.subr.bf16.mxu0 %v4359
        %4415 = vmatpush1.bf16.msra.mxu0 %v4356
        %4416 = vmatprep.subr.bf16.mxu0 %v4365
        %4417 = vmatpush1.bf16.msra.mxu0 %v4362
        %4418 = vmatprep.subr.bf16.mxu0 %v4371
        %4419 = vmatpush1.bf16.msra.mxu0 %v4368
        %4420 = vmatprep.subr.bf16.mxu0 %v4377
        %4421 = vmatpush1.bf16.msra.mxu0 %v4374
        %4422 = vmatprep.subr.bf16.mxu0 %v4383
        %4423 = vmatpush1.bf16.msra.mxu0 %v4380
        %4424 = vmatprep.subr.bf16.mxu0 %v4389
        %4425 = vmatpush1.bf16.msra.mxu0 %v4386
        %4426 = vmatprep.subr.bf16.mxu0 %v4395
        %4427 = vmatpush1.bf16.msra.mxu0 %v4392
        %4428 = vmatprep.mubr.bf16.mxu0 1065369472
        %4429 = vmatmul.mubr.bf16.gmra.mrb[0].mxu0 1065369472
        %v4430 = vpop.f32.mrb[0].mxu0
        %v4431 = vadd.f32 0.0, %v4430
        %v4432 = vpop.f32.mrb[0].mxu0
        %v4433 = vadd.f32 0.0, %v4432
        %v4434 = vpop.f32.mrb[0].mxu0
        %v4435 = vpop.f32.mrb[0].mxu0
        %4436 = vdwg.mxu0
        %4437 = vmatprep.subr.bf16.mxu0 %v4305
        %4438 = vmatpush1.bf16.msra.mxu0 %v4302
        %4439 = vmatprep.subr.bf16.mxu0 %v4311
        %4440 = vmatpush1.bf16.msra.mxu0 %v4308
        %4441 = vmatprep.subr.bf16.mxu0 %v4317
        %4442 = vmatpush1.bf16.msra.mxu0 %v4314
        %4443 = vmatprep.subr.bf16.mxu0 %v4323
        %4444 = vmatpush1.bf16.msra.mxu0 %v4320
        %4445 = vmatprep.subr.bf16.mxu0 %v4329
        %4446 = vmatpush1.bf16.msra.mxu0 %v4326
        %4447 = vmatprep.subr.bf16.mxu0 %v4335
        %4448 = vmatpush1.bf16.msra.mxu0 %v4332
        %4449 = vmatprep.subr.bf16.mxu0 %v4341
        %4450 = vmatpush1.bf16.msra.mxu0 %v4338
        %4451 = vmatprep.subr.bf16.mxu0 %v4347
        %4452 = vmatpush1.bf16.msra.mxu0 %v4344
        %4453 = vmatprep.subr.bf16.mxu0 %v4353
        %4454 = vmatpush1.bf16.msra.mxu0 %v4350
        %4455 = vmatprep.subr.bf16.mxu0 %v4359
        %4456 = vmatpush1.bf16.msra.mxu0 %v4356
        %4457 = vmatprep.subr.bf16.mxu0 %v4365
        %4458 = vmatpush1.bf16.msra.mxu0 %v4362
        %4459 = vmatprep.subr.bf16.mxu0 %v4371
        %4460 = vmatpush1.bf16.msra.mxu0 %v4368
        %4461 = vmatprep.subr.bf16.mxu0 %v4377
        %4462 = vmatpush1.bf16.msra.mxu0 %v4374
        %4463 = vmatprep.subr.bf16.mxu0 %v4383
        %4464 = vmatpush1.bf16.msra.mxu0 %v4380
        %4465 = vmatprep.subr.bf16.mxu0 %v4389
        %4466 = vmatpush1.bf16.msra.mxu0 %v4386
        %4467 = vmatprep.subr.bf16.mxu0 %v4395
        %4468 = vmatpush1.bf16.msra.mxu0 %v4392
        %4469 = vmatprep.mubr.bf16.mxu0 %v3792
        %4470 = vmatmul.mubr.bf16.gmra.mrb[0].mxu0 %v3791
        %v4471 = vpop.f32.mrb[0].mxu0
        %v4472 = vadd.f32 0.0, %v4471
        %v4473 = vpop.f32.mrb[0].mxu0
        %v4474 = vadd.f32 0.0, %v4473
        %v4475 = vpop.f32.mrb[0].mxu0
        %v4476 = vadd.f32 0.0, %v4475
        %v4477 = vpop.f32.mrb[0].mxu0
        %v4478 = vadd.f32 0.0, %v4477
        %4479 = vdwg.mxu0
        %v4480 = vrcp.pop %v4431
        %v4481 = vrcp.pop %v4433
        %v4482 = vlaneseq
        %v4483 = vshrl.u32 %v4482, 7
        %v4484 = vsub.s32 0, %v4483
        %v4485 = vrot.slane %v4480, %v4484
        %v4486 = vlaneseq
        %v4487 = vshrl.u32 %v4486, 7
        %v4488 = vsub.s32 0, %v4487
        %v4489 = vrot.slane %v4481, %v4488
        %v4490 = vmul.f32 %v4472, %v4485
        %v4491 = vmul.f32 %v4474, %v4489
        %v4492 = vmul.f32 %v4476, %v4485
        %v4493 = vmul.f32 %v4478, %v4489
        %4494 = vst [vmem:[%s405 + $0x60] sm:$0xff] %v4490
        %4495 = vst [vmem:[%s405 + $0x68] sm:$0xff] %v4491
        %4496 = vst [vmem:[%s405 + $0x70] sm:$0xff] %v4492
        %4497 = vst [vmem:[%s405 + $0x78] sm:$0xff] %v4493
        %v4498 = vld [vmem:[%s405] sm:$0xff]
        %v4499 = vld [vmem:[%s405 + $0x8] sm:$0xff]
        %v4500 = vld [vmem:[%s405 + $0x10] sm:$0xff]
        %v4501 = vld [vmem:[%s405 + $0x18] sm:$0xff]
        %v4502 = vld [vmem:[%s405 + $0x20] sm:$0xff]
        %v4503 = vld [vmem:[%s405 + $0x28] sm:$0xff]
        %v4504 = vld [vmem:[%s405 + $0x30] sm:$0xff]
        %v4505 = vld [vmem:[%s405 + $0x38] sm:$0xff]
        %v4506 = vld [vmem:[%s405 + $0x40] sm:$0xff]
        %v4507 = vld [vmem:[%s405 + $0x48] sm:$0xff]
        %v4508 = vld [vmem:[%s405 + $0x50] sm:$0xff]
        %v4509 = vld [vmem:[%s405 + $0x58] sm:$0xff]
        %v4510 = vld [vmem:[%s405 + $0x60] sm:$0xff]
        %v4511 = vld [vmem:[%s405 + $0x68] sm:$0xff]
        %v4512 = vld [vmem:[%s405 + $0x70] sm:$0xff]
        %v4513 = vld [vmem:[%s405 + $0x78] sm:$0xff]
        %v4514 = vpack.c.bf16 %v4500, %v4498
        %v4515 = vpack.c.bf16 %v4501, %v4499
        %v4516 = vpack.c.bf16 %v4504, %v4502
        %v4517 = vpack.c.bf16 %v4505, %v4503
        %v4518 = vpack.c.bf16 %v4508, %v4506
        %v4519 = vpack.c.bf16 %v4509, %v4507
        %v4520 = vpack.c.bf16 %v4512, %v4510
        %v4521 = vpack.c.bf16 %v4513, %v4511
        %v4522 = vld [vmem:[%s7] sm:$0xf]
        %v4523 = vld [vmem:[%s7 + $0x4] sm:$0xf]
        %v4524 = vld [vmem:[%s7 + $0x8] sm:$0xf]
        %v4525 = vld [vmem:[%s7 + $0xc] sm:$0xf]
        %v4526 = vld [vmem:[%s7 + $0x10] sm:$0xf]
        %v4527 = vld [vmem:[%s7 + $0x14] sm:$0xf]
        %v4528 = vld [vmem:[%s7 + $0x18] sm:$0xf]
        %v4529 = vld [vmem:[%s7 + $0x1c] sm:$0xf]
        %4530 = vset.pattern.permute.xlu0 3
        %4531 = vperm.xlu0 %4530, %v429
        %v4532 = vpop.permute.xlu0 %4531
        %4534 = vset.pattern.permute.xlu0 3
        %4535 = vperm.xlu0 %4534, %v430
        %v4536 = vpop.permute.xlu0 %4535
        %4538 = vset.pattern.permute.xlu0 3
        %4539 = vperm.xlu0 %4538, %v431
        %v4540 = vpop.permute.xlu0 %4539
        %4542 = vset.pattern.permute.xlu0 3
        %4543 = vperm.xlu0 %4542, %v432
        %v4544 = vpop.permute.xlu0 %4543
        %4546 = vset.pattern.permute.xlu0 3
        %4547 = vperm.xlu0 %4546, %v433
        %v4548 = vpop.permute.xlu0 %4547
        %4550 = vset.pattern.permute.xlu0 3
        %4551 = vperm.xlu0 %4550, %v434
        %v4552 = vpop.permute.xlu0 %4551
        %4554 = vset.pattern.permute.xlu0 3
        %4555 = vperm.xlu0 %4554, %v435
        %v4556 = vpop.permute.xlu0 %4555
        %4558 = vset.pattern.permute.xlu0 3
        %4559 = vperm.xlu0 %4558, %v436
        %v4560 = vpop.permute.xlu0 %4559
        %v4570 = vunpack.c.l.b16 %v4522
        %v4571 = vunpack.c.l.b16 %v4523
        %v4572 = vunpack.c.l.b16 %v4524
        %v4573 = vunpack.c.l.b16 %v4525
        %v4574 = vunpack.c.l.b16 %v4526
        %v4575 = vunpack.c.l.b16 %v4527
        %v4576 = vunpack.c.l.b16 %v4528
        %v4577 = vunpack.c.l.b16 %v4529
        %v4578 = vpack.c.b16 %v4571, %v4570
        %v4579 = vpack.c.b16 %v4573, %v4572
        %v4580 = vpack.c.b16 %v4575, %v4574
        %v4581 = vpack.c.b16 %v4577, %v4576
        %v4583 = vsel %vm465, %v4578, 0
        %v4586 = vsel %vm465, %v4579, 0
        %v4589 = vsel %vm465, %v4580, 0
        %v4592 = vsel %vm465, %v4581, 0
        %4594 = vmatprep.subr.bf16.mxu0 %v4515
        %4595 = vmatpush1.bf16.msra.mxu0 %v4514
        %4596 = vmatprep.subr.bf16.mxu0 %v4517
        %4597 = vmatpush1.bf16.msra.mxu0 %v4516
        %4598 = vmatprep.subr.bf16.mxu0 %v4519
        %4599 = vmatpush1.bf16.msra.mxu0 %v4518
        %4600 = vmatprep.subr.bf16.mxu0 %v4521
        %4601 = vmatpush1.bf16.msra.mxu0 %v4520
        %4602 = vmatprep.subr.bf16.mxu0 0
        %4603 = vmatpush1.bf16.msra.mxu0 0
        %4604 = vmatprep.subr.bf16.mxu0 0
        %4605 = vmatpush1.bf16.msra.mxu0 0
        %4606 = vmatprep.subr.bf16.mxu0 0
        %4607 = vmatpush1.bf16.msra.mxu0 0
        %4608 = vmatprep.subr.bf16.mxu0 0
        %4609 = vmatpush1.bf16.msra.mxu0 0
        %4610 = vmatprep.subr.bf16.mxu0 0
        %4611 = vmatpush1.bf16.msra.mxu0 0
        %4612 = vmatprep.subr.bf16.mxu0 0
        %4613 = vmatpush1.bf16.msra.mxu0 0
        %4614 = vmatprep.subr.bf16.mxu0 0
        %4615 = vmatpush1.bf16.msra.mxu0 0
        %4616 = vmatprep.subr.bf16.mxu0 0
        %4617 = vmatpush1.bf16.msra.mxu0 0
        %4618 = vmatprep.subr.bf16.mxu0 0
        %4619 = vmatpush1.bf16.msra.mxu0 0
        %4620 = vmatprep.subr.bf16.mxu0 0
        %4621 = vmatpush1.bf16.msra.mxu0 0
        %4622 = vmatprep.subr.bf16.mxu0 0
        %4623 = vmatpush1.bf16.msra.mxu0 0
        %4624 = vmatprep.subr.bf16.mxu0 0
        %4625 = vmatpush1.bf16.msra.mxu0 0
        %4626 = vmatprep.mubr.bf16.mxu0 0
        %4627 = vmatmul.mubr.bf16.gmra.mrb[0].mxu0 %v4583
        %v4628 = vpop.f32.mrb[0].mxu0
        %v4629 = vadd.f32 %v4532, %v4628
        %v4630 = vpop.f32.mrb[0].mxu0
        %v4631 = vadd.f32 %v4532, %v4630
        %v4632 = vpop.f32.mrb[0].mxu0
        %v4633 = vadd.f32 %v4536, %v4632
        %v4634 = vpop.f32.mrb[0].mxu0
        %v4635 = vadd.f32 %v4536, %v4634
        %4636 = vmatprep.mubr.bf16.mxu0 0
        %4637 = vmatmul.mubr.bf16.gmra.mrb[0].mxu0 %v4586
        %v4638 = vpop.f32.mrb[0].mxu0
        %v4639 = vadd.f32 %v4540, %v4638
        %v4640 = vpop.f32.mrb[0].mxu0
        %v4641 = vadd.f32 %v4540, %v4640
        %v4642 = vpop.f32.mrb[0].mxu0
        %v4643 = vadd.f32 %v4544, %v4642
        %v4644 = vpop.f32.mrb[0].mxu0
        %v4645 = vadd.f32 %v4544, %v4644
        %4646 = vmatprep.mubr.bf16.mxu0 0
        %4647 = vmatmul.mubr.bf16.gmra.mrb[0].mxu0 %v4589
        %v4648 = vpop.f32.mrb[0].mxu0
        %v4649 = vadd.f32 %v4548, %v4648
        %v4650 = vpop.f32.mrb[0].mxu0
        %v4651 = vadd.f32 %v4548, %v4650
        %v4652 = vpop.f32.mrb[0].mxu0
        %v4653 = vadd.f32 %v4552, %v4652
        %v4654 = vpop.f32.mrb[0].mxu0
        %v4655 = vadd.f32 %v4552, %v4654
        %4656 = vmatprep.mubr.bf16.mxu0 0
        %4657 = vmatmul.mubr.bf16.gmra.mrb[0].mxu0 %v4592
        %v4658 = vpop.f32.mrb[0].mxu0
        %v4659 = vadd.f32 %v4556, %v4658
        %v4660 = vpop.f32.mrb[0].mxu0
        %v4661 = vadd.f32 %v4556, %v4660
        %v4662 = vpop.f32.mrb[0].mxu0
        %v4663 = vadd.f32 %v4560, %v4662
        %v4664 = vpop.f32.mrb[0].mxu0
        %v4665 = vadd.f32 %v4560, %v4664
        %4666 = vdwg.mxu0
        %v4667 = vld [vmem:[%s410] sm:$0xff]
        %v4668 = vld [vmem:[%s410 + $0x8] sm:$0xff]
        %v4669 = vld [vmem:[%s410 + $0x10] sm:$0xff]
        %v4670 = vld [vmem:[%s410 + $0x18] sm:$0xff]
        %v4671 = vld [vmem:[%s410 + $0x20] sm:$0xff]
        %v4672 = vld [vmem:[%s410 + $0x28] sm:$0xff]
        %v4673 = vld [vmem:[%s410 + $0x30] sm:$0xff]
        %v4674 = vld [vmem:[%s410 + $0x38] sm:$0xff]
        %v4675 = vld [vmem:[%s410 + $0x40] sm:$0xff]
        %v4676 = vld [vmem:[%s410 + $0x48] sm:$0xff]
        %v4677 = vld [vmem:[%s410 + $0x50] sm:$0xff]
        %v4678 = vld [vmem:[%s410 + $0x58] sm:$0xff]
        %v4679 = vld [vmem:[%s410 + $0x60] sm:$0xff]
        %v4680 = vld [vmem:[%s410 + $0x68] sm:$0xff]
        %v4681 = vld [vmem:[%s410 + $0x70] sm:$0xff]
        %v4682 = vld [vmem:[%s410 + $0x78] sm:$0xff]
        %v4683 = vadd.f32 %v4667, %v4629
        %v4684 = vadd.f32 %v4668, %v4631
        %v4685 = vadd.f32 %v4669, %v4633
        %v4686 = vadd.f32 %v4670, %v4635
        %v4687 = vadd.f32 %v4671, %v4639
        %v4688 = vadd.f32 %v4672, %v4641
        %v4689 = vadd.f32 %v4673, %v4643
        %v4690 = vadd.f32 %v4674, %v4645
        %v4691 = vadd.f32 %v4675, %v4649
        %v4692 = vadd.f32 %v4676, %v4651
        %v4693 = vadd.f32 %v4677, %v4653
        %v4694 = vadd.f32 %v4678, %v4655
        %v4695 = vadd.f32 %v4679, %v4659
        %v4696 = vadd.f32 %v4680, %v4661
        %v4697 = vadd.f32 %v4681, %v4663
        %v4698 = vadd.f32 %v4682, %v4665
        %4699 = vst [vmem:[%s398] sm:$0xff] %v4683
        %4700 = vst [vmem:[%s398 + $0x8] sm:$0xff] %v4684
        %4701 = vst [vmem:[%s398 + $0x10] sm:$0xff] %v4685
        %4702 = vst [vmem:[%s398 + $0x18] sm:$0xff] %v4686
        %4703 = vst [vmem:[%s398 + $0x20] sm:$0xff] %v4687
        %4704 = vst [vmem:[%s398 + $0x28] sm:$0xff] %v4688
        %4705 = vst [vmem:[%s398 + $0x30] sm:$0xff] %v4689
        %4706 = vst [vmem:[%s398 + $0x38] sm:$0xff] %v4690
        %4707 = vst [vmem:[%s398 + $0x40] sm:$0xff] %v4691
        %4708 = vst [vmem:[%s398 + $0x48] sm:$0xff] %v4692
        %4709 = vst [vmem:[%s398 + $0x50] sm:$0xff] %v4693
        %4710 = vst [vmem:[%s398 + $0x58] sm:$0xff] %v4694
        %4711 = vst [vmem:[%s398 + $0x60] sm:$0xff] %v4695
        %4712 = vst [vmem:[%s398 + $0x68] sm:$0xff] %v4696
        %4713 = vst [vmem:[%s398 + $0x70] sm:$0xff] %v4697
        %4714 = vst [vmem:[%s398 + $0x78] sm:$0xff] %v4698
        %s4715 = sand.u32 %s217, 1
        %s4716 = scalar_lea.sflag [#allocation5], %s4715
        %s4717 = sand.u32 %s217, 1
        %s4718 = smul.addr %s4717, 128
        %s4719 = scalar_lea.vmem [#allocation9], %s4718
        %s4720 = sand.u32 %s243, 1
        %s4721 = scalar_lea.sflag [#allocation11], %s4720
        %s4722 = sand.u32 %s243, 1
        %s4723 = smul.addr %s4722, 128
        %s4724 = scalar_lea.vmem [#allocation10], %s4723
        // Predicated region
        $region65: #{tpu_custom_call.1} parent=51 // pred_check
          %p4725 = pneg %p227
        $region66: #{tpu_custom_call.1} parent=51 // pred_check_branch
          %4727 = sbr.rel (%p4725) target = $region68
        $region67: #{tpu_custom_call.1} parent=51 // pred_region
          %s4729 = ssub.s32 2048, 2048
          %4730 = vsyncadd %s4716, %s4729
          %s4731 = smul.addr %s31, 16
          %s4732 = smul.addr %s4731, 128
          %s4733 = scalar_lea.hbm %s8, %s4732
          %s4734 = sshll.u32 %s4719, 4
          %s4735 = int_to_ptr.vmem [resolvable:$true] %s4734
          %4740 = dma.vmem_to_hbm [thread:$0]  %s4735, 2048, %s4733, %s4716, 256, 256, 16
        $region68: #{tpu_custom_call.1} parent=51 // pred_fallthru
          _
        // Predicated region
        $region69: #{tpu_custom_call.1} parent=51 // pred_check
          %p4741 = pneg %p253
        $region70: #{tpu_custom_call.1} parent=51 // pred_check_branch
          %4743 = sbr.rel (%p4741) target = $region72
        $region71: #{tpu_custom_call.1} parent=51 // pred_region
          %s4745 = ssub.s32 2048, 2048
          %4746 = vsyncadd %s4721, %s4745
          %s4747 = smul.addr %s31, 16
          %s4748 = smul.addr %s4747, 128
          %s4749 = scalar_lea.hbm %s9, %s4748
          %s4750 = sshll.u32 %s4724, 4
          %s4751 = int_to_ptr.vmem [resolvable:$true] %s4750
          %4756 = dma.vmem_to_hbm [thread:$0]  %s4751, 2048, %s4749, %s4721, 256, 256, 16
        $region72: #{tpu_custom_call.1} parent=51 // pred_fallthru
          _
      $region52: #{tpu_custom_call.1} parent=5 // pred_fallthru
        _
      %p4757 = scmp.le.s32.totalorder 2, %s26
      // Predicated region
      $region73: #{tpu_custom_call.1} parent=5 // pred_check
        %p4758 = pneg %p4757
      $region74: #{tpu_custom_call.1} parent=5 // pred_check_branch
        %4760 = sbr.rel (%p4758) target = $region76
      $region75: #{tpu_custom_call.1} parent=5 // pred_region
        %s4761 = ssub.s32 %s26, 2
        // Predicated region
        $region77: #{tpu_custom_call.1} parent=75 // pred_check
          %p4762 = pneg %p233
        $region78: #{tpu_custom_call.1} parent=75 // pred_check_branch
          %4764 = sbr.rel (%p4762) target = $region80
        $region79: #{tpu_custom_call.1} parent=75 // pred_region
          %s4765 = sand.u32 %s218, 1
          %s4766 = scalar_lea.sflag [#allocation5], %s4765
          %s4767 = sand.u32 %s218, 1
          %s4768 = smul.addr %s4767, 128
          %s4769 = scalar_lea.vmem [#allocation9], %s4768
          %4770 = dma.done %s4766, 2048
        $region80: #{tpu_custom_call.1} parent=75 // pred_fallthru
          _
        // Predicated region
        $region81: #{tpu_custom_call.1} parent=75 // pred_check
          %p4771 = pneg %p259
        $region82: #{tpu_custom_call.1} parent=75 // pred_check_branch
          %4773 = sbr.rel (%p4771) target = $region84
        $region83: #{tpu_custom_call.1} parent=75 // pred_region
          %s4774 = sand.u32 %s244, 1
          %s4775 = scalar_lea.sflag [#allocation11], %s4774
          %s4776 = sand.u32 %s244, 1
          %s4777 = smul.addr %s4776, 128
          %s4778 = scalar_lea.vmem [#allocation10], %s4777
          %4779 = dma.done %s4775, 2048
        $region84: #{tpu_custom_call.1} parent=75 // pred_fallthru
          _
      $region76: #{tpu_custom_call.1} parent=5 // pred_fallthru
        _
    $region6: #{tpu_custom_call.1} parent=1 // loop_footer
      %s30 = sadd.s32 1, %s26
    $region7: #{tpu_custom_call.1} parent=1 // loop_footer_branch
      %25 = sbr.rel target = $region3
    $region8: #{tpu_custom_call.1} parent=1 // loop_exit
      _
    %4780 = vsyncpa [#allocation4], 1
    %s4781 = scalar_lea.sflag [#allocation4], 1
    %4782 = vsyncpa %s4781, 1
    %4783 = vsyncpa [#allocation7], 1
    %4784 = vsyncpa [#allocation5], 1
    %s4785 = scalar_lea.sflag [#allocation5], 1
    %4786 = vsyncpa %s4785, 1
    %4787 = vsyncpa [#allocation11], 1
    %s4788 = scalar_lea.sflag [#allocation11], 1
    %4789 = vsyncpa %s4788, 1

</llo_original>
